<compile_context>
chip_gen: v6e
topology: v6e:2x2x1
jax: 0.10.0
libtpu: 0.0.40
codegen_flags: <defaults>
</compile_context>

<pallas_src>
import functools
import math

import jax
import jax.numpy as jnp
from jax.experimental import pallas as pl
from jax.experimental.pallas import tpu as pltpu


def _round_up(x, m):
    return (x + m - 1) // m * m


# ----------------------------- matmul + bias kernel -----------------------------

def _matmul_bias_kernel(x_ref, w_ref, b_ref, o_ref, acc_ref):
    @pl.when(pl.program_id(2) == 0)
    def _():
        acc_ref[...] = jnp.zeros_like(acc_ref)

    acc_ref[...] += jnp.dot(x_ref[...], w_ref[...],
                            preferred_element_type=jnp.float32)

    @pl.when(pl.program_id(2) == pl.num_programs(2) - 1)
    def _():
        o_ref[...] = (acc_ref[...] + b_ref[...]).astype(o_ref.dtype)


def matmul_bias(x2d, w, b, *, out_dtype=jnp.float32, tm=256, tn=256, tk=512):
    """(M,K) @ (K,N) + b.  bf16 operands, f32 accumulation, tiled over (M,N,K)."""
    M, K = x2d.shape
    N = w.shape[1]
    tm = min(tm, _round_up(M, 8))
    tn = min(tn, _round_up(N, 128))
    tk = min(tk, _round_up(K, 128))
    Mp, Kp, Np = _round_up(M, tm), _round_up(K, tk), _round_up(N, tn)

    xp = jnp.pad(x2d, ((0, Mp - M), (0, Kp - K))).astype(jnp.bfloat16)
    wp = jnp.pad(w, ((0, Kp - K), (0, Np - N))).astype(jnp.bfloat16)
    bp = jnp.pad(b, (0, Np - N)).astype(jnp.float32).reshape(1, Np)

    out = pl.pallas_call(
        _matmul_bias_kernel,
        out_shape=jax.ShapeDtypeStruct((Mp, Np), out_dtype),
        grid_spec=pltpu.PrefetchScalarGridSpec(
            num_scalar_prefetch=0,
            grid=(Mp // tm, Np // tn, Kp // tk),
            in_specs=[
                pl.BlockSpec((tm, tk), lambda i, j, k: (i, k)),
                pl.BlockSpec((tk, tn), lambda i, j, k: (k, j)),
                pl.BlockSpec((1, tn), lambda i, j, k: (0, j)),
            ],
            out_specs=pl.BlockSpec((tm, tn), lambda i, j, k: (i, j)),
            scratch_shapes=[pltpu.VMEM((tm, tn), jnp.float32)],
        ),
        compiler_params=pltpu.CompilerParams(
            dimension_semantics=("parallel", "parallel", "arbitrary")),
    )(xp, wp, bp)
    return out[:M, :N]


# -------------------- depthwise 3x3 conv + bias + exact GELU --------------------

_SQRT_HALF = 0.7071067811865476


def _erf(x):
    # Abramowitz & Stegun 7.1.26 (|err| <= 1.5e-7); uses only exp/div/mul/add/abs/where.
    a1, a2, a3, a4, a5 = (0.254829592, -0.284496736, 1.421413741,
                          -1.453152027, 1.061405429)
    p = 0.3275911
    ax = jnp.abs(x)
    t = 1.0 / (1.0 + p * ax)
    poly = ((((a5 * t + a4) * t + a3) * t + a2) * t + a1) * t
    y = 1.0 - poly * jnp.exp(-ax * ax)
    return jnp.where(x >= 0.0, y, -y)


def _gelu_exact(x):
    return 0.5 * x * (1.0 + _erf(x * _SQRT_HALF))


def _dwconv3_gelu_kernel(x_ref, w_ref, b_ref, o_ref, *, H, W):
    # x_ref: (1, H+2, W+2, TC) zero-padded input block (one batch element, one
    # 128-channel slice).  Taps are loaded per (i,j) straight from the ref so the
    # full padded tile is never held live in vregs.  Accumulator seeded with bias.
    tc = o_ref.shape[-1]
    acc = jnp.broadcast_to(b_ref[0, 0, :].reshape(1, 1, tc), (H, W, tc)).astype(jnp.float32)
    for i in range(3):
        for j in range(3):
            tap = x_ref[0, i:i + H, j:j + W, :].astype(jnp.float32)
            acc = acc + tap * w_ref[i, j, :]
    o_ref[0] = _gelu_exact(acc).astype(o_ref.dtype)


def dwconv3_gelu(x, w, b, *, out_dtype=jnp.bfloat16):
    """Depthwise 3x3 conv (stride 1, pad 1, groups=C) + bias + exact GELU.

    x: (B, H, W, C), w: (3, 3, C), b: (C,)
    """
    B, H, W, C = x.shape
    Cp = _round_up(C, 128)
    tc = 128
    if Cp != C:
        x = jnp.pad(x, ((0, 0), (0, 0), (0, 0), (0, Cp - C)))
        w = jnp.pad(w, ((0, 0), (0, 0), (0, Cp - C)))
        b = jnp.pad(b, (0, Cp - C))
    xp = jnp.pad(x, ((0, 0), (1, 1), (1, 1), (0, 0)))  # spatial 'same' padding

    # TODO(synk): for very large H*W an additional H-block grid axis with a manual
    # halo DMA would bound the per-step VMEM footprint; not needed at these sizes.
    kern = functools.partial(_dwconv3_gelu_kernel, H=H, W=W)
    out = pl.pallas_call(
        kern,
        out_shape=jax.ShapeDtypeStruct((B, H, W, Cp), out_dtype),
        grid_spec=pltpu.PrefetchScalarGridSpec(
            num_scalar_prefetch=0,
            grid=(B, Cp // tc),
            in_specs=[
                pl.BlockSpec((1, H + 2, W + 2, tc), lambda bi, c: (bi, 0, 0, c)),
                pl.BlockSpec((3, 3, tc), lambda bi, c: (0, 0, c)),
                pl.BlockSpec((1, 1, tc), lambda bi, c: (0, 0, c)),
            ],
            out_specs=pl.BlockSpec((1, H, W, tc), lambda bi, c: (bi, 0, 0, c)),
        ),
        compiler_params=pltpu.CompilerParams(
            dimension_semantics=("parallel", "parallel")),
    )(xp, w.astype(jnp.float32), b.astype(jnp.float32).reshape(1, 1, Cp))
    return out[..., :C]


# ----------------------------- Mlp forward -----------------------------

def mlp_forward(params, x):
    """x: (B, Cin, H, W) NCHW, like the PyTorch module; returns NCHW."""
    B, Cin, H, W = x.shape
    hidden = params["fc1"]["w"].shape[1]
    cout = params["fc2"]["w"].shape[1]

    xh = jnp.transpose(x, (0, 2, 3, 1))                              # NHWC
    y = matmul_bias(xh.reshape(B * H * W, Cin),                      # fc1 (1x1 conv)
                    params["fc1"]["w"], params["fc1"]["b"],
                    out_dtype=jnp.bfloat16)
    y = dwconv3_gelu(y.reshape(B, H, W, hidden),                     # dwconv + GELU fused
                     params["dw"]["w"], params["dw"]["b"],
                     out_dtype=jnp.bfloat16)
    # TODO(synk): nn.Dropout(p=0.0) is the identity and is omitted.
    y = matmul_bias(y.reshape(B * H * W, hidden),                    # fc2 (1x1 conv)
                    params["fc2"]["w"], params["fc2"]["b"],
                    out_dtype=jnp.float32)
    return jnp.transpose(y.reshape(B, H, W, cout), (0, 3, 1, 2))     # back to NCHW


# ----------------------------- params & reference -----------------------------

def make_mlp_params(key, in_features, hidden_features=None, out_features=None):
    hidden_features = hidden_features or in_features
    out_features = out_features or in_features
    k1, k2, k3, k4, k5, k6 = jax.random.split(key, 6)
    s1 = 1.0 / math.sqrt(in_features)        # Conv2d(kernel=1) fan_in = Cin
    s2 = 1.0 / math.sqrt(9.0)                # depthwise 3x3, groups=C -> fan_in = 9
    s3 = 1.0 / math.sqrt(hidden_features)
    return {
        "fc1": {"w": jax.random.uniform(k1, (in_features, hidden_features), jnp.float32, -s1, s1),
                "b": jax.random.uniform(k2, (hidden_features,), jnp.float32, -s1, s1)},
        "dw": {"w": jax.random.uniform(k3, (3, 3, hidden_features), jnp.float32, -s2, s2),
               "b": jax.random.uniform(k4, (hidden_features,), jnp.float32, -s2, s2)},
        "fc2": {"w": jax.random.uniform(k5, (hidden_features, out_features), jnp.float32, -s3, s3),
                "b": jax.random.uniform(k6, (out_features,), jnp.float32, -s3, s3)},
    }


def mlp_reference(params, x):
    """Pure-JAX f32 reference of the same forward pass (for validation)."""
    B, Cin, H, W = x.shape
    xh = jnp.transpose(x, (0, 2, 3, 1)).astype(jnp.float32)
    y = xh @ params["fc1"]["w"] + params["fc1"]["b"]
    yp = jnp.pad(y, ((0, 0), (1, 1), (1, 1), (0, 0)))
    acc = jnp.zeros_like(y)
    for i in range(3):
        for j in range(3):
            acc = acc + yp[:, i:i + H, j:j + W, :] * params["dw"]["w"][i, j]
    y = jax.nn.gelu(acc + params["dw"]["b"], approximate=False)
    y = y @ params["fc2"]["w"] + params["fc2"]["b"]
    return jnp.transpose(y, (0, 3, 1, 2))


# ----------------------------- main -----------------------------

if __name__ == "__main__":
    key = jax.random.PRNGKey(0)
    B, Cin, H, W = 2, 32, 16, 16
    hidden = 128  # e.g. mlp_ratio = 4

    kp, kx = jax.random.split(key)
    params = make_mlp_params(kp, Cin, hidden)
    x = jax.random.normal(kx, (B, Cin, H, W), jnp.float32)

    fwd = jax.jit(mlp_forward)
    out = jax.block_until_ready(fwd(params, x))

    assert out.shape == (B, Cin, H, W), out.shape
    assert bool(jnp.all(jnp.isfinite(out)))

    ref = mlp_reference(params, x)
    rel = float(jnp.max(jnp.abs(out - ref)) / (jnp.max(jnp.abs(ref)) + 1e-6))
    assert rel < 5e-2, f"relative error too large: {rel}"   # bf16 matmul drift budget

    print("KERNEL_OK")
</pallas_src>

<mosaic_0001>
module attributes {stable_mosaic.version = 11 : i64} {
  func.func @_matmul_bias_kernel(%arg0: i32, %arg1: i32, %arg2: i32, %arg3: memref<256x128xbf16, #tpu.memory_space<vmem>>, %arg4: memref<128x128xbf16, #tpu.memory_space<vmem>>, %arg5: memref<1x128xf32, #tpu.memory_space<vmem>>, %arg6: memref<256x128xbf16, #tpu.memory_space<vmem>>, %arg7: memref<256x128xf32, #tpu.memory_space<vmem>>) attributes {dimension_semantics = [#tpu.dimension_semantics<parallel>, #tpu.dimension_semantics<parallel>, #tpu.dimension_semantics<arbitrary>], iteration_bounds = array<i64: 2, 1, 1>, scalar_prefetch = 0 : i64, scratch_operands = 1 : i64, tpu.core_type = #tpu.core_type<tc>, window_params = [{transform_indices = @transform_0, window_bounds = array<i64: 256, 128>}, {transform_indices = @transform_1, window_bounds = array<i64: 128, 128>}, {transform_indices = @transform_2, window_bounds = array<i64: 1, 128>}, {transform_indices = @transform_3, window_bounds = array<i64: 256, 128>}]} {
    %c0_i32 = arith.constant 0 : i32
    %0 = arith.cmpi eq, %arg2, %c0_i32 : i32
    %1 = arith.extui %0 : i1 to i32
    %c0_i32_0 = arith.constant 0 : i32
    %2 = arith.cmpi ne, %1, %c0_i32_0 : i32
    scf.if %2 {
      %cst_10 = arith.constant 0.000000e+00 : f32
      %12 = vector.broadcast %cst_10 : f32 to vector<256x128xf32>
      %c0_11 = arith.constant 0 : index
      %c0_12 = arith.constant 0 : index
      %13 = vector.load %arg7[%c0_11, %c0_12] : memref<256x128xf32, #tpu.memory_space<vmem>>, vector<256x128xf32>
      tpu.vector_store %arg7[%c0_11, %c0_12], %12 {strides = array<i32>} : memref<256x128xf32, #tpu.memory_space<vmem>>, vector<256x128xf32>,
    } else {
    }
    %c0 = arith.constant 0 : index
    %c0_1 = arith.constant 0 : index
    %3 = vector.load %arg7[%c0, %c0_1] : memref<256x128xf32, #tpu.memory_space<vmem>>, vector<256x128xf32>
    %c0_2 = arith.constant 0 : index
    %c0_3 = arith.constant 0 : index
    %4 = vector.load %arg3[%c0_2, %c0_3] : memref<256x128xbf16, #tpu.memory_space<vmem>>, vector<256x128xbf16>
    %c0_4 = arith.constant 0 : index
    %c0_5 = arith.constant 0 : index
    %5 = vector.load %arg4[%c0_4, %c0_5] : memref<128x128xbf16, #tpu.memory_space<vmem>>, vector<128x128xbf16>
    %cst = arith.constant dense<0.000000e+00> : vector<256x128xf32>
    %6 = tpu.matmul %4, %5, %cst {dimension_numbers = #tpu.dot_dimension_numbers<[1], [0], [0], [1], [0, 0, 1, 1], [], []>} : vector<256x128xbf16>, vector<128x128xbf16>, vector<256x128xf32> -> vector<256x128xf32>
    %7 = arith.addf %3, %6 : vector<256x128xf32>
    %c0_6 = arith.constant 0 : index
    %c0_7 = arith.constant 0 : index
    %8 = vector.load %arg7[%c0_6, %c0_7] : memref<256x128xf32, #tpu.memory_space<vmem>>, vector<256x128xf32>
    tpu.vector_store %arg7[%c0_6, %c0_7], %7 {strides = array<i32>} : memref<256x128xf32, #tpu.memory_space<vmem>>, vector<256x128xf32>,
    %c0_i32_8 = arith.constant 0 : i32
    %9 = arith.cmpi eq, %arg2, %c0_i32_8 : i32
    %10 = arith.extui %9 : i1 to i32
    %c0_i32_9 = arith.constant 0 : i32
    %11 = arith.cmpi ne, %10, %c0_i32_9 : i32
    scf.if %11 {
      %c0_10 = arith.constant 0 : index
      %c0_11 = arith.constant 0 : index
      %12 = vector.load %arg7[%c0_10, %c0_11] : memref<256x128xf32, #tpu.memory_space<vmem>>, vector<256x128xf32>
      %c0_12 = arith.constant 0 : index
      %c0_13 = arith.constant 0 : index
      %13 = vector.load %arg5[%c0_12, %c0_13] : memref<1x128xf32, #tpu.memory_space<vmem>>, vector<1x128xf32>
      %14 = vector.broadcast %13 : vector<1x128xf32> to vector<256x128xf32>
      %15 = arith.addf %12, %14 : vector<256x128xf32>
      %16 = arith.truncf %15 : vector<256x128xf32> to vector<256x128xbf16>
      %c0_14 = arith.constant 0 : index
      %c0_15 = arith.constant 0 : index
      %17 = vector.load %arg6[%c0_14, %c0_15] : memref<256x128xbf16, #tpu.memory_space<vmem>>, vector<256x128xbf16>
      tpu.vector_store %arg6[%c0_14, %c0_15], %16 {strides = array<i32>} : memref<256x128xbf16, #tpu.memory_space<vmem>>, vector<256x128xbf16>,
    } else {
    }
    return
  }
  func.func @transform_0(%arg0: i32, %arg1: i32, %arg2: i32) -> (i32, i32) {
    %c0_i32 = arith.constant 0 : i32
    return %arg0, %arg2 : i32, i32
  }
  func.func @transform_1(%arg0: i32, %arg1: i32, %arg2: i32) -> (i32, i32) {
    %c0_i32 = arith.constant 0 : i32
    return %arg2, %arg1 : i32, i32
  }
  func.func @transform_2(%arg0: i32, %arg1: i32, %arg2: i32) -> (i32, i32) {
    %c0_i32 = arith.constant 0 : i32
    %c0_i32_0 = arith.constant 0 : i32
    return %c0_i32, %arg1 : i32, i32
  }
  func.func @transform_3(%arg0: i32, %arg1: i32, %arg2: i32) -> (i32, i32) {
    %c0_i32 = arith.constant 0 : i32
    return %arg0, %arg1 : i32, i32
  }
}

module attributes {stable_mosaic.version = 11 : i64} {
  func.func @_matmul_bias_kernel(%arg0: i32, %arg1: i32, %arg2: i32, %arg3: memref<256x128xbf16, #tpu.memory_space<vmem>>, %arg4: memref<128x128xbf16, #tpu.memory_space<vmem>>, %arg5: memref<1x128xf32, #tpu.memory_space<vmem>>, %arg6: memref<256x128xf32, #tpu.memory_space<vmem>>, %arg7: memref<256x128xf32, #tpu.memory_space<vmem>>) attributes {dimension_semantics = [#tpu.dimension_semantics<parallel>, #tpu.dimension_semantics<parallel>, #tpu.dimension_semantics<arbitrary>], iteration_bounds = array<i64: 2, 1, 1>, scalar_prefetch = 0 : i64, scratch_operands = 1 : i64, tpu.core_type = #tpu.core_type<tc>, window_params = [{transform_indices = @transform_0, window_bounds = array<i64: 256, 128>}, {transform_indices = @transform_1, window_bounds = array<i64: 128, 128>}, {transform_indices = @transform_2, window_bounds = array<i64: 1, 128>}, {transform_indices = @transform_3, window_bounds = array<i64: 256, 128>}]} {
    %c0_i32 = arith.constant 0 : i32
    %0 = arith.cmpi eq, %arg2, %c0_i32 : i32
    %1 = arith.extui %0 : i1 to i32
    %c0_i32_0 = arith.constant 0 : i32
    %2 = arith.cmpi ne, %1, %c0_i32_0 : i32
    scf.if %2 {
      %cst_10 = arith.constant 0.000000e+00 : f32
      %12 = vector.broadcast %cst_10 : f32 to vector<256x128xf32>
      %c0_11 = arith.constant 0 : index
      %c0_12 = arith.constant 0 : index
      %13 = vector.load %arg7[%c0_11, %c0_12] : memref<256x128xf32, #tpu.memory_space<vmem>>, vector<256x128xf32>
      tpu.vector_store %arg7[%c0_11, %c0_12], %12 {strides = array<i32>} : memref<256x128xf32, #tpu.memory_space<vmem>>, vector<256x128xf32>,
    } else {
    }
    %c0 = arith.constant 0 : index
    %c0_1 = arith.constant 0 : index
    %3 = vector.load %arg7[%c0, %c0_1] : memref<256x128xf32, #tpu.memory_space<vmem>>, vector<256x128xf32>
    %c0_2 = arith.constant 0 : index
    %c0_3 = arith.constant 0 : index
    %4 = vector.load %arg3[%c0_2, %c0_3] : memref<256x128xbf16, #tpu.memory_space<vmem>>, vector<256x128xbf16>
    %c0_4 = arith.constant 0 : index
    %c0_5 = arith.constant 0 : index
    %5 = vector.load %arg4[%c0_4, %c0_5] : memref<128x128xbf16, #tpu.memory_space<vmem>>, vector<128x128xbf16>
    %cst = arith.constant dense<0.000000e+00> : vector<256x128xf32>
    %6 = tpu.matmul %4, %5, %cst {dimension_numbers = #tpu.dot_dimension_numbers<[1], [0], [0], [1], [0, 0, 1, 1], [], []>} : vector<256x128xbf16>, vector<128x128xbf16>, vector<256x128xf32> -> vector<256x128xf32>
    %7 = arith.addf %3, %6 : vector<256x128xf32>
    %c0_6 = arith.constant 0 : index
    %c0_7 = arith.constant 0 : index
    %8 = vector.load %arg7[%c0_6, %c0_7] : memref<256x128xf32, #tpu.memory_space<vmem>>, vector<256x128xf32>
    tpu.vector_store %arg7[%c0_6, %c0_7], %7 {strides = array<i32>} : memref<256x128xf32, #tpu.memory_space<vmem>>, vector<256x128xf32>,
    %c0_i32_8 = arith.constant 0 : i32
    %9 = arith.cmpi eq, %arg2, %c0_i32_8 : i32
    %10 = arith.extui %9 : i1 to i32
    %c0_i32_9 = arith.constant 0 : i32
    %11 = arith.cmpi ne, %10, %c0_i32_9 : i32
    scf.if %11 {
      %c0_10 = arith.constant 0 : index
      %c0_11 = arith.constant 0 : index
      %12 = vector.load %arg7[%c0_10, %c0_11] : memref<256x128xf32, #tpu.memory_space<vmem>>, vector<256x128xf32>
      %c0_12 = arith.constant 0 : index
      %c0_13 = arith.constant 0 : index
      %13 = vector.load %arg5[%c0_12, %c0_13] : memref<1x128xf32, #tpu.memory_space<vmem>>, vector<1x128xf32>
      %14 = vector.broadcast %13 : vector<1x128xf32> to vector<256x128xf32>
      %15 = arith.addf %12, %14 : vector<256x128xf32>
      %c0_14 = arith.constant 0 : index
      %c0_15 = arith.constant 0 : index
      %16 = vector.load %arg6[%c0_14, %c0_15] : memref<256x128xf32, #tpu.memory_space<vmem>>, vector<256x128xf32>
      tpu.vector_store %arg6[%c0_14, %c0_15], %15 {strides = array<i32>} : memref<256x128xf32, #tpu.memory_space<vmem>>, vector<256x128xf32>,
    } else {
    }
    return
  }
  func.func @transform_0(%arg0: i32, %arg1: i32, %arg2: i32) -> (i32, i32) {
    %c0_i32 = arith.constant 0 : i32
    return %arg0, %arg2 : i32, i32
  }
  func.func @transform_1(%arg0: i32, %arg1: i32, %arg2: i32) -> (i32, i32) {
    %c0_i32 = arith.constant 0 : i32
    return %arg2, %arg1 : i32, i32
  }
  func.func @transform_2(%arg0: i32, %arg1: i32, %arg2: i32) -> (i32, i32) {
    %c0_i32 = arith.constant 0 : i32
    %c0_i32_0 = arith.constant 0 : i32
    return %c0_i32, %arg1 : i32, i32
  }
  func.func @transform_3(%arg0: i32, %arg1: i32, %arg2: i32) -> (i32, i32) {
    %c0_i32 = arith.constant 0 : i32
    return %arg0, %arg1 : i32, i32
  }
}

module attributes {stable_mosaic.version = 11 : i64} {
  func.func @_dwconv3_gelu_kernel(%arg0: i32, %arg1: i32, %arg2: memref<1x18x18x128xbf16, #tpu.memory_space<vmem>>, %arg3: memref<3x3x128xf32, #tpu.memory_space<vmem>>, %arg4: memref<1x1x128xf32, #tpu.memory_space<vmem>>, %arg5: memref<1x16x16x128xbf16, #tpu.memory_space<vmem>>) attributes {dimension_semantics = [#tpu.dimension_semantics<parallel>, #tpu.dimension_semantics<parallel>], iteration_bounds = array<i64: 2, 1>, scalar_prefetch = 0 : i64, scratch_operands = 0 : i64, tpu.core_type = #tpu.core_type<tc>, window_params = [{transform_indices = @transform_0, window_bounds = array<i64: 1, 18, 18, 128>}, {transform_indices = @transform_1, window_bounds = array<i64: 3, 3, 128>}, {transform_indices = @transform_2, window_bounds = array<i64: 1, 1, 128>}, {transform_indices = @transform_3, window_bounds = array<i64: 1, 16, 16, 128>}]} {
    %c0 = arith.constant 0 : index
    %c0_0 = arith.constant 0 : index
    %c0_1 = arith.constant 0 : index
    %0 = vector.load %arg4[%c0, %c0_0, %c0_1] : memref<1x1x128xf32, #tpu.memory_space<vmem>>, vector<1x1x128xf32>
    %1 = vector.shape_cast %0 : vector<1x1x128xf32> to vector<128xf32>
    %2 = vector.shape_cast %1 : vector<128xf32> to vector<1x1x128xf32>
    %3 = vector.shape_cast %2 : vector<1x1x128xf32> to vector<1x1x128xf32>
    %4 = vector.broadcast %3 : vector<1x1x128xf32> to vector<16x16x128xf32>
    %c0_2 = arith.constant 0 : index
    %c0_3 = arith.constant 0 : index
    %c0_4 = arith.constant 0 : index
    %c0_5 = arith.constant 0 : index
    %5 = vector.load %arg2[%c0_2, %c0_3, %c0_4, %c0_5] : memref<1x18x18x128xbf16, #tpu.memory_space<vmem>>, vector<1x16x16x128xbf16>
    %6 = vector.shape_cast %5 : vector<1x16x16x128xbf16> to vector<16x16x128xbf16>
    %7 = arith.extf %6 : vector<16x16x128xbf16> to vector<16x16x128xf32>
    %c0_6 = arith.constant 0 : index
    %c0_7 = arith.constant 0 : index
    %c0_8 = arith.constant 0 : index
    %8 = vector.load %arg3[%c0_6, %c0_7, %c0_8] : memref<3x3x128xf32, #tpu.memory_space<vmem>>, vector<1x1x128xf32>
    %9 = vector.shape_cast %8 : vector<1x1x128xf32> to vector<128xf32>
    %10 = vector.shape_cast %9 : vector<128xf32> to vector<1x1x128xf32>
    %11 = vector.broadcast %10 : vector<1x1x128xf32> to vector<16x16x128xf32>
    %12 = arith.mulf %7, %11 : vector<16x16x128xf32>
    %13 = arith.addf %4, %12 : vector<16x16x128xf32>
    %c0_9 = arith.constant 0 : index
    %c0_10 = arith.constant 0 : index
    %c1 = arith.constant 1 : index
    %c0_11 = arith.constant 0 : index
    %14 = vector.load %arg2[%c0_9, %c0_10, %c1, %c0_11] : memref<1x18x18x128xbf16, #tpu.memory_space<vmem>>, vector<1x16x16x128xbf16>
    %15 = vector.shape_cast %14 : vector<1x16x16x128xbf16> to vector<16x16x128xbf16>
    %16 = arith.extf %15 : vector<16x16x128xbf16> to vector<16x16x128xf32>
    %c0_12 = arith.constant 0 : index
    %c1_13 = arith.constant 1 : index
    %c0_14 = arith.constant 0 : index
    %17 = vector.load %arg3[%c0_12, %c1_13, %c0_14] : memref<3x3x128xf32, #tpu.memory_space<vmem>>, vector<1x1x128xf32>
    %18 = vector.shape_cast %17 : vector<1x1x128xf32> to vector<128xf32>
    %19 = vector.shape_cast %18 : vector<128xf32> to vector<1x1x128xf32>
    %20 = vector.broadcast %19 : vector<1x1x128xf32> to vector<16x16x128xf32>
    %21 = arith.mulf %16, %20 : vector<16x16x128xf32>
    %22 = arith.addf %13, %21 : vector<16x16x128xf32>
    %c0_15 = arith.constant 0 : index
    %c0_16 = arith.constant 0 : index
    %c2 = arith.constant 2 : index
    %c0_17 = arith.constant 0 : index
    %23 = vector.load %arg2[%c0_15, %c0_16, %c2, %c0_17] : memref<1x18x18x128xbf16, #tpu.memory_space<vmem>>, vector<1x16x16x128xbf16>
    %24 = vector.shape_cast %23 : vector<1x16x16x128xbf16> to vector<16x16x128xbf16>
    %25 = arith.extf %24 : vector<16x16x128xbf16> to vector<16x16x128xf32>
    %c0_18 = arith.constant 0 : index
    %c2_19 = arith.constant 2 : index
    %c0_20 = arith.constant 0 : index
    %26 = vector.load %arg3[%c0_18, %c2_19, %c0_20] : memref<3x3x128xf32, #tpu.memory_space<vmem>>, vector<1x1x128xf32>
    %27 = vector.shape_cast %26 : vector<1x1x128xf32> to vector<128xf32>
    %28 = vector.shape_cast %27 : vector<128xf32> to vector<1x1x128xf32>
    %29 = vector.broadcast %28 : vector<1x1x128xf32> to vector<16x16x128xf32>
    %30 = arith.mulf %25, %29 : vector<16x16x128xf32>
    %31 = arith.addf %22, %30 : vector<16x16x128xf32>
    %c0_21 = arith.constant 0 : index
    %c1_22 = arith.constant 1 : index
    %c0_23 = arith.constant 0 : index
    %c0_24 = arith.constant 0 : index
    %32 = vector.load %arg2[%c0_21, %c1_22, %c0_23, %c0_24] : memref<1x18x18x128xbf16, #tpu.memory_space<vmem>>, vector<1x16x16x128xbf16>
    %33 = vector.shape_cast %32 : vector<1x16x16x128xbf16> to vector<16x16x128xbf16>
    %34 = arith.extf %33 : vector<16x16x128xbf16> to vector<16x16x128xf32>
    %c1_25 = arith.constant 1 : index
    %c0_26 = arith.constant 0 : index
    %c0_27 = arith.constant 0 : index
    %35 = vector.load %arg3[%c1_25, %c0_26, %c0_27] : memref<3x3x128xf32, #tpu.memory_space<vmem>>, vector<1x1x128xf32>
    %36 = vector.shape_cast %35 : vector<1x1x128xf32> to vector<128xf32>
    %37 = vector.shape_cast %36 : vector<128xf32> to vector<1x1x128xf32>
    %38 = vector.broadcast %37 : vector<1x1x128xf32> to vector<16x16x128xf32>
    %39 = arith.mulf %34, %38 : vector<16x16x128xf32>
    %40 = arith.addf %31, %39 : vector<16x16x128xf32>
    %c0_28 = arith.constant 0 : index
    %c1_29 = arith.constant 1 : index
    %c1_30 = arith.constant 1 : index
    %c0_31 = arith.constant 0 : index
    %41 = vector.load %arg2[%c0_28, %c1_29, %c1_30, %c0_31] : memref<1x18x18x128xbf16, #tpu.memory_space<vmem>>, vector<1x16x16x128xbf16>
    %42 = vector.shape_cast %41 : vector<1x16x16x128xbf16> to vector<16x16x128xbf16>
    %43 = arith.extf %42 : vector<16x16x128xbf16> to vector<16x16x128xf32>
    %c1_32 = arith.constant 1 : index
    %c1_33 = arith.constant 1 : index
    %c0_34 = arith.constant 0 : index
    %44 = vector.load %arg3[%c1_32, %c1_33, %c0_34] : memref<3x3x128xf32, #tpu.memory_space<vmem>>, vector<1x1x128xf32>
    %45 = vector.shape_cast %44 : vector<1x1x128xf32> to vector<128xf32>
    %46 = vector.shape_cast %45 : vector<128xf32> to vector<1x1x128xf32>
    %47 = vector.broadcast %46 : vector<1x1x128xf32> to vector<16x16x128xf32>
    %48 = arith.mulf %43, %47 : vector<16x16x128xf32>
    %49 = arith.addf %40, %48 : vector<16x16x128xf32>
    %c0_35 = arith.constant 0 : index
    %c1_36 = arith.constant 1 : index
    %c2_37 = arith.constant 2 : index
    %c0_38 = arith.constant 0 : index
    %50 = vector.load %arg2[%c0_35, %c1_36, %c2_37, %c0_38] : memref<1x18x18x128xbf16, #tpu.memory_space<vmem>>, vector<1x16x16x128xbf16>
    %51 = vector.shape_cast %50 : vector<1x16x16x128xbf16> to vector<16x16x128xbf16>
    %52 = arith.extf %51 : vector<16x16x128xbf16> to vector<16x16x128xf32>
    %c1_39 = arith.constant 1 : index
    %c2_40 = arith.constant 2 : index
    %c0_41 = arith.constant 0 : index
    %53 = vector.load %arg3[%c1_39, %c2_40, %c0_41] : memref<3x3x128xf32, #tpu.memory_space<vmem>>, vector<1x1x128xf32>
    %54 = vector.shape_cast %53 : vector<1x1x128xf32> to vector<128xf32>
    %55 = vector.shape_cast %54 : vector<128xf32> to vector<1x1x128xf32>
    %56 = vector.broadcast %55 : vector<1x1x128xf32> to vector<16x16x128xf32>
    %57 = arith.mulf %52, %56 : vector<16x16x128xf32>
    %58 = arith.addf %49, %57 : vector<16x16x128xf32>
    %c0_42 = arith.constant 0 : index
    %c2_43 = arith.constant 2 : index
    %c0_44 = arith.constant 0 : index
    %c0_45 = arith.constant 0 : index
    %59 = vector.load %arg2[%c0_42, %c2_43, %c0_44, %c0_45] : memref<1x18x18x128xbf16, #tpu.memory_space<vmem>>, vector<1x16x16x128xbf16>
    %60 = vector.shape_cast %59 : vector<1x16x16x128xbf16> to vector<16x16x128xbf16>
    %61 = arith.extf %60 : vector<16x16x128xbf16> to vector<16x16x128xf32>
    %c2_46 = arith.constant 2 : index
    %c0_47 = arith.constant 0 : index
    %c0_48 = arith.constant 0 : index
    %62 = vector.load %arg3[%c2_46, %c0_47, %c0_48] : memref<3x3x128xf32, #tpu.memory_space<vmem>>, vector<1x1x128xf32>
    %63 = vector.shape_cast %62 : vector<1x1x128xf32> to vector<128xf32>
    %64 = vector.shape_cast %63 : vector<128xf32> to vector<1x1x128xf32>
    %65 = vector.broadcast %64 : vector<1x1x128xf32> to vector<16x16x128xf32>
    %66 = arith.mulf %61, %65 : vector<16x16x128xf32>
    %67 = arith.addf %58, %66 : vector<16x16x128xf32>
    %c0_49 = arith.constant 0 : index
    %c2_50 = arith.constant 2 : index
    %c1_51 = arith.constant 1 : index
    %c0_52 = arith.constant 0 : index
    %68 = vector.load %arg2[%c0_49, %c2_50, %c1_51, %c0_52] : memref<1x18x18x128xbf16, #tpu.memory_space<vmem>>, vector<1x16x16x128xbf16>
    %69 = vector.shape_cast %68 : vector<1x16x16x128xbf16> to vector<16x16x128xbf16>
    %70 = arith.extf %69 : vector<16x16x128xbf16> to vector<16x16x128xf32>
    %c2_53 = arith.constant 2 : index
    %c1_54 = arith.constant 1 : index
    %c0_55 = arith.constant 0 : index
    %71 = vector.load %arg3[%c2_53, %c1_54, %c0_55] : memref<3x3x128xf32, #tpu.memory_space<vmem>>, vector<1x1x128xf32>
    %72 = vector.shape_cast %71 : vector<1x1x128xf32> to vector<128xf32>
    %73 = vector.shape_cast %72 : vector<128xf32> to vector<1x1x128xf32>
    %74 = vector.broadcast %73 : vector<1x1x128xf32> to vector<16x16x128xf32>
    %75 = arith.mulf %70, %74 : vector<16x16x128xf32>
    %76 = arith.addf %67, %75 : vector<16x16x128xf32>
    %c0_56 = arith.constant 0 : index
    %c2_57 = arith.constant 2 : index
    %c2_58 = arith.constant 2 : index
    %c0_59 = arith.constant 0 : index
    %77 = vector.load %arg2[%c0_56, %c2_57, %c2_58, %c0_59] : memref<1x18x18x128xbf16, #tpu.memory_space<vmem>>, vector<1x16x16x128xbf16>
    %78 = vector.shape_cast %77 : vector<1x16x16x128xbf16> to vector<16x16x128xbf16>
    %79 = arith.extf %78 : vector<16x16x128xbf16> to vector<16x16x128xf32>
    %c2_60 = arith.constant 2 : index
    %c2_61 = arith.constant 2 : index
    %c0_62 = arith.constant 0 : index
    %80 = vector.load %arg3[%c2_60, %c2_61, %c0_62] : memref<3x3x128xf32, #tpu.memory_space<vmem>>, vector<1x1x128xf32>
    %81 = vector.shape_cast %80 : vector<1x1x128xf32> to vector<128xf32>
    %82 = vector.shape_cast %81 : vector<128xf32> to vector<1x1x128xf32>
    %83 = vector.broadcast %82 : vector<1x1x128xf32> to vector<16x16x128xf32>
    %84 = arith.mulf %79, %83 : vector<16x16x128xf32>
    %85 = arith.addf %76, %84 : vector<16x16x128xf32>
    %cst = arith.constant 5.000000e-01 : f32
    %86 = vector.broadcast %cst : f32 to vector<16x16x128xf32>
    %87 = arith.mulf %86, %85 : vector<16x16x128xf32>
    %cst_63 = arith.constant 0.707106769 : f32
    %88 = vector.broadcast %cst_63 : f32 to vector<16x16x128xf32>
    %89 = arith.mulf %85, %88 : vector<16x16x128xf32>
    %90 = math.absf %89 : vector<16x16x128xf32>
    %cst_64 = arith.constant 0.327591091 : f32
    %91 = vector.broadcast %cst_64 : f32 to vector<16x16x128xf32>
    %92 = arith.mulf %91, %90 : vector<16x16x128xf32>
    %cst_65 = arith.constant 1.000000e+00 : f32
    %93 = vector.broadcast %cst_65 : f32 to vector<16x16x128xf32>
    %94 = arith.addf %93, %92 : vector<16x16x128xf32>
    %cst_66 = arith.constant 1.000000e+00 : f32
    %95 = vector.broadcast %cst_66 : f32 to vector<16x16x128xf32>
    %96 = arith.divf %95, %94 : vector<16x16x128xf32>
    %cst_67 = arith.constant 1.06140542 : f32
    %97 = vector.broadcast %cst_67 : f32 to vector<16x16x128xf32>
    %98 = arith.mulf %97, %96 : vector<16x16x128xf32>
    %cst_68 = arith.constant -1.45315206 : f32
    %99 = vector.broadcast %cst_68 : f32 to vector<16x16x128xf32>
    %100 = arith.addf %98, %99 : vector<16x16x128xf32>
    %101 = arith.mulf %100, %96 : vector<16x16x128xf32>
    %cst_69 = arith.constant 1.42141378 : f32
    %102 = vector.broadcast %cst_69 : f32 to vector<16x16x128xf32>
    %103 = arith.addf %101, %102 : vector<16x16x128xf32>
    %104 = arith.mulf %103, %96 : vector<16x16x128xf32>
    %cst_70 = arith.constant -0.284496725 : f32
    %105 = vector.broadcast %cst_70 : f32 to vector<16x16x128xf32>
    %106 = arith.addf %104, %105 : vector<16x16x128xf32>
    %107 = arith.mulf %106, %96 : vector<16x16x128xf32>
    %cst_71 = arith.constant 0.254829586 : f32
    %108 = vector.broadcast %cst_71 : f32 to vector<16x16x128xf32>
    %109 = arith.addf %107, %108 : vector<16x16x128xf32>
    %110 = arith.mulf %109, %96 : vector<16x16x128xf32>
    %cst_72 = arith.constant 0.000000e+00 : f32
    %111 = vector.broadcast %cst_72 : f32 to vector<16x16x128xf32>
    %112 = arith.subf %111, %90 : vector<16x16x128xf32>
    %113 = arith.mulf %112, %90 : vector<16x16x128xf32>
    %114 = math.exp %113 : vector<16x16x128xf32>
    %115 = arith.mulf %110, %114 : vector<16x16x128xf32>
    %cst_73 = arith.constant 1.000000e+00 : f32
    %116 = vector.broadcast %cst_73 : f32 to vector<16x16x128xf32>
    %117 = arith.subf %116, %115 : vector<16x16x128xf32>
    %cst_74 = arith.constant 0.000000e+00 : f32
    %118 = vector.broadcast %cst_74 : f32 to vector<16x16x128xf32>
    %119 = arith.cmpf oge, %89, %118 : vector<16x16x128xf32>
    %cst_75 = arith.constant 0.000000e+00 : f32
    %120 = vector.broadcast %cst_75 : f32 to vector<16x16x128xf32>
    %121 = arith.subf %120, %117 : vector<16x16x128xf32>
    %122 = arith.select %119, %117, %121 : vector<16x16x128xi1>, vector<16x16x128xf32>
    %cst_76 = arith.constant 1.000000e+00 : f32
    %123 = vector.broadcast %cst_76 : f32 to vector<16x16x128xf32>
    %124 = arith.addf %123, %122 : vector<16x16x128xf32>
    %125 = arith.mulf %87, %124 : vector<16x16x128xf32>
    %126 = arith.truncf %125 : vector<16x16x128xf32> to vector<16x16x128xbf16>
    %c0_77 = arith.constant 0 : index
    %c0_78 = arith.constant 0 : index
    %c0_79 = arith.constant 0 : index
    %c0_80 = arith.constant 0 : index
    %127 = vector.load %arg5[%c0_77, %c0_78, %c0_79, %c0_80] : memref<1x16x16x128xbf16, #tpu.memory_space<vmem>>, vector<1x16x16x128xbf16>
    %128 = vector.shape_cast %127 : vector<1x16x16x128xbf16> to vector<16x16x128xbf16>
    %129 = vector.shape_cast %126 : vector<16x16x128xbf16> to vector<1x16x16x128xbf16>
    tpu.vector_store %arg5[%c0_77, %c0_78, %c0_79, %c0_80], %129 {strides = array<i32>} : memref<1x16x16x128xbf16, #tpu.memory_space<vmem>>, vector<1x16x16x128xbf16>,
    return
  }
  func.func @transform_0(%arg0: i32, %arg1: i32) -> (i32, i32, i32, i32) {
    %c0_i32 = arith.constant 0 : i32
    %c0_i32_0 = arith.constant 0 : i32
    %c0_i32_1 = arith.constant 0 : i32
    return %arg0, %c0_i32, %c0_i32_0, %arg1 : i32, i32, i32, i32
  }
  func.func @transform_1(%arg0: i32, %arg1: i32) -> (i32, i32, i32) {
    %c0_i32 = arith.constant 0 : i32
    %c0_i32_0 = arith.constant 0 : i32
    %c0_i32_1 = arith.constant 0 : i32
    return %c0_i32, %c0_i32_0, %arg1 : i32, i32, i32
  }
  func.func @transform_2(%arg0: i32, %arg1: i32) -> (i32, i32, i32) {
    %c0_i32 = arith.constant 0 : i32
    %c0_i32_0 = arith.constant 0 : i32
    %c0_i32_1 = arith.constant 0 : i32
    return %c0_i32, %c0_i32_0, %arg1 : i32, i32, i32
  }
  func.func @transform_3(%arg0: i32, %arg1: i32) -> (i32, i32, i32, i32) {
    %c0_i32 = arith.constant 0 : i32
    %c0_i32_0 = arith.constant 0 : i32
    %c0_i32_1 = arith.constant 0 : i32
    return %arg0, %c0_i32, %c0_i32_0, %arg1 : i32, i32, i32, i32
  }
}

</mosaic_0001>

<llo_original>
// kernel: mlp_forward.3
$region0: #{mlp_forward.3}
  #allocation0 [shape = 'u32[]', space=smem, size = 0x4, offset = 0x4, fixed_abs, tag = 'smem constant byte address 0x4 - core index']
  #allocation1 [shape = 'u32[144,128]{1,0:T(1,128)}', space=vmem, size = 0x12000, scoped, tag = 'internal scratch']
  #allocation2 [shape = 'f32[256,128]{1,0:T(8,128)}', space=vmem, size = 0x20000, scoped, tag = 'scratch operand']
  %s0 = inlined_call_operand.vmem [shape: bf16[512,128], index: 0, kind: input, shape index: {}]
  %s1 = inlined_call_operand.vmem [shape: bf16[128,128], index: 1, kind: input, shape index: {}]
  %s2 = inlined_call_operand.vmem [shape: f32[1,128], index: 2, kind: input, shape index: {}]
  %s3 = inlined_call_operand.vmem [shape: bf16[512,128], index: 3, kind: output, shape index: {}]
  %s4 = sld [smem:[#allocation0]]
  $region53: #{mlp_forward.3} parent=0
    _
  %s6 = ssub.s32 1, %s4
  %s7 = scalar_select 0, %s6, %s4
  loop: start=0, step=1, limit=4
  $region2: #{mlp_forward.3} parent=0 // loop_pre_header
    _
  $region3: #{mlp_forward.3} parent=0 // loop_header
    %s9 = sphi 0, %s13
    %p10 = scmp.ge.s32.totalorder %s9, 4
    %s16 = sphi 0, %s35
    %s17 = sphi 0, %s31
    %s18 = sphi 0, %s27
    %s19 = sphi 0, %s16
    %s20 = sphi 0, %s17
    %s21 = sphi 0, %s18
    %s22 = sphi 0, %s19
    %s23 = sphi 0, %s20
    %s24 = sphi 0, %s21
    %s40 = sphi 0, %s42
    %s43 = sphi 0, %s40
    %s44 = sphi 0, %s43
    %s60 = sphi 0, %s44
    %s68 = sphi 0, %s70
    %s71 = sphi 0, %s68
    %s72 = sphi 0, %s71
    %s88 = sphi 0, %s72
    %s94 = sphi 0, %s96
    %s97 = sphi 0, %s94
    %s98 = sphi 0, %s97
    %s114 = sphi 0, %s98
    %s122 = sphi 0, %s124
    %s125 = sphi 0, %s122
    %s126 = sphi 0, %s125
    %s142 = sphi 0, %s126
  $region4: #{mlp_forward.3} parent=0 // loop_header_branch
    %12 = sbr.rel (%p10) target = $region8
  $region5: #{mlp_forward.3} parent=0 // loop_body
    %s14 = ssub.s32 %s9, 1
    %s15 = ssub.s32 %s9, 2
    %s25 = sadd.s32 1, %s18
    %p26 = scmp.ge.s32.totalorder %s25, 1
    %s27 = scalar_select %p26, 0, %s25
    %s28 = sadd.s32 1, %s17
    %s29 = scalar_select %p26, %s28, %s17
    %p30 = scmp.ge.s32.totalorder %s29, 1
    %s31 = scalar_select %p30, 0, %s29
    %s32 = sadd.s32 1, %s16
    %s33 = scalar_select %p30, %s32, %s16
    %p34 = scmp.ge.s32.totalorder %s33, 2
    %s35 = scalar_select %p34, 0, %s33
    %s36 = ssub.s32 %s16, %s35
    %s37 = ssub.s32 %s18, %s27
    %s38 = sor.u32 %s36, %s37
    %p39 = scmp.eq.s32.totalorder %s38, 0
    %s41 = sadd.s32 %s40, 1
    %s42 = scalar_select %p39, %s40, %s41
    %p45 = pneg %p39
    %p46 = scmp.eq.s32.totalorder %s9, 1
    %p47 = por %p45, %p46
    %p48 = scmp.ne.s32.totalorder %s40, %s43
    %p49 = scmp.eq.s32.totalorder %s9, 0
    %p50 = por %p48, %p49
    %p51 = scmp.ne.s32.totalorder %s40, %s43
    %p52 = scmp.eq.s32.totalorder %s14, 1
    %p53 = por %p51, %p52
    %p54 = scmp.ne.s32.totalorder %s43, %s44
    %p55 = scmp.eq.s32.totalorder %s14, 0
    %p56 = por %p54, %p55
    %p57 = scmp.ne.s32.totalorder %s43, %s44
    %p58 = scmp.eq.s32.totalorder %s15, 1
    %p59 = por %p57, %p58
    %p61 = scmp.ne.s32.totalorder %s44, %s60
    %p62 = scmp.eq.s32.totalorder %s15, 0
    %p63 = por %p61, %p62
    %s64 = ssub.s32 %s18, %s27
    %s65 = ssub.s32 %s17, %s31
    %s66 = sor.u32 %s64, %s65
    %p67 = scmp.eq.s32.totalorder %s66, 0
    %s69 = sadd.s32 %s68, 1
    %s70 = scalar_select %p67, %s68, %s69
    %p73 = pneg %p67
    %p74 = scmp.eq.s32.totalorder %s9, 1
    %p75 = por %p73, %p74
    %p76 = scmp.ne.s32.totalorder %s68, %s71
    %p77 = scmp.eq.s32.totalorder %s9, 0
    %p78 = por %p76, %p77
    %p79 = scmp.ne.s32.totalorder %s68, %s71
    %p80 = scmp.eq.s32.totalorder %s14, 1
    %p81 = por %p79, %p80
    %p82 = scmp.ne.s32.totalorder %s71, %s72
    %p83 = scmp.eq.s32.totalorder %s14, 0
    %p84 = por %p82, %p83
    %p85 = scmp.ne.s32.totalorder %s71, %s72
    %p86 = scmp.eq.s32.totalorder %s15, 1
    %p87 = por %p85, %p86
    %p89 = scmp.ne.s32.totalorder %s72, %s88
    %p90 = scmp.eq.s32.totalorder %s15, 0
    %p91 = por %p89, %p90
    %s92 = ssub.s32 %s17, %s31
    %p93 = scmp.eq.s32.totalorder %s92, 0
    %s95 = sadd.s32 %s94, 1
    %s96 = scalar_select %p93, %s94, %s95
    %p99 = pneg %p93
    %p100 = scmp.eq.s32.totalorder %s9, 1
    %p101 = por %p99, %p100
    %p102 = scmp.ne.s32.totalorder %s94, %s97
    %p103 = scmp.eq.s32.totalorder %s9, 0
    %p104 = por %p102, %p103
    %p105 = scmp.ne.s32.totalorder %s94, %s97
    %p106 = scmp.eq.s32.totalorder %s14, 1
    %p107 = por %p105, %p106
    %p108 = scmp.ne.s32.totalorder %s97, %s98
    %p109 = scmp.eq.s32.totalorder %s14, 0
    %p110 = por %p108, %p109
    %p111 = scmp.ne.s32.totalorder %s97, %s98
    %p112 = scmp.eq.s32.totalorder %s15, 1
    %p113 = por %p111, %p112
    %p115 = scmp.ne.s32.totalorder %s98, %s114
    %p116 = scmp.eq.s32.totalorder %s15, 0
    %p117 = por %p115, %p116
    %s118 = ssub.s32 %s16, %s35
    %s119 = ssub.s32 %s17, %s31
    %s120 = sor.u32 %s118, %s119
    %p121 = scmp.eq.s32.totalorder %s120, 0
    %s123 = sadd.s32 %s122, 1
    %s124 = scalar_select %p121, %s122, %s123
    %p127 = pneg %p121
    %p128 = scmp.eq.s32.totalorder %s9, 1
    %p129 = por %p127, %p128
    %p130 = scmp.ne.s32.totalorder %s122, %s125
    %p131 = scmp.eq.s32.totalorder %s9, 0
    %p132 = por %p130, %p131
    %p133 = scmp.ne.s32.totalorder %s122, %s125
    %p134 = scmp.eq.s32.totalorder %s14, 1
    %p135 = por %p133, %p134
    %p136 = scmp.ne.s32.totalorder %s125, %s126
    %p137 = scmp.eq.s32.totalorder %s14, 0
    %p138 = por %p136, %p137
    %p139 = scmp.ne.s32.totalorder %s125, %s126
    %p140 = scmp.eq.s32.totalorder %s15, 1
    %p141 = por %p139, %p140
    %p143 = scmp.ne.s32.totalorder %s126, %s142
    %p144 = scmp.eq.s32.totalorder %s15, 0
    %p145 = por %p143, %p144
    %p146 = scmp.le.s32.totalorder 1, %s9
    %p147 = scmp.lt.s32.totalorder %s9, 3
    %p148 = pnand %p146, %p147
    %p149 = pneg %p148
    // Predicated region
    $region9: #{mlp_forward.3} parent=5 // pred_check
      _
    $region10: #{mlp_forward.3} parent=5 // pred_check_branch
      %151 = sbr.rel (%p148) target = $region12
    $region11: #{mlp_forward.3} parent=5 // pred_region
      %s152 = ssub.s32 %s9, 1
      // Predicated region
      $region13: #{mlp_forward.3} parent=11 // pred_check
        %p153 = pneg %p84
      $region14: #{mlp_forward.3} parent=11 // pred_check_branch
        %155 = sbr.rel (%p153) target = $region16
      $region15: #{mlp_forward.3} parent=11 // pred_region
        %s156 = smul.u32 16, %s21
        %p157 = scmp.lt.s32.totalorder %s156, 15
        %s158 = scalar_select %p157, %s156, 15
        %p159 = scmp.lt.s32.totalorder %s20, 0
        %s160 = scalar_select %p159, %s20, 0
        %s161 = sadd.s32 %s160, %s158
        %s162 = smul.addr %s161, 4
        %s163 = scalar_lea.vmem %s1, %s162
        %s164 = smul.u32 16, %s21
      $region16: #{mlp_forward.3} parent=11 // pred_fallthru
        _
      // Predicated region
      $region17: #{mlp_forward.3} parent=11 // pred_check
        %p165 = pneg %p110
      $region18: #{mlp_forward.3} parent=11 // pred_check_branch
        %167 = sbr.rel (%p165) target = $region20
      $region19: #{mlp_forward.3} parent=11 // pred_region
        %p168 = scmp.lt.s32.totalorder %s20, 0
        %s169 = scalar_select %p168, %s20, 0
        %s170 = scalar_lea.vmem %s2, %s169
      $region20: #{mlp_forward.3} parent=11 // pred_fallthru
        _
    $region12: #{mlp_forward.3} parent=5 // pred_fallthru
      _
    %p171 = scmp.lt.s32.totalorder %s9, 2
    // Predicated region
    $region21: #{mlp_forward.3} parent=5 // pred_check
      %p172 = pneg %p171
    $region22: #{mlp_forward.3} parent=5 // pred_check_branch
      %174 = sbr.rel (%p172) target = $region24
    $region23: #{mlp_forward.3} parent=5 // pred_region
      // Predicated region
      $region25: #{mlp_forward.3} parent=23 // pred_check
        %p175 = pneg %p50
      $region26: #{mlp_forward.3} parent=23 // pred_check_branch
        %177 = sbr.rel (%p175) target = $region28
      $region27: #{mlp_forward.3} parent=23 // pred_region
        %s178 = smul.u32 32, %s16
        %p179 = scmp.lt.s32.totalorder %s178, 63
        %s180 = scalar_select %p179, %s178, 63
        %p181 = scmp.lt.s32.totalorder %s18, 0
        %s182 = scalar_select %p181, %s18, 0
        %s183 = sadd.s32 %s182, %s180
        %s184 = smul.addr %s183, 4
        %s185 = scalar_lea.vmem %s0, %s184
        %s186 = smul.u32 32, %s16
      $region28: #{mlp_forward.3} parent=23 // pred_fallthru
        _
    $region24: #{mlp_forward.3} parent=5 // pred_fallthru
      _
    %p187 = scmp.le.s32.totalorder 1, %s9
    %p188 = scmp.lt.s32.totalorder %s9, 3
    %p189 = pnand %p187, %p188
    %p190 = pneg %p189
    // Predicated region
    $region29: #{mlp_forward.3} parent=5 // pred_check
      _
    $region30: #{mlp_forward.3} parent=5 // pred_check_branch
      %192 = sbr.rel (%p189) target = $region32
    $region31: #{mlp_forward.3} parent=5 // pred_region
      %s193 = ssub.s32 %s9, 1
      %s194 = smul.u32 32, %s19
      %p195 = scmp.lt.s32.totalorder %s194, 63
      %s196 = scalar_select %p195, %s194, 63
      %p197 = scmp.lt.s32.totalorder %s21, 0
      %s198 = scalar_select %p197, %s21, 0
      %s199 = sadd.s32 %s198, %s196
      %s200 = smul.addr %s199, 4
      %s201 = scalar_lea.vmem %s0, %s200
      %p202 = pneg %p56
      %p203 = pneg %p53
      %s204 = smul.u32 16, %s21
      %p205 = scmp.lt.s32.totalorder %s204, 15
      %s206 = scalar_select %p205, %s204, 15
      %p207 = scmp.lt.s32.totalorder %s20, 0
      %s208 = scalar_select %p207, %s20, 0
      %s209 = sadd.s32 %s208, %s206
      %s210 = smul.addr %s209, 4
      %s211 = scalar_lea.vmem %s1, %s210
      %p212 = pneg %p84
      %p213 = pneg %p81
      %p214 = scmp.lt.s32.totalorder %s20, 0
      %s215 = scalar_select %p214, %s20, 0
      %s216 = scalar_lea.vmem %s2, %s215
      %p217 = pneg %p110
      %p218 = pneg %p107
      %p219 = pneg %p138
      %p220 = pneg %p135
      %s221 = smul.u32 32, %s19
      %p222 = scmp.lt.s32.totalorder %s221, 63
      %s223 = scalar_select %p222, %s221, 63
      %p224 = scmp.lt.s32.totalorder %s20, 0
      %s225 = scalar_select %p224, %s20, 0
      %s226 = sadd.s32 %s225, %s223
      %s227 = smul.addr %s226, 4
      %s228 = scalar_lea.vmem %s3, %s227
      %s229 = smul.u32 32, %s19
      %p230 = scmp.lt.s32.totalorder %s229, 63
      %s231 = scalar_select %p230, %s229, 63
      %p232 = scmp.lt.s32.totalorder %s21, 0
      %s233 = scalar_select %p232, %s21, 0
      %s234 = sadd.s32 %s233, %s231
      %s235 = smul.addr %s234, 4
      %s236 = scalar_lea.vmem %s0, %s235
      %s237 = smul.u32 32, %s19
      %s238 = smul.u32 16, %s21
      %p239 = scmp.lt.s32.totalorder %s238, 15
      %s240 = scalar_select %p239, %s238, 15
      %p241 = scmp.lt.s32.totalorder %s20, 0
      %s242 = scalar_select %p241, %s20, 0
      %s243 = sadd.s32 %s242, %s240
      %s244 = smul.addr %s243, 4
      %s245 = scalar_lea.vmem %s1, %s244
      %s246 = smul.u32 16, %s21
      %p247 = scmp.lt.s32.totalorder %s20, 0
      %s248 = scalar_select %p247, %s20, 0
      %s249 = scalar_lea.vmem %s2, %s248
      %s250 = smul.u32 32, %s19
      %p251 = scmp.lt.s32.totalorder %s250, 63
      %s252 = scalar_select %p251, %s250, 63
      %p253 = scmp.lt.s32.totalorder %s20, 0
      %s254 = scalar_select %p253, %s20, 0
      %s255 = sadd.s32 %s254, %s252
      %s256 = smul.addr %s255, 4
      %s257 = scalar_lea.vmem %s3, %s256
      %s258 = smul.u32 32, %s19
      %p260 = scmp.eq.s32.totalorder %s21, 0
      // Predicated region
      $region33: #{mlp_forward.3} parent=31 // pred_check
        %p261 = pneg %p260
      $region34: #{mlp_forward.3} parent=31 // pred_check_branch
        %263 = sbr.rel (%p261) target = $region36
      $region35: #{mlp_forward.3} parent=31 // pred_region
        %264 = vst [vmem:[#allocation2] sm:$0xff] 0.0
        %265 = vst [vmem:[#allocation2 + $0x8] sm:$0xff] 0.0
        %266 = vst [vmem:[#allocation2 + $0x10] sm:$0xff] 0.0
        %267 = vst [vmem:[#allocation2 + $0x18] sm:$0xff] 0.0
        %268 = vst [vmem:[#allocation2 + $0x20] sm:$0xff] 0.0
        %269 = vst [vmem:[#allocation2 + $0x28] sm:$0xff] 0.0
        %270 = vst [vmem:[#allocation2 + $0x30] sm:$0xff] 0.0
        %271 = vst [vmem:[#allocation2 + $0x38] sm:$0xff] 0.0
        %272 = vst [vmem:[#allocation2 + $0x40] sm:$0xff] 0.0
        %273 = vst [vmem:[#allocation2 + $0x48] sm:$0xff] 0.0
        %274 = vst [vmem:[#allocation2 + $0x50] sm:$0xff] 0.0
        %275 = vst [vmem:[#allocation2 + $0x58] sm:$0xff] 0.0
        %276 = vst [vmem:[#allocation2 + $0x60] sm:$0xff] 0.0
        %277 = vst [vmem:[#allocation2 + $0x68] sm:$0xff] 0.0
        %278 = vst [vmem:[#allocation2 + $0x70] sm:$0xff] 0.0
        %279 = vst [vmem:[#allocation2 + $0x78] sm:$0xff] 0.0
        %280 = vst [vmem:[#allocation2 + $0x80] sm:$0xff] 0.0
        %281 = vst [vmem:[#allocation2 + $0x88] sm:$0xff] 0.0
        %282 = vst [vmem:[#allocation2 + $0x90] sm:$0xff] 0.0
        %283 = vst [vmem:[#allocation2 + $0x98] sm:$0xff] 0.0
        %284 = vst [vmem:[#allocation2 + $0xa0] sm:$0xff] 0.0
        %285 = vst [vmem:[#allocation2 + $0xa8] sm:$0xff] 0.0
        %286 = vst [vmem:[#allocation2 + $0xb0] sm:$0xff] 0.0
        %287 = vst [vmem:[#allocation2 + $0xb8] sm:$0xff] 0.0
        %288 = vst [vmem:[#allocation2 + $0xc0] sm:$0xff] 0.0
        %289 = vst [vmem:[#allocation2 + $0xc8] sm:$0xff] 0.0
        %290 = vst [vmem:[#allocation2 + $0xd0] sm:$0xff] 0.0
        %291 = vst [vmem:[#allocation2 + $0xd8] sm:$0xff] 0.0
        %292 = vst [vmem:[#allocation2 + $0xe0] sm:$0xff] 0.0
        %293 = vst [vmem:[#allocation2 + $0xe8] sm:$0xff] 0.0
        %294 = vst [vmem:[#allocation2 + $0xf0] sm:$0xff] 0.0
        %295 = vst [vmem:[#allocation2 + $0xf8] sm:$0xff] 0.0
      $region36: #{mlp_forward.3} parent=31 // pred_fallthru
        _
      %v296 = vld [vmem:[#allocation2] sm:$0xff]
      %v297 = vld [vmem:[#allocation2 + $0x8] sm:$0xff]
      %v298 = vld [vmem:[#allocation2 + $0x10] sm:$0xff]
      %v299 = vld [vmem:[#allocation2 + $0x18] sm:$0xff]
      %v300 = vld [vmem:[#allocation2 + $0x20] sm:$0xff]
      %v301 = vld [vmem:[#allocation2 + $0x28] sm:$0xff]
      %v302 = vld [vmem:[#allocation2 + $0x30] sm:$0xff]
      %v303 = vld [vmem:[#allocation2 + $0x38] sm:$0xff]
      %v304 = vld [vmem:[#allocation2 + $0x40] sm:$0xff]
      %v305 = vld [vmem:[#allocation2 + $0x48] sm:$0xff]
      %v306 = vld [vmem:[#allocation2 + $0x50] sm:$0xff]
      %v307 = vld [vmem:[#allocation2 + $0x58] sm:$0xff]
      %v308 = vld [vmem:[#allocation2 + $0x60] sm:$0xff]
      %v309 = vld [vmem:[#allocation2 + $0x68] sm:$0xff]
      %v310 = vld [vmem:[#allocation2 + $0x70] sm:$0xff]
      %v311 = vld [vmem:[#allocation2 + $0x78] sm:$0xff]
      %v312 = vld [vmem:[#allocation2 + $0x80] sm:$0xff]
      %v313 = vld [vmem:[#allocation2 + $0x88] sm:$0xff]
      %v314 = vld [vmem:[#allocation2 + $0x90] sm:$0xff]
      %v315 = vld [vmem:[#allocation2 + $0x98] sm:$0xff]
      %v316 = vld [vmem:[#allocation2 + $0xa0] sm:$0xff]
      %v317 = vld [vmem:[#allocation2 + $0xa8] sm:$0xff]
      %v318 = vld [vmem:[#allocation2 + $0xb0] sm:$0xff]
      %v319 = vld [vmem:[#allocation2 + $0xb8] sm:$0xff]
      %v320 = vld [vmem:[#allocation2 + $0xc0] sm:$0xff]
      %v321 = vld [vmem:[#allocation2 + $0xc8] sm:$0xff]
      %v322 = vld [vmem:[#allocation2 + $0xd0] sm:$0xff]
      %v323 = vld [vmem:[#allocation2 + $0xd8] sm:$0xff]
      %v324 = vld [vmem:[#allocation2 + $0xe0] sm:$0xff]
      %v325 = vld [vmem:[#allocation2 + $0xe8] sm:$0xff]
      %v326 = vld [vmem:[#allocation2 + $0xf0] sm:$0xff]
      %v327 = vld [vmem:[#allocation2 + $0xf8] sm:$0xff]
      %v328 = vld [vmem:[%s236] sm:$0xf]
      %v329 = vld [vmem:[%s236 + $0x4] sm:$0xf]
      %v330 = vld [vmem:[%s236 + $0x8] sm:$0xf]
      %v331 = vld [vmem:[%s236 + $0xc] sm:$0xf]
      %v332 = vld [vmem:[%s236 + $0x10] sm:$0xf]
      %v333 = vld [vmem:[%s236 + $0x14] sm:$0xf]
      %v334 = vld [vmem:[%s236 + $0x18] sm:$0xf]
      %v335 = vld [vmem:[%s236 + $0x1c] sm:$0xf]
      %v336 = vld [vmem:[%s236 + $0x20] sm:$0xf]
      %v337 = vld [vmem:[%s236 + $0x24] sm:$0xf]
      %v338 = vld [vmem:[%s236 + $0x28] sm:$0xf]
      %v339 = vld [vmem:[%s236 + $0x2c] sm:$0xf]
      %v340 = vld [vmem:[%s236 + $0x30] sm:$0xf]
      %v341 = vld [vmem:[%s236 + $0x34] sm:$0xf]
      %v342 = vld [vmem:[%s236 + $0x38] sm:$0xf]
      %v343 = vld [vmem:[%s236 + $0x3c] sm:$0xf]
      %v344 = vld [vmem:[%s236 + $0x40] sm:$0xf]
      %v345 = vld [vmem:[%s236 + $0x44] sm:$0xf]
      %v346 = vld [vmem:[%s236 + $0x48] sm:$0xf]
      %v347 = vld [vmem:[%s236 + $0x4c] sm:$0xf]
      %v348 = vld [vmem:[%s236 + $0x50] sm:$0xf]
      %v349 = vld [vmem:[%s236 + $0x54] sm:$0xf]
      %v350 = vld [vmem:[%s236 + $0x58] sm:$0xf]
      %v351 = vld [vmem:[%s236 + $0x5c] sm:$0xf]
      %v352 = vld [vmem:[%s236 + $0x60] sm:$0xf]
      %v353 = vld [vmem:[%s236 + $0x64] sm:$0xf]
      %v354 = vld [vmem:[%s236 + $0x68] sm:$0xf]
      %v355 = vld [vmem:[%s236 + $0x6c] sm:$0xf]
      %v356 = vld [vmem:[%s236 + $0x70] sm:$0xf]
      %v357 = vld [vmem:[%s236 + $0x74] sm:$0xf]
      %v358 = vld [vmem:[%s236 + $0x78] sm:$0xf]
      %v359 = vld [vmem:[%s236 + $0x7c] sm:$0xf]
      %v360 = vld [vmem:[%s245] sm:$0xf]
      %v361 = vld [vmem:[%s245 + $0x4] sm:$0xf]
      %v362 = vld [vmem:[%s245 + $0x8] sm:$0xf]
      %v363 = vld [vmem:[%s245 + $0xc] sm:$0xf]
      %v364 = vld [vmem:[%s245 + $0x10] sm:$0xf]
      %v365 = vld [vmem:[%s245 + $0x14] sm:$0xf]
      %v366 = vld [vmem:[%s245 + $0x18] sm:$0xf]
      %v367 = vld [vmem:[%s245 + $0x1c] sm:$0xf]
      %v368 = vld [vmem:[%s245 + $0x20] sm:$0xf]
      %v369 = vld [vmem:[%s245 + $0x24] sm:$0xf]
      %v370 = vld [vmem:[%s245 + $0x28] sm:$0xf]
      %v371 = vld [vmem:[%s245 + $0x2c] sm:$0xf]
      %v372 = vld [vmem:[%s245 + $0x30] sm:$0xf]
      %v373 = vld [vmem:[%s245 + $0x34] sm:$0xf]
      %v374 = vld [vmem:[%s245 + $0x38] sm:$0xf]
      %v375 = vld [vmem:[%s245 + $0x3c] sm:$0xf]
      %v408 = vunpack.c.l.b16 %v328
      %v409 = vunpack.c.l.b16 %v329
      %v410 = vunpack.c.l.b16 %v330
      %v411 = vunpack.c.l.b16 %v331
      %v412 = vunpack.c.l.b16 %v332
      %v413 = vunpack.c.l.b16 %v333
      %v414 = vunpack.c.l.b16 %v334
      %v415 = vunpack.c.l.b16 %v335
      %v416 = vunpack.c.l.b16 %v336
      %v417 = vunpack.c.l.b16 %v337
      %v418 = vunpack.c.l.b16 %v338
      %v419 = vunpack.c.l.b16 %v339
      %v420 = vunpack.c.l.b16 %v340
      %v421 = vunpack.c.l.b16 %v341
      %v422 = vunpack.c.l.b16 %v342
      %v423 = vunpack.c.l.b16 %v343
      %v424 = vunpack.c.l.b16 %v344
      %v425 = vunpack.c.l.b16 %v345
      %v426 = vunpack.c.l.b16 %v346
      %v427 = vunpack.c.l.b16 %v347
      %v428 = vunpack.c.l.b16 %v348
      %v429 = vunpack.c.l.b16 %v349
      %v430 = vunpack.c.l.b16 %v350
      %v431 = vunpack.c.l.b16 %v351
      %v432 = vunpack.c.l.b16 %v352
      %v433 = vunpack.c.l.b16 %v353
      %v434 = vunpack.c.l.b16 %v354
      %v435 = vunpack.c.l.b16 %v355
      %v436 = vunpack.c.l.b16 %v356
      %v437 = vunpack.c.l.b16 %v357
      %v438 = vunpack.c.l.b16 %v358
      %v439 = vunpack.c.l.b16 %v359
      %v440 = vpack.c.b16 %v409, %v408
      %v441 = vpack.c.b16 %v411, %v410
      %v442 = vpack.c.b16 %v413, %v412
      %v443 = vpack.c.b16 %v415, %v414
      %v444 = vpack.c.b16 %v417, %v416
      %v445 = vpack.c.b16 %v419, %v418
      %v446 = vpack.c.b16 %v421, %v420
      %v447 = vpack.c.b16 %v423, %v422
      %v448 = vpack.c.b16 %v425, %v424
      %v449 = vpack.c.b16 %v427, %v426
      %v450 = vpack.c.b16 %v429, %v428
      %v451 = vpack.c.b16 %v431, %v430
      %v452 = vpack.c.b16 %v433, %v432
      %v453 = vpack.c.b16 %v435, %v434
      %v454 = vpack.c.b16 %v437, %v436
      %v455 = vpack.c.b16 %v439, %v438
      %v488 = vunpack.c.l.b16 %v360
      %v489 = vunpack.c.l.b16 %v361
      %v490 = vunpack.c.l.b16 %v362
      %v491 = vunpack.c.l.b16 %v363
      %v492 = vunpack.c.l.b16 %v364
      %v493 = vunpack.c.l.b16 %v365
      %v494 = vunpack.c.l.b16 %v366
      %v495 = vunpack.c.l.b16 %v367
      %v496 = vunpack.c.l.b16 %v368
      %v497 = vunpack.c.l.b16 %v369
      %v498 = vunpack.c.l.b16 %v370
      %v499 = vunpack.c.l.b16 %v371
      %v500 = vunpack.c.l.b16 %v372
      %v501 = vunpack.c.l.b16 %v373
      %v502 = vunpack.c.l.b16 %v374
      %v503 = vunpack.c.l.b16 %v375
      %v504 = vpack.c.b16 %v489, %v488
      %v505 = vpack.c.b16 %v491, %v490
      %v506 = vpack.c.b16 %v493, %v492
      %v507 = vpack.c.b16 %v495, %v494
      %v508 = vpack.c.b16 %v497, %v496
      %v509 = vpack.c.b16 %v499, %v498
      %v510 = vpack.c.b16 %v501, %v500
      %v511 = vpack.c.b16 %v503, %v502
      %520 = vmatprep.subr.bf16.mxu0 0
      %521 = vmatpush1.bf16.msra.mxu0 %v511
      %522 = vmatprep.subr.bf16.mxu0 0
      %523 = vmatpush1.bf16.msra.mxu0 %v510
      %524 = vmatprep.subr.bf16.mxu0 0
      %525 = vmatpush1.bf16.msra.mxu0 %v509
      %526 = vmatprep.subr.bf16.mxu0 0
      %527 = vmatpush1.bf16.msra.mxu0 %v508
      %528 = vmatprep.subr.bf16.mxu0 0
      %529 = vmatpush1.bf16.msra.mxu0 %v507
      %530 = vmatprep.subr.bf16.mxu0 0
      %531 = vmatpush1.bf16.msra.mxu0 %v506
      %532 = vmatprep.subr.bf16.mxu0 0
      %533 = vmatpush1.bf16.msra.mxu0 %v505
      %534 = vmatprep.subr.bf16.mxu0 0
      %535 = vmatpush1.bf16.msra.mxu0 %v504
      %536 = vmatprep.subr.bf16.mxu0 0
      %537 = vmatpush2.bf16.msra.mxu0 0
      %538 = vmatprep.subr.bf16.mxu0 0
      %539 = vmatpush2.bf16.msra.mxu0 0
      %540 = vmatprep.subr.bf16.mxu0 0
      %541 = vmatpush2.bf16.msra.mxu0 0
      %542 = vmatprep.subr.bf16.mxu0 0
      %543 = vmatpush2.bf16.msra.mxu0 0
      %544 = vmatprep.subr.bf16.mxu0 0
      %545 = vmatpush2.bf16.msra.mxu0 0
      %546 = vmatprep.subr.bf16.mxu0 0
      %547 = vmatpush2.bf16.msra.mxu0 0
      %548 = vmatprep.subr.bf16.mxu0 0
      %549 = vmatpush2.bf16.msra.mxu0 0
      %550 = vmatprep.subr.bf16.mxu0 0
      %551 = vmatpush2.bf16.msra.mxu0 0
      %552 = vmatprep.mubr.bf16.mxu0 0
      %553 = vmatmul.mubr.bf16.gmra.mxu0 %v440
      %v554 = vpop.f32.mrf.mxu0
      %v555 = vadd.f32 0.0, %v554
      %v556 = vpop.f32.mrf.mxu0
      %v557 = vpop.f32.mrf.mxu0
      %v558 = vadd.f32 0.0, %v557
      %v559 = vpop.f32.mrf.mxu0
      %560 = vmatprep.mubr.bf16.mxu0 0
      %561 = vmatmul.mubr.bf16.gmra.mxu0 %v441
      %v562 = vpop.f32.mrf.mxu0
      %v563 = vadd.f32 0.0, %v562
      %v564 = vpop.f32.mrf.mxu0
      %v565 = vpop.f32.mrf.mxu0
      %v566 = vadd.f32 0.0, %v565
      %v567 = vpop.f32.mrf.mxu0
      %568 = vmatprep.mubr.bf16.mxu0 0
      %569 = vmatmul.mubr.bf16.gmra.mxu0 %v442
      %v570 = vpop.f32.mrf.mxu0
      %v571 = vadd.f32 0.0, %v570
      %v572 = vpop.f32.mrf.mxu0
      %v573 = vpop.f32.mrf.mxu0
      %v574 = vadd.f32 0.0, %v573
      %v575 = vpop.f32.mrf.mxu0
      %576 = vmatprep.mubr.bf16.mxu0 0
      %577 = vmatmul.mubr.bf16.gmra.mxu0 %v443
      %v578 = vpop.f32.mrf.mxu0
      %v579 = vadd.f32 0.0, %v578
      %v580 = vpop.f32.mrf.mxu0
      %v581 = vpop.f32.mrf.mxu0
      %v582 = vadd.f32 0.0, %v581
      %v583 = vpop.f32.mrf.mxu0
      %584 = vmatprep.mubr.bf16.mxu0 0
      %585 = vmatmul.mubr.bf16.gmra.mxu0 %v444
      %v586 = vpop.f32.mrf.mxu0
      %v587 = vadd.f32 0.0, %v586
      %v588 = vpop.f32.mrf.mxu0
      %v589 = vpop.f32.mrf.mxu0
      %v590 = vadd.f32 0.0, %v589
      %v591 = vpop.f32.mrf.mxu0
      %592 = vmatprep.mubr.bf16.mxu0 0
      %593 = vmatmul.mubr.bf16.gmra.mxu0 %v445
      %v594 = vpop.f32.mrf.mxu0
      %v595 = vadd.f32 0.0, %v594
      %v596 = vpop.f32.mrf.mxu0
      %v597 = vpop.f32.mrf.mxu0
      %v598 = vadd.f32 0.0, %v597
      %v599 = vpop.f32.mrf.mxu0
      %600 = vmatprep.mubr.bf16.mxu0 0
      %601 = vmatmul.mubr.bf16.gmra.mxu0 %v446
      %v602 = vpop.f32.mrf.mxu0
      %v603 = vadd.f32 0.0, %v602
      %v604 = vpop.f32.mrf.mxu0
      %v605 = vpop.f32.mrf.mxu0
      %v606 = vadd.f32 0.0, %v605
      %v607 = vpop.f32.mrf.mxu0
      %608 = vmatprep.mubr.bf16.mxu0 0
      %609 = vmatmul.mubr.bf16.gmra.mxu0 %v447
      %v610 = vpop.f32.mrf.mxu0
      %v611 = vadd.f32 0.0, %v610
      %v612 = vpop.f32.mrf.mxu0
      %v613 = vpop.f32.mrf.mxu0
      %v614 = vadd.f32 0.0, %v613
      %v615 = vpop.f32.mrf.mxu0
      %616 = vmatprep.mubr.bf16.mxu0 0
      %617 = vmatmul.mubr.bf16.gmra.mxu0 %v448
      %v618 = vpop.f32.mrf.mxu0
      %v619 = vadd.f32 0.0, %v618
      %v620 = vpop.f32.mrf.mxu0
      %v621 = vpop.f32.mrf.mxu0
      %v622 = vadd.f32 0.0, %v621
      %v623 = vpop.f32.mrf.mxu0
      %624 = vmatprep.mubr.bf16.mxu0 0
      %625 = vmatmul.mubr.bf16.gmra.mxu0 %v449
      %v626 = vpop.f32.mrf.mxu0
      %v627 = vadd.f32 0.0, %v626
      %v628 = vpop.f32.mrf.mxu0
      %v629 = vpop.f32.mrf.mxu0
      %v630 = vadd.f32 0.0, %v629
      %v631 = vpop.f32.mrf.mxu0
      %632 = vmatprep.mubr.bf16.mxu0 0
      %633 = vmatmul.mubr.bf16.gmra.mxu0 %v450
      %v634 = vpop.f32.mrf.mxu0
      %v635 = vadd.f32 0.0, %v634
      %v636 = vpop.f32.mrf.mxu0
      %v637 = vpop.f32.mrf.mxu0
      %v638 = vadd.f32 0.0, %v637
      %v639 = vpop.f32.mrf.mxu0
      %640 = vmatprep.mubr.bf16.mxu0 0
      %641 = vmatmul.mubr.bf16.gmra.mxu0 %v451
      %v642 = vpop.f32.mrf.mxu0
      %v643 = vadd.f32 0.0, %v642
      %v644 = vpop.f32.mrf.mxu0
      %v645 = vpop.f32.mrf.mxu0
      %v646 = vadd.f32 0.0, %v645
      %v647 = vpop.f32.mrf.mxu0
      %648 = vmatprep.mubr.bf16.mxu0 0
      %649 = vmatmul.mubr.bf16.gmra.mxu0 %v452
      %v650 = vpop.f32.mrf.mxu0
      %v651 = vadd.f32 0.0, %v650
      %v652 = vpop.f32.mrf.mxu0
      %v653 = vpop.f32.mrf.mxu0
      %v654 = vadd.f32 0.0, %v653
      %v655 = vpop.f32.mrf.mxu0
      %656 = vmatprep.mubr.bf16.mxu0 0
      %657 = vmatmul.mubr.bf16.gmra.mxu0 %v453
      %v658 = vpop.f32.mrf.mxu0
      %v659 = vadd.f32 0.0, %v658
      %v660 = vpop.f32.mrf.mxu0
      %v661 = vpop.f32.mrf.mxu0
      %v662 = vadd.f32 0.0, %v661
      %v663 = vpop.f32.mrf.mxu0
      %664 = vmatprep.mubr.bf16.mxu0 0
      %665 = vmatmul.mubr.bf16.gmra.mxu0 %v454
      %v666 = vpop.f32.mrf.mxu0
      %v667 = vadd.f32 0.0, %v666
      %v668 = vpop.f32.mrf.mxu0
      %v669 = vpop.f32.mrf.mxu0
      %v670 = vadd.f32 0.0, %v669
      %v671 = vpop.f32.mrf.mxu0
      %672 = vmatprep.mubr.bf16.mxu0 0
      %673 = vmatmul.mubr.bf16.gmra.mxu0 %v455
      %v674 = vpop.f32.mrf.mxu0
      %v675 = vadd.f32 0.0, %v674
      %v676 = vpop.f32.mrf.mxu0
      %v677 = vpop.f32.mrf.mxu0
      %v678 = vadd.f32 0.0, %v677
      %v679 = vpop.f32.mrf.mxu0
      %680 = vdwg.mxu0
      %v681 = vadd.f32 %v296, %v555
      %v682 = vadd.f32 %v297, %v558
      %v683 = vadd.f32 %v298, %v563
      %v684 = vadd.f32 %v299, %v566
      %v685 = vadd.f32 %v300, %v571
      %v686 = vadd.f32 %v301, %v574
      %v687 = vadd.f32 %v302, %v579
      %v688 = vadd.f32 %v303, %v582
      %v689 = vadd.f32 %v304, %v587
      %v690 = vadd.f32 %v305, %v590
      %v691 = vadd.f32 %v306, %v595
      %v692 = vadd.f32 %v307, %v598
      %v693 = vadd.f32 %v308, %v603
      %v694 = vadd.f32 %v309, %v606
      %v695 = vadd.f32 %v310, %v611
      %v696 = vadd.f32 %v311, %v614
      %v697 = vadd.f32 %v312, %v619
      %v698 = vadd.f32 %v313, %v622
      %v699 = vadd.f32 %v314, %v627
      %v700 = vadd.f32 %v315, %v630
      %v701 = vadd.f32 %v316, %v635
      %v702 = vadd.f32 %v317, %v638
      %v703 = vadd.f32 %v318, %v643
      %v704 = vadd.f32 %v319, %v646
      %v705 = vadd.f32 %v320, %v651
      %v706 = vadd.f32 %v321, %v654
      %v707 = vadd.f32 %v322, %v659
      %v708 = vadd.f32 %v323, %v662
      %v709 = vadd.f32 %v324, %v667
      %v710 = vadd.f32 %v325, %v670
      %v711 = vadd.f32 %v326, %v675
      %v712 = vadd.f32 %v327, %v678
      %713 = vst [vmem:[#allocation2] sm:$0xff] %v681
      %714 = vst [vmem:[#allocation2 + $0x8] sm:$0xff] %v682
      %715 = vst [vmem:[#allocation2 + $0x10] sm:$0xff] %v683
      %716 = vst [vmem:[#allocation2 + $0x18] sm:$0xff] %v684
      %717 = vst [vmem:[#allocation2 + $0x20] sm:$0xff] %v685
      %718 = vst [vmem:[#allocation2 + $0x28] sm:$0xff] %v686
      %719 = vst [vmem:[#allocation2 + $0x30] sm:$0xff] %v687
      %720 = vst [vmem:[#allocation2 + $0x38] sm:$0xff] %v688
      %721 = vst [vmem:[#allocation2 + $0x40] sm:$0xff] %v689
      %722 = vst [vmem:[#allocation2 + $0x48] sm:$0xff] %v690
      %723 = vst [vmem:[#allocation2 + $0x50] sm:$0xff] %v691
      %724 = vst [vmem:[#allocation2 + $0x58] sm:$0xff] %v692
      %725 = vst [vmem:[#allocation2 + $0x60] sm:$0xff] %v693
      %726 = vst [vmem:[#allocation2 + $0x68] sm:$0xff] %v694
      %727 = vst [vmem:[#allocation2 + $0x70] sm:$0xff] %v695
      %728 = vst [vmem:[#allocation2 + $0x78] sm:$0xff] %v696
      %729 = vst [vmem:[#allocation2 + $0x80] sm:$0xff] %v697
      %730 = vst [vmem:[#allocation2 + $0x88] sm:$0xff] %v698
      %731 = vst [vmem:[#allocation2 + $0x90] sm:$0xff] %v699
      %732 = vst [vmem:[#allocation2 + $0x98] sm:$0xff] %v700
      %733 = vst [vmem:[#allocation2 + $0xa0] sm:$0xff] %v701
      %734 = vst [vmem:[#allocation2 + $0xa8] sm:$0xff] %v702
      %735 = vst [vmem:[#allocation2 + $0xb0] sm:$0xff] %v703
      %736 = vst [vmem:[#allocation2 + $0xb8] sm:$0xff] %v704
      %737 = vst [vmem:[#allocation2 + $0xc0] sm:$0xff] %v705
      %738 = vst [vmem:[#allocation2 + $0xc8] sm:$0xff] %v706
      %739 = vst [vmem:[#allocation2 + $0xd0] sm:$0xff] %v707
      %740 = vst [vmem:[#allocation2 + $0xd8] sm:$0xff] %v708
      %741 = vst [vmem:[#allocation2 + $0xe0] sm:$0xff] %v709
      %742 = vst [vmem:[#allocation2 + $0xe8] sm:$0xff] %v710
      %743 = vst [vmem:[#allocation2 + $0xf0] sm:$0xff] %v711
      %744 = vst [vmem:[#allocation2 + $0xf8] sm:$0xff] %v712
      // Predicated region
      $region37: #{mlp_forward.3} parent=31 // pred_check
        %p745 = pneg %p260
      $region38: #{mlp_forward.3} parent=31 // pred_check_branch
        %747 = sbr.rel (%p745) target = $region40
      $region39: #{mlp_forward.3} parent=31 // pred_region
        %v748 = vld [vmem:[#allocation2] sm:$0xff]
        %v749 = vld [vmem:[#allocation2 + $0x8] sm:$0xff]
        %v750 = vld [vmem:[#allocation2 + $0x10] sm:$0xff]
        %v751 = vld [vmem:[#allocation2 + $0x18] sm:$0xff]
        %v752 = vld [vmem:[#allocation2 + $0x20] sm:$0xff]
        %v753 = vld [vmem:[#allocation2 + $0x28] sm:$0xff]
        %v754 = vld [vmem:[#allocation2 + $0x30] sm:$0xff]
        %v755 = vld [vmem:[#allocation2 + $0x38] sm:$0xff]
        %v756 = vld [vmem:[#allocation2 + $0x40] sm:$0xff]
        %v757 = vld [vmem:[#allocation2 + $0x48] sm:$0xff]
        %v758 = vld [vmem:[#allocation2 + $0x50] sm:$0xff]
        %v759 = vld [vmem:[#allocation2 + $0x58] sm:$0xff]
        %v760 = vld [vmem:[#allocation2 + $0x60] sm:$0xff]
        %v761 = vld [vmem:[#allocation2 + $0x68] sm:$0xff]
        %v762 = vld [vmem:[#allocation2 + $0x70] sm:$0xff]
        %v763 = vld [vmem:[#allocation2 + $0x78] sm:$0xff]
        %v764 = vld [vmem:[#allocation2 + $0x80] sm:$0xff]
        %v765 = vld [vmem:[#allocation2 + $0x88] sm:$0xff]
        %v766 = vld [vmem:[#allocation2 + $0x90] sm:$0xff]
        %v767 = vld [vmem:[#allocation2 + $0x98] sm:$0xff]
        %v768 = vld [vmem:[#allocation2 + $0xa0] sm:$0xff]
        %v769 = vld [vmem:[#allocation2 + $0xa8] sm:$0xff]
        %v770 = vld [vmem:[#allocation2 + $0xb0] sm:$0xff]
        %v771 = vld [vmem:[#allocation2 + $0xb8] sm:$0xff]
        %v772 = vld [vmem:[#allocation2 + $0xc0] sm:$0xff]
        %v773 = vld [vmem:[#allocation2 + $0xc8] sm:$0xff]
        %v774 = vld [vmem:[#allocation2 + $0xd0] sm:$0xff]
        %v775 = vld [vmem:[#allocation2 + $0xd8] sm:$0xff]
        %v776 = vld [vmem:[#allocation2 + $0xe0] sm:$0xff]
        %v777 = vld [vmem:[#allocation2 + $0xe8] sm:$0xff]
        %v778 = vld [vmem:[#allocation2 + $0xf0] sm:$0xff]
        %v779 = vld [vmem:[#allocation2 + $0xf8] sm:$0xff]
        %v780 = vld [vmem:[%s249] sm:$0x1]
        %v782 = vlaneseq
        %v783 = vshrl.u32 %v782, 7
        %v784 = vsub.s32 0, %v783
        %v785 = vrot.slane %v780, %v784
        %v787 = vadd.f32 %v748, %v785
        %v788 = vadd.f32 %v749, %v785
        %v789 = vadd.f32 %v750, %v785
        %v790 = vadd.f32 %v751, %v785
        %v791 = vadd.f32 %v752, %v785
        %v792 = vadd.f32 %v753, %v785
        %v793 = vadd.f32 %v754, %v785
        %v794 = vadd.f32 %v755, %v785
        %v795 = vadd.f32 %v756, %v785
        %v796 = vadd.f32 %v757, %v785
        %v797 = vadd.f32 %v758, %v785
        %v798 = vadd.f32 %v759, %v785
        %v799 = vadd.f32 %v760, %v785
        %v800 = vadd.f32 %v761, %v785
        %v801 = vadd.f32 %v762, %v785
        %v802 = vadd.f32 %v763, %v785
        %v803 = vadd.f32 %v764, %v785
        %v804 = vadd.f32 %v765, %v785
        %v805 = vadd.f32 %v766, %v785
        %v806 = vadd.f32 %v767, %v785
        %v807 = vadd.f32 %v768, %v785
        %v808 = vadd.f32 %v769, %v785
        %v809 = vadd.f32 %v770, %v785
        %v810 = vadd.f32 %v771, %v785
        %v811 = vadd.f32 %v772, %v785
        %v812 = vadd.f32 %v773, %v785
        %v813 = vadd.f32 %v774, %v785
        %v814 = vadd.f32 %v775, %v785
        %v815 = vadd.f32 %v776, %v785
        %v816 = vadd.f32 %v777, %v785
        %v817 = vadd.f32 %v778, %v785
        %v818 = vadd.f32 %v779, %v785
        %v819 = vpack.c.bf16 %v788, %v787
        %v820 = vpack.c.bf16 %v790, %v789
        %v821 = vpack.c.bf16 %v792, %v791
        %v822 = vpack.c.bf16 %v794, %v793
        %v823 = vpack.c.bf16 %v796, %v795
        %v824 = vpack.c.bf16 %v798, %v797
        %v825 = vpack.c.bf16 %v800, %v799
        %v826 = vpack.c.bf16 %v802, %v801
        %v827 = vpack.c.bf16 %v804, %v803
        %v828 = vpack.c.bf16 %v806, %v805
        %v829 = vpack.c.bf16 %v808, %v807
        %v830 = vpack.c.bf16 %v810, %v809
        %v831 = vpack.c.bf16 %v812, %v811
        %v832 = vpack.c.bf16 %v814, %v813
        %v833 = vpack.c.bf16 %v816, %v815
        %v834 = vpack.c.bf16 %v818, %v817
        %v851 = vunpack.c.l.b16 %v819
        %v852 = vunpack.c.h.b16 %v819
        %v853 = vunpack.c.l.b16 %v820
        %v854 = vunpack.c.h.b16 %v820
        %v855 = vunpack.c.l.b16 %v821
        %v856 = vunpack.c.h.b16 %v821
        %v857 = vunpack.c.l.b16 %v822
        %v858 = vunpack.c.h.b16 %v822
        %v859 = vunpack.c.l.b16 %v823
        %v860 = vunpack.c.h.b16 %v823
        %v861 = vunpack.c.l.b16 %v824
        %v862 = vunpack.c.h.b16 %v824
        %v863 = vunpack.c.l.b16 %v825
        %v864 = vunpack.c.h.b16 %v825
        %v865 = vunpack.c.l.b16 %v826
        %v866 = vunpack.c.h.b16 %v826
        %v867 = vunpack.c.l.b16 %v827
        %v868 = vunpack.c.h.b16 %v827
        %v869 = vunpack.c.l.b16 %v828
        %v870 = vunpack.c.h.b16 %v828
        %v871 = vunpack.c.l.b16 %v829
        %v872 = vunpack.c.h.b16 %v829
        %v873 = vunpack.c.l.b16 %v830
        %v874 = vunpack.c.h.b16 %v830
        %v875 = vunpack.c.l.b16 %v831
        %v876 = vunpack.c.h.b16 %v831
        %v877 = vunpack.c.l.b16 %v832
        %v878 = vunpack.c.h.b16 %v832
        %v879 = vunpack.c.l.b16 %v833
        %v880 = vunpack.c.h.b16 %v833
        %v881 = vunpack.c.l.b16 %v834
        %v882 = vunpack.c.h.b16 %v834
        %v883 = vpack.c.b16 %v851, %v851
        %v884 = vpack.c.b16 %v852, %v852
        %v885 = vpack.c.b16 %v853, %v853
        %v886 = vpack.c.b16 %v854, %v854
        %v887 = vpack.c.b16 %v855, %v855
        %v888 = vpack.c.b16 %v856, %v856
        %v889 = vpack.c.b16 %v857, %v857
        %v890 = vpack.c.b16 %v858, %v858
        %v891 = vpack.c.b16 %v859, %v859
        %v892 = vpack.c.b16 %v860, %v860
        %v893 = vpack.c.b16 %v861, %v861
        %v894 = vpack.c.b16 %v862, %v862
        %v895 = vpack.c.b16 %v863, %v863
        %v896 = vpack.c.b16 %v864, %v864
        %v897 = vpack.c.b16 %v865, %v865
        %v898 = vpack.c.b16 %v866, %v866
        %v899 = vpack.c.b16 %v867, %v867
        %v900 = vpack.c.b16 %v868, %v868
        %v901 = vpack.c.b16 %v869, %v869
        %v902 = vpack.c.b16 %v870, %v870
        %v903 = vpack.c.b16 %v871, %v871
        %v904 = vpack.c.b16 %v872, %v872
        %v905 = vpack.c.b16 %v873, %v873
        %v906 = vpack.c.b16 %v874, %v874
        %v907 = vpack.c.b16 %v875, %v875
        %v908 = vpack.c.b16 %v876, %v876
        %v909 = vpack.c.b16 %v877, %v877
        %v910 = vpack.c.b16 %v878, %v878
        %v911 = vpack.c.b16 %v879, %v879
        %v912 = vpack.c.b16 %v880, %v880
        %v913 = vpack.c.b16 %v881, %v881
        %v914 = vpack.c.b16 %v882, %v882
        %947 = vst [vmem:[%s257] sm:$0xf] %v883
        %948 = vst [vmem:[%s257 + $0x4] sm:$0xf] %v884
        %949 = vst [vmem:[%s257 + $0x8] sm:$0xf] %v885
        %950 = vst [vmem:[%s257 + $0xc] sm:$0xf] %v886
        %951 = vst [vmem:[%s257 + $0x10] sm:$0xf] %v887
        %952 = vst [vmem:[%s257 + $0x14] sm:$0xf] %v888
        %953 = vst [vmem:[%s257 + $0x18] sm:$0xf] %v889
        %954 = vst [vmem:[%s257 + $0x1c] sm:$0xf] %v890
        %955 = vst [vmem:[%s257 + $0x20] sm:$0xf] %v891
        %956 = vst [vmem:[%s257 + $0x24] sm:$0xf] %v892
        %957 = vst [vmem:[%s257 + $0x28] sm:$0xf] %v893
        %958 = vst [vmem:[%s257 + $0x2c] sm:$0xf] %v894
        %959 = vst [vmem:[%s257 + $0x30] sm:$0xf] %v895
        %960 = vst [vmem:[%s257 + $0x34] sm:$0xf] %v896
        %961 = vst [vmem:[%s257 + $0x38] sm:$0xf] %v897
        %962 = vst [vmem:[%s257 + $0x3c] sm:$0xf] %v898
        %963 = vst [vmem:[%s257 + $0x40] sm:$0xf] %v899
        %964 = vst [vmem:[%s257 + $0x44] sm:$0xf] %v900
        %965 = vst [vmem:[%s257 + $0x48] sm:$0xf] %v901
        %966 = vst [vmem:[%s257 + $0x4c] sm:$0xf] %v902
        %967 = vst [vmem:[%s257 + $0x50] sm:$0xf] %v903
        %968 = vst [vmem:[%s257 + $0x54] sm:$0xf] %v904
        %969 = vst [vmem:[%s257 + $0x58] sm:$0xf] %v905
        %970 = vst [vmem:[%s257 + $0x5c] sm:$0xf] %v906
        %971 = vst [vmem:[%s257 + $0x60] sm:$0xf] %v907
        %972 = vst [vmem:[%s257 + $0x64] sm:$0xf] %v908
        %973 = vst [vmem:[%s257 + $0x68] sm:$0xf] %v909
        %974 = vst [vmem:[%s257 + $0x6c] sm:$0xf] %v910
        %975 = vst [vmem:[%s257 + $0x70] sm:$0xf] %v911
        %976 = vst [vmem:[%s257 + $0x74] sm:$0xf] %v912
        %977 = vst [vmem:[%s257 + $0x78] sm:$0xf] %v913
        %978 = vst [vmem:[%s257 + $0x7c] sm:$0xf] %v914
      $region40: #{mlp_forward.3} parent=31 // pred_fallthru
        _
      %s979 = smul.u32 32, %s19
      %p980 = scmp.lt.s32.totalorder %s979, 63
      %s981 = scalar_select %p980, %s979, 63
      %p982 = scmp.lt.s32.totalorder %s20, 0
      %s983 = scalar_select %p982, %s20, 0
      %s984 = sadd.s32 %s983, %s981
      %s985 = smul.addr %s984, 4
      %s986 = scalar_lea.vmem %s3, %s985
      // Predicated region
      $region41: #{mlp_forward.3} parent=31 // pred_check
        %p987 = pneg %p135
      $region42: #{mlp_forward.3} parent=31 // pred_check_branch
        %989 = sbr.rel (%p987) target = $region44
      $region43: #{mlp_forward.3} parent=31 // pred_region
        %s990 = smul.u32 32, %s19
      $region44: #{mlp_forward.3} parent=31 // pred_fallthru
        _
    $region32: #{mlp_forward.3} parent=5 // pred_fallthru
      _
    %p991 = scmp.le.s32.totalorder 2, %s9
    // Predicated region
    $region45: #{mlp_forward.3} parent=5 // pred_check
      %p992 = pneg %p991
    $region46: #{mlp_forward.3} parent=5 // pred_check_branch
      %994 = sbr.rel (%p992) target = $region48
    $region47: #{mlp_forward.3} parent=5 // pred_region
      %s995 = ssub.s32 %s9, 2
      // Predicated region
      $region49: #{mlp_forward.3} parent=47 // pred_check
        %p996 = pneg %p141
      $region50: #{mlp_forward.3} parent=47 // pred_check_branch
        %998 = sbr.rel (%p996) target = $region52
      $region51: #{mlp_forward.3} parent=47 // pred_region
        %s999 = smul.u32 32, %s22
        %p1000 = scmp.lt.s32.totalorder %s999, 63
        %s1001 = scalar_select %p1000, %s999, 63
        %p1002 = scmp.lt.s32.totalorder %s23, 0
        %s1003 = scalar_select %p1002, %s23, 0
        %s1004 = sadd.s32 %s1003, %s1001
        %s1005 = smul.addr %s1004, 4
        %s1006 = scalar_lea.vmem %s3, %s1005
      $region52: #{mlp_forward.3} parent=47 // pred_fallthru
        _
    $region48: #{mlp_forward.3} parent=5 // pred_fallthru
      _
  $region6: #{mlp_forward.3} parent=0 // loop_footer
    %s13 = sadd.s32 1, %s9
  $region7: #{mlp_forward.3} parent=0 // loop_footer_branch
    %8 = sbr.rel target = $region3
  $region8: #{mlp_forward.3} parent=0 // loop_exit
    _

// kernel: mlp_forward.5
$region0: #{mlp_forward.5}
  #allocation0 [shape = 'u32[]', space=smem, size = 0x4, offset = 0x4, fixed_abs, tag = 'smem constant byte address 0x4 - core index']
  #allocation1 [shape = 'u32[144,128]{1,0:T(1,128)}', space=vmem, size = 0x12000, scoped, tag = 'internal scratch']
  #allocation2 [shape = 'f32[256,128]{1,0:T(8,128)}', space=vmem, size = 0x20000, scoped, tag = 'scratch operand']
  %s0 = inlined_call_operand.vmem [shape: bf16[512,128], index: 0, kind: input, shape index: {}]
  %s1 = inlined_call_operand.vmem [shape: bf16[128,128], index: 1, kind: input, shape index: {}]
  %s2 = inlined_call_operand.vmem [shape: f32[1,128], index: 2, kind: input, shape index: {}]
  %s3 = inlined_call_operand.hbm [shape: f32[512,128], index: 3, kind: output, shape index: {}]
  %s4 = sld [smem:[#allocation0]]
  $region53: #{mlp_forward.5} parent=0
    _
  %s6 = ssub.s32 1, %s4
  %s7 = scalar_select 0, %s6, %s4
  $region1: #{mlp_forward.5} parent=0
    #allocation3 [shape = 'u8[262144]{0}', space=vmem, size = 0x40000, scoped, tag = 'output window, operand 0']
    #allocation4 [shape = 's32[2]{0}', space=sflag, size = 0x8, scoped, tag = 'scoped memory for mlp_forward.5']
    %8 = vsyncpa [#allocation4], 0
    %s9 = scalar_lea.sflag [#allocation4], 1
    %10 = vsyncpa %s9, 0
    loop: start=0, step=1, limit=4
    $region2: #{mlp_forward.5} parent=1 // loop_pre_header
      _
    $region3: #{mlp_forward.5} parent=1 // loop_header
      %s12 = sphi 0, %s16
      %p13 = scmp.ge.s32.totalorder %s12, 4
      %s19 = sphi 0, %s38
      %s20 = sphi 0, %s34
      %s21 = sphi 0, %s30
      %s22 = sphi 0, %s19
      %s23 = sphi 0, %s20
      %s24 = sphi 0, %s21
      %s25 = sphi 0, %s22
      %s26 = sphi 0, %s23
      %s27 = sphi 0, %s24
      %s43 = sphi 0, %s45
      %s46 = sphi 0, %s43
      %s47 = sphi 0, %s46
      %s63 = sphi 0, %s47
      %s71 = sphi 0, %s73
      %s74 = sphi 0, %s71
      %s75 = sphi 0, %s74
      %s91 = sphi 0, %s75
      %s97 = sphi 0, %s99
      %s100 = sphi 0, %s97
      %s101 = sphi 0, %s100
      %s117 = sphi 0, %s101
      %s125 = sphi 0, %s127
      %s128 = sphi 0, %s125
      %s129 = sphi 0, %s128
      %s145 = sphi 0, %s129
    $region4: #{mlp_forward.5} parent=1 // loop_header_branch
      %15 = sbr.rel (%p13) target = $region8
    $region5: #{mlp_forward.5} parent=1 // loop_body
      %s17 = ssub.s32 %s12, 1
      %s18 = ssub.s32 %s12, 2
      %s28 = sadd.s32 1, %s21
      %p29 = scmp.ge.s32.totalorder %s28, 1
      %s30 = scalar_select %p29, 0, %s28
      %s31 = sadd.s32 1, %s20
      %s32 = scalar_select %p29, %s31, %s20
      %p33 = scmp.ge.s32.totalorder %s32, 1
      %s34 = scalar_select %p33, 0, %s32
      %s35 = sadd.s32 1, %s19
      %s36 = scalar_select %p33, %s35, %s19
      %p37 = scmp.ge.s32.totalorder %s36, 2
      %s38 = scalar_select %p37, 0, %s36
      %s39 = ssub.s32 %s19, %s38
      %s40 = ssub.s32 %s21, %s30
      %s41 = sor.u32 %s39, %s40
      %p42 = scmp.eq.s32.totalorder %s41, 0
      %s44 = sadd.s32 %s43, 1
      %s45 = scalar_select %p42, %s43, %s44
      %p48 = pneg %p42
      %p49 = scmp.eq.s32.totalorder %s12, 1
      %p50 = por %p48, %p49
      %p51 = scmp.ne.s32.totalorder %s43, %s46
      %p52 = scmp.eq.s32.totalorder %s12, 0
      %p53 = por %p51, %p52
      %p54 = scmp.ne.s32.totalorder %s43, %s46
      %p55 = scmp.eq.s32.totalorder %s17, 1
      %p56 = por %p54, %p55
      %p57 = scmp.ne.s32.totalorder %s46, %s47
      %p58 = scmp.eq.s32.totalorder %s17, 0
      %p59 = por %p57, %p58
      %p60 = scmp.ne.s32.totalorder %s46, %s47
      %p61 = scmp.eq.s32.totalorder %s18, 1
      %p62 = por %p60, %p61
      %p64 = scmp.ne.s32.totalorder %s47, %s63
      %p65 = scmp.eq.s32.totalorder %s18, 0
      %p66 = por %p64, %p65
      %s67 = ssub.s32 %s21, %s30
      %s68 = ssub.s32 %s20, %s34
      %s69 = sor.u32 %s67, %s68
      %p70 = scmp.eq.s32.totalorder %s69, 0
      %s72 = sadd.s32 %s71, 1
      %s73 = scalar_select %p70, %s71, %s72
      %p76 = pneg %p70
      %p77 = scmp.eq.s32.totalorder %s12, 1
      %p78 = por %p76, %p77
      %p79 = scmp.ne.s32.totalorder %s71, %s74
      %p80 = scmp.eq.s32.totalorder %s12, 0
      %p81 = por %p79, %p80
      %p82 = scmp.ne.s32.totalorder %s71, %s74
      %p83 = scmp.eq.s32.totalorder %s17, 1
      %p84 = por %p82, %p83
      %p85 = scmp.ne.s32.totalorder %s74, %s75
      %p86 = scmp.eq.s32.totalorder %s17, 0
      %p87 = por %p85, %p86
      %p88 = scmp.ne.s32.totalorder %s74, %s75
      %p89 = scmp.eq.s32.totalorder %s18, 1
      %p90 = por %p88, %p89
      %p92 = scmp.ne.s32.totalorder %s75, %s91
      %p93 = scmp.eq.s32.totalorder %s18, 0
      %p94 = por %p92, %p93
      %s95 = ssub.s32 %s20, %s34
      %p96 = scmp.eq.s32.totalorder %s95, 0
      %s98 = sadd.s32 %s97, 1
      %s99 = scalar_select %p96, %s97, %s98
      %p102 = pneg %p96
      %p103 = scmp.eq.s32.totalorder %s12, 1
      %p104 = por %p102, %p103
      %p105 = scmp.ne.s32.totalorder %s97, %s100
      %p106 = scmp.eq.s32.totalorder %s12, 0
      %p107 = por %p105, %p106
      %p108 = scmp.ne.s32.totalorder %s97, %s100
      %p109 = scmp.eq.s32.totalorder %s17, 1
      %p110 = por %p108, %p109
      %p111 = scmp.ne.s32.totalorder %s100, %s101
      %p112 = scmp.eq.s32.totalorder %s17, 0
      %p113 = por %p111, %p112
      %p114 = scmp.ne.s32.totalorder %s100, %s101
      %p115 = scmp.eq.s32.totalorder %s18, 1
      %p116 = por %p114, %p115
      %p118 = scmp.ne.s32.totalorder %s101, %s117
      %p119 = scmp.eq.s32.totalorder %s18, 0
      %p120 = por %p118, %p119
      %s121 = ssub.s32 %s19, %s38
      %s122 = ssub.s32 %s20, %s34
      %s123 = sor.u32 %s121, %s122
      %p124 = scmp.eq.s32.totalorder %s123, 0
      %s126 = sadd.s32 %s125, 1
      %s127 = scalar_select %p124, %s125, %s126
      %p130 = pneg %p124
      %p131 = scmp.eq.s32.totalorder %s12, 1
      %p132 = por %p130, %p131
      %p133 = scmp.ne.s32.totalorder %s125, %s128
      %p134 = scmp.eq.s32.totalorder %s12, 0
      %p135 = por %p133, %p134
      %p136 = scmp.ne.s32.totalorder %s125, %s128
      %p137 = scmp.eq.s32.totalorder %s17, 1
      %p138 = por %p136, %p137
      %p139 = scmp.ne.s32.totalorder %s128, %s129
      %p140 = scmp.eq.s32.totalorder %s17, 0
      %p141 = por %p139, %p140
      %p142 = scmp.ne.s32.totalorder %s128, %s129
      %p143 = scmp.eq.s32.totalorder %s18, 1
      %p144 = por %p142, %p143
      %p146 = scmp.ne.s32.totalorder %s129, %s145
      %p147 = scmp.eq.s32.totalorder %s18, 0
      %p148 = por %p146, %p147
      %p149 = scmp.le.s32.totalorder 1, %s12
      %p150 = scmp.lt.s32.totalorder %s12, 3
      %p151 = pnand %p149, %p150
      %p152 = pneg %p151
      // Predicated region
      $region9: #{mlp_forward.5} parent=5 // pred_check
        _
      $region10: #{mlp_forward.5} parent=5 // pred_check_branch
        %154 = sbr.rel (%p151) target = $region12
      $region11: #{mlp_forward.5} parent=5 // pred_region
        %s155 = ssub.s32 %s12, 1
        // Predicated region
        $region13: #{mlp_forward.5} parent=11 // pred_check
          %p156 = pneg %p87
        $region14: #{mlp_forward.5} parent=11 // pred_check_branch
          %158 = sbr.rel (%p156) target = $region16
        $region15: #{mlp_forward.5} parent=11 // pred_region
          %s159 = smul.u32 16, %s24
          %p160 = scmp.lt.s32.totalorder %s159, 15
          %s161 = scalar_select %p160, %s159, 15
          %p162 = scmp.lt.s32.totalorder %s23, 0
          %s163 = scalar_select %p162, %s23, 0
          %s164 = sadd.s32 %s163, %s161
          %s165 = smul.addr %s164, 4
          %s166 = scalar_lea.vmem %s1, %s165
          %s167 = smul.u32 16, %s24
        $region16: #{mlp_forward.5} parent=11 // pred_fallthru
          _
        // Predicated region
        $region17: #{mlp_forward.5} parent=11 // pred_check
          %p168 = pneg %p113
        $region18: #{mlp_forward.5} parent=11 // pred_check_branch
          %170 = sbr.rel (%p168) target = $region20
        $region19: #{mlp_forward.5} parent=11 // pred_region
          %p171 = scmp.lt.s32.totalorder %s23, 0
          %s172 = scalar_select %p171, %s23, 0
          %s173 = scalar_lea.vmem %s2, %s172
        $region20: #{mlp_forward.5} parent=11 // pred_fallthru
          _
      $region12: #{mlp_forward.5} parent=5 // pred_fallthru
        _
      %p174 = scmp.lt.s32.totalorder %s12, 2
      // Predicated region
      $region21: #{mlp_forward.5} parent=5 // pred_check
        %p175 = pneg %p174
      $region22: #{mlp_forward.5} parent=5 // pred_check_branch
        %177 = sbr.rel (%p175) target = $region24
      $region23: #{mlp_forward.5} parent=5 // pred_region
        // Predicated region
        $region25: #{mlp_forward.5} parent=23 // pred_check
          %p178 = pneg %p53
        $region26: #{mlp_forward.5} parent=23 // pred_check_branch
          %180 = sbr.rel (%p178) target = $region28
        $region27: #{mlp_forward.5} parent=23 // pred_region
          %s181 = smul.u32 32, %s19
          %p182 = scmp.lt.s32.totalorder %s181, 63
          %s183 = scalar_select %p182, %s181, 63
          %p184 = scmp.lt.s32.totalorder %s21, 0
          %s185 = scalar_select %p184, %s21, 0
          %s186 = sadd.s32 %s185, %s183
          %s187 = smul.addr %s186, 4
          %s188 = scalar_lea.vmem %s0, %s187
          %s189 = smul.u32 32, %s19
        $region28: #{mlp_forward.5} parent=23 // pred_fallthru
          _
      $region24: #{mlp_forward.5} parent=5 // pred_fallthru
        _
      %p190 = scmp.le.s32.totalorder 1, %s12
      %p191 = scmp.lt.s32.totalorder %s12, 3
      %p192 = pnand %p190, %p191
      %p193 = pneg %p192
      // Predicated region
      $region29: #{mlp_forward.5} parent=5 // pred_check
        _
      $region30: #{mlp_forward.5} parent=5 // pred_check_branch
        %195 = sbr.rel (%p192) target = $region32
      $region31: #{mlp_forward.5} parent=5 // pred_region
        %s196 = ssub.s32 %s12, 1
        %s197 = smul.u32 32, %s22
        %p198 = scmp.lt.s32.totalorder %s197, 63
        %s199 = scalar_select %p198, %s197, 63
        %p200 = scmp.lt.s32.totalorder %s24, 0
        %s201 = scalar_select %p200, %s24, 0
        %s202 = sadd.s32 %s201, %s199
        %s203 = smul.addr %s202, 4
        %s204 = scalar_lea.vmem %s0, %s203
        %p205 = pneg %p59
        %p206 = pneg %p56
        %s207 = smul.u32 16, %s24
        %p208 = scmp.lt.s32.totalorder %s207, 15
        %s209 = scalar_select %p208, %s207, 15
        %p210 = scmp.lt.s32.totalorder %s23, 0
        %s211 = scalar_select %p210, %s23, 0
        %s212 = sadd.s32 %s211, %s209
        %s213 = smul.addr %s212, 4
        %s214 = scalar_lea.vmem %s1, %s213
        %p215 = pneg %p87
        %p216 = pneg %p84
        %p217 = scmp.lt.s32.totalorder %s23, 0
        %s218 = scalar_select %p217, %s23, 0
        %s219 = scalar_lea.vmem %s2, %s218
        %p220 = pneg %p113
        %p221 = pneg %p110
        %p222 = pneg %p141
        %p223 = pneg %p138
        %s224 = sand.u32 %s128, 1
        %s225 = scalar_lea.sflag [#allocation4], %s224
        %s226 = sand.u32 %s128, 1
        %s227 = smul.addr %s226, 256
        %s228 = scalar_lea.vmem [#allocation3], %s227
        %s229 = smul.u32 32, %s22
        %p230 = scmp.lt.s32.totalorder %s229, 63
        %s231 = scalar_select %p230, %s229, 63
        %p232 = scmp.lt.s32.totalorder %s24, 0
        %s233 = scalar_select %p232, %s24, 0
        %s234 = sadd.s32 %s233, %s231
        %s235 = smul.addr %s234, 4
        %s236 = scalar_lea.vmem %s0, %s235
        %s237 = smul.u32 32, %s22
        %s238 = smul.u32 16, %s24
        %p239 = scmp.lt.s32.totalorder %s238, 15
        %s240 = scalar_select %p239, %s238, 15
        %p241 = scmp.lt.s32.totalorder %s23, 0
        %s242 = scalar_select %p241, %s23, 0
        %s243 = sadd.s32 %s242, %s240
        %s244 = smul.addr %s243, 4
        %s245 = scalar_lea.vmem %s1, %s244
        %s246 = smul.u32 16, %s24
        %p247 = scmp.lt.s32.totalorder %s23, 0
        %s248 = scalar_select %p247, %s23, 0
        %s249 = scalar_lea.vmem %s2, %s248
        %s250 = smul.u32 32, %s22
        %p252 = scmp.eq.s32.totalorder %s24, 0
        // Predicated region
        $region33: #{mlp_forward.5} parent=31 // pred_check
          %p253 = pneg %p252
        $region34: #{mlp_forward.5} parent=31 // pred_check_branch
          %255 = sbr.rel (%p253) target = $region36
        $region35: #{mlp_forward.5} parent=31 // pred_region
          %256 = vst [vmem:[#allocation2] sm:$0xff] 0.0
          %257 = vst [vmem:[#allocation2 + $0x8] sm:$0xff] 0.0
          %258 = vst [vmem:[#allocation2 + $0x10] sm:$0xff] 0.0
          %259 = vst [vmem:[#allocation2 + $0x18] sm:$0xff] 0.0
          %260 = vst [vmem:[#allocation2 + $0x20] sm:$0xff] 0.0
          %261 = vst [vmem:[#allocation2 + $0x28] sm:$0xff] 0.0
          %262 = vst [vmem:[#allocation2 + $0x30] sm:$0xff] 0.0
          %263 = vst [vmem:[#allocation2 + $0x38] sm:$0xff] 0.0
          %264 = vst [vmem:[#allocation2 + $0x40] sm:$0xff] 0.0
          %265 = vst [vmem:[#allocation2 + $0x48] sm:$0xff] 0.0
          %266 = vst [vmem:[#allocation2 + $0x50] sm:$0xff] 0.0
          %267 = vst [vmem:[#allocation2 + $0x58] sm:$0xff] 0.0
          %268 = vst [vmem:[#allocation2 + $0x60] sm:$0xff] 0.0
          %269 = vst [vmem:[#allocation2 + $0x68] sm:$0xff] 0.0
          %270 = vst [vmem:[#allocation2 + $0x70] sm:$0xff] 0.0
          %271 = vst [vmem:[#allocation2 + $0x78] sm:$0xff] 0.0
          %272 = vst [vmem:[#allocation2 + $0x80] sm:$0xff] 0.0
          %273 = vst [vmem:[#allocation2 + $0x88] sm:$0xff] 0.0
          %274 = vst [vmem:[#allocation2 + $0x90] sm:$0xff] 0.0
          %275 = vst [vmem:[#allocation2 + $0x98] sm:$0xff] 0.0
          %276 = vst [vmem:[#allocation2 + $0xa0] sm:$0xff] 0.0
          %277 = vst [vmem:[#allocation2 + $0xa8] sm:$0xff] 0.0
          %278 = vst [vmem:[#allocation2 + $0xb0] sm:$0xff] 0.0
          %279 = vst [vmem:[#allocation2 + $0xb8] sm:$0xff] 0.0
          %280 = vst [vmem:[#allocation2 + $0xc0] sm:$0xff] 0.0
          %281 = vst [vmem:[#allocation2 + $0xc8] sm:$0xff] 0.0
          %282 = vst [vmem:[#allocation2 + $0xd0] sm:$0xff] 0.0
          %283 = vst [vmem:[#allocation2 + $0xd8] sm:$0xff] 0.0
          %284 = vst [vmem:[#allocation2 + $0xe0] sm:$0xff] 0.0
          %285 = vst [vmem:[#allocation2 + $0xe8] sm:$0xff] 0.0
          %286 = vst [vmem:[#allocation2 + $0xf0] sm:$0xff] 0.0
          %287 = vst [vmem:[#allocation2 + $0xf8] sm:$0xff] 0.0
        $region36: #{mlp_forward.5} parent=31 // pred_fallthru
          _
        %v288 = vld [vmem:[#allocation2] sm:$0xff]
        %v289 = vld [vmem:[#allocation2 + $0x8] sm:$0xff]
        %v290 = vld [vmem:[#allocation2 + $0x10] sm:$0xff]
        %v291 = vld [vmem:[#allocation2 + $0x18] sm:$0xff]
        %v292 = vld [vmem:[#allocation2 + $0x20] sm:$0xff]
        %v293 = vld [vmem:[#allocation2 + $0x28] sm:$0xff]
        %v294 = vld [vmem:[#allocation2 + $0x30] sm:$0xff]
        %v295 = vld [vmem:[#allocation2 + $0x38] sm:$0xff]
        %v296 = vld [vmem:[#allocation2 + $0x40] sm:$0xff]
        %v297 = vld [vmem:[#allocation2 + $0x48] sm:$0xff]
        %v298 = vld [vmem:[#allocation2 + $0x50] sm:$0xff]
        %v299 = vld [vmem:[#allocation2 + $0x58] sm:$0xff]
        %v300 = vld [vmem:[#allocation2 + $0x60] sm:$0xff]
        %v301 = vld [vmem:[#allocation2 + $0x68] sm:$0xff]
        %v302 = vld [vmem:[#allocation2 + $0x70] sm:$0xff]
        %v303 = vld [vmem:[#allocation2 + $0x78] sm:$0xff]
        %v304 = vld [vmem:[#allocation2 + $0x80] sm:$0xff]
        %v305 = vld [vmem:[#allocation2 + $0x88] sm:$0xff]
        %v306 = vld [vmem:[#allocation2 + $0x90] sm:$0xff]
        %v307 = vld [vmem:[#allocation2 + $0x98] sm:$0xff]
        %v308 = vld [vmem:[#allocation2 + $0xa0] sm:$0xff]
        %v309 = vld [vmem:[#allocation2 + $0xa8] sm:$0xff]
        %v310 = vld [vmem:[#allocation2 + $0xb0] sm:$0xff]
        %v311 = vld [vmem:[#allocation2 + $0xb8] sm:$0xff]
        %v312 = vld [vmem:[#allocation2 + $0xc0] sm:$0xff]
        %v313 = vld [vmem:[#allocation2 + $0xc8] sm:$0xff]
        %v314 = vld [vmem:[#allocation2 + $0xd0] sm:$0xff]
        %v315 = vld [vmem:[#allocation2 + $0xd8] sm:$0xff]
        %v316 = vld [vmem:[#allocation2 + $0xe0] sm:$0xff]
        %v317 = vld [vmem:[#allocation2 + $0xe8] sm:$0xff]
        %v318 = vld [vmem:[#allocation2 + $0xf0] sm:$0xff]
        %v319 = vld [vmem:[#allocation2 + $0xf8] sm:$0xff]
        %v320 = vld [vmem:[%s236] sm:$0xf]
        %v321 = vld [vmem:[%s236 + $0x4] sm:$0xf]
        %v322 = vld [vmem:[%s236 + $0x8] sm:$0xf]
        %v323 = vld [vmem:[%s236 + $0xc] sm:$0xf]
        %v324 = vld [vmem:[%s236 + $0x10] sm:$0xf]
        %v325 = vld [vmem:[%s236 + $0x14] sm:$0xf]
        %v326 = vld [vmem:[%s236 + $0x18] sm:$0xf]
        %v327 = vld [vmem:[%s236 + $0x1c] sm:$0xf]
        %v328 = vld [vmem:[%s236 + $0x20] sm:$0xf]
        %v329 = vld [vmem:[%s236 + $0x24] sm:$0xf]
        %v330 = vld [vmem:[%s236 + $0x28] sm:$0xf]
        %v331 = vld [vmem:[%s236 + $0x2c] sm:$0xf]
        %v332 = vld [vmem:[%s236 + $0x30] sm:$0xf]
        %v333 = vld [vmem:[%s236 + $0x34] sm:$0xf]
        %v334 = vld [vmem:[%s236 + $0x38] sm:$0xf]
        %v335 = vld [vmem:[%s236 + $0x3c] sm:$0xf]
        %v336 = vld [vmem:[%s236 + $0x40] sm:$0xf]
        %v337 = vld [vmem:[%s236 + $0x44] sm:$0xf]
        %v338 = vld [vmem:[%s236 + $0x48] sm:$0xf]
        %v339 = vld [vmem:[%s236 + $0x4c] sm:$0xf]
        %v340 = vld [vmem:[%s236 + $0x50] sm:$0xf]
        %v341 = vld [vmem:[%s236 + $0x54] sm:$0xf]
        %v342 = vld [vmem:[%s236 + $0x58] sm:$0xf]
        %v343 = vld [vmem:[%s236 + $0x5c] sm:$0xf]
        %v344 = vld [vmem:[%s236 + $0x60] sm:$0xf]
        %v345 = vld [vmem:[%s236 + $0x64] sm:$0xf]
        %v346 = vld [vmem:[%s236 + $0x68] sm:$0xf]
        %v347 = vld [vmem:[%s236 + $0x6c] sm:$0xf]
        %v348 = vld [vmem:[%s236 + $0x70] sm:$0xf]
        %v349 = vld [vmem:[%s236 + $0x74] sm:$0xf]
        %v350 = vld [vmem:[%s236 + $0x78] sm:$0xf]
        %v351 = vld [vmem:[%s236 + $0x7c] sm:$0xf]
        %v352 = vld [vmem:[%s245] sm:$0xf]
        %v353 = vld [vmem:[%s245 + $0x4] sm:$0xf]
        %v354 = vld [vmem:[%s245 + $0x8] sm:$0xf]
        %v355 = vld [vmem:[%s245 + $0xc] sm:$0xf]
        %v356 = vld [vmem:[%s245 + $0x10] sm:$0xf]
        %v357 = vld [vmem:[%s245 + $0x14] sm:$0xf]
        %v358 = vld [vmem:[%s245 + $0x18] sm:$0xf]
        %v359 = vld [vmem:[%s245 + $0x1c] sm:$0xf]
        %v360 = vld [vmem:[%s245 + $0x20] sm:$0xf]
        %v361 = vld [vmem:[%s245 + $0x24] sm:$0xf]
        %v362 = vld [vmem:[%s245 + $0x28] sm:$0xf]
        %v363 = vld [vmem:[%s245 + $0x2c] sm:$0xf]
        %v364 = vld [vmem:[%s245 + $0x30] sm:$0xf]
        %v365 = vld [vmem:[%s245 + $0x34] sm:$0xf]
        %v366 = vld [vmem:[%s245 + $0x38] sm:$0xf]
        %v367 = vld [vmem:[%s245 + $0x3c] sm:$0xf]
        %v400 = vunpack.c.l.b16 %v320
        %v401 = vunpack.c.l.b16 %v321
        %v402 = vunpack.c.l.b16 %v322
        %v403 = vunpack.c.l.b16 %v323
        %v404 = vunpack.c.l.b16 %v324
        %v405 = vunpack.c.l.b16 %v325
        %v406 = vunpack.c.l.b16 %v326
        %v407 = vunpack.c.l.b16 %v327
        %v408 = vunpack.c.l.b16 %v328
        %v409 = vunpack.c.l.b16 %v329
        %v410 = vunpack.c.l.b16 %v330
        %v411 = vunpack.c.l.b16 %v331
        %v412 = vunpack.c.l.b16 %v332
        %v413 = vunpack.c.l.b16 %v333
        %v414 = vunpack.c.l.b16 %v334
        %v415 = vunpack.c.l.b16 %v335
        %v416 = vunpack.c.l.b16 %v336
        %v417 = vunpack.c.l.b16 %v337
        %v418 = vunpack.c.l.b16 %v338
        %v419 = vunpack.c.l.b16 %v339
        %v420 = vunpack.c.l.b16 %v340
        %v421 = vunpack.c.l.b16 %v341
        %v422 = vunpack.c.l.b16 %v342
        %v423 = vunpack.c.l.b16 %v343
        %v424 = vunpack.c.l.b16 %v344
        %v425 = vunpack.c.l.b16 %v345
        %v426 = vunpack.c.l.b16 %v346
        %v427 = vunpack.c.l.b16 %v347
        %v428 = vunpack.c.l.b16 %v348
        %v429 = vunpack.c.l.b16 %v349
        %v430 = vunpack.c.l.b16 %v350
        %v431 = vunpack.c.l.b16 %v351
        %v432 = vpack.c.b16 %v401, %v400
        %v433 = vpack.c.b16 %v403, %v402
        %v434 = vpack.c.b16 %v405, %v404
        %v435 = vpack.c.b16 %v407, %v406
        %v436 = vpack.c.b16 %v409, %v408
        %v437 = vpack.c.b16 %v411, %v410
        %v438 = vpack.c.b16 %v413, %v412
        %v439 = vpack.c.b16 %v415, %v414
        %v440 = vpack.c.b16 %v417, %v416
        %v441 = vpack.c.b16 %v419, %v418
        %v442 = vpack.c.b16 %v421, %v420
        %v443 = vpack.c.b16 %v423, %v422
        %v444 = vpack.c.b16 %v425, %v424
        %v445 = vpack.c.b16 %v427, %v426
        %v446 = vpack.c.b16 %v429, %v428
        %v447 = vpack.c.b16 %v431, %v430
        %v480 = vunpack.c.l.b16 %v352
        %v481 = vunpack.c.l.b16 %v353
        %v482 = vunpack.c.l.b16 %v354
        %v483 = vunpack.c.l.b16 %v355
        %v484 = vunpack.c.l.b16 %v356
        %v485 = vunpack.c.l.b16 %v357
        %v486 = vunpack.c.l.b16 %v358
        %v487 = vunpack.c.l.b16 %v359
        %v488 = vunpack.c.l.b16 %v360
        %v489 = vunpack.c.l.b16 %v361
        %v490 = vunpack.c.l.b16 %v362
        %v491 = vunpack.c.l.b16 %v363
        %v492 = vunpack.c.l.b16 %v364
        %v493 = vunpack.c.l.b16 %v365
        %v494 = vunpack.c.l.b16 %v366
        %v495 = vunpack.c.l.b16 %v367
        %v496 = vpack.c.b16 %v481, %v480
        %v497 = vpack.c.b16 %v483, %v482
        %v498 = vpack.c.b16 %v485, %v484
        %v499 = vpack.c.b16 %v487, %v486
        %v500 = vpack.c.b16 %v489, %v488
        %v501 = vpack.c.b16 %v491, %v490
        %v502 = vpack.c.b16 %v493, %v492
        %v503 = vpack.c.b16 %v495, %v494
        %512 = vmatprep.subr.bf16.mxu0 0
        %513 = vmatpush1.bf16.msra.mxu0 %v503
        %514 = vmatprep.subr.bf16.mxu0 0
        %515 = vmatpush1.bf16.msra.mxu0 %v502
        %516 = vmatprep.subr.bf16.mxu0 0
        %517 = vmatpush1.bf16.msra.mxu0 %v501
        %518 = vmatprep.subr.bf16.mxu0 0
        %519 = vmatpush1.bf16.msra.mxu0 %v500
        %520 = vmatprep.subr.bf16.mxu0 0
        %521 = vmatpush1.bf16.msra.mxu0 %v499
        %522 = vmatprep.subr.bf16.mxu0 0
        %523 = vmatpush1.bf16.msra.mxu0 %v498
        %524 = vmatprep.subr.bf16.mxu0 0
        %525 = vmatpush1.bf16.msra.mxu0 %v497
        %526 = vmatprep.subr.bf16.mxu0 0
        %527 = vmatpush1.bf16.msra.mxu0 %v496
        %528 = vmatprep.subr.bf16.mxu0 0
        %529 = vmatpush2.bf16.msra.mxu0 0
        %530 = vmatprep.subr.bf16.mxu0 0
        %531 = vmatpush2.bf16.msra.mxu0 0
        %532 = vmatprep.subr.bf16.mxu0 0
        %533 = vmatpush2.bf16.msra.mxu0 0
        %534 = vmatprep.subr.bf16.mxu0 0
        %535 = vmatpush2.bf16.msra.mxu0 0
        %536 = vmatprep.subr.bf16.mxu0 0
        %537 = vmatpush2.bf16.msra.mxu0 0
        %538 = vmatprep.subr.bf16.mxu0 0
        %539 = vmatpush2.bf16.msra.mxu0 0
        %540 = vmatprep.subr.bf16.mxu0 0
        %541 = vmatpush2.bf16.msra.mxu0 0
        %542 = vmatprep.subr.bf16.mxu0 0
        %543 = vmatpush2.bf16.msra.mxu0 0
        %544 = vmatprep.mubr.bf16.mxu0 0
        %545 = vmatmul.mubr.bf16.gmra.mxu0 %v432
        %v546 = vpop.f32.mrf.mxu0
        %v547 = vadd.f32 0.0, %v546
        %v548 = vpop.f32.mrf.mxu0
        %v549 = vpop.f32.mrf.mxu0
        %v550 = vadd.f32 0.0, %v549
        %v551 = vpop.f32.mrf.mxu0
        %552 = vmatprep.mubr.bf16.mxu0 0
        %553 = vmatmul.mubr.bf16.gmra.mxu0 %v433
        %v554 = vpop.f32.mrf.mxu0
        %v555 = vadd.f32 0.0, %v554
        %v556 = vpop.f32.mrf.mxu0
        %v557 = vpop.f32.mrf.mxu0
        %v558 = vadd.f32 0.0, %v557
        %v559 = vpop.f32.mrf.mxu0
        %560 = vmatprep.mubr.bf16.mxu0 0
        %561 = vmatmul.mubr.bf16.gmra.mxu0 %v434
        %v562 = vpop.f32.mrf.mxu0
        %v563 = vadd.f32 0.0, %v562
        %v564 = vpop.f32.mrf.mxu0
        %v565 = vpop.f32.mrf.mxu0
        %v566 = vadd.f32 0.0, %v565
        %v567 = vpop.f32.mrf.mxu0
        %568 = vmatprep.mubr.bf16.mxu0 0
        %569 = vmatmul.mubr.bf16.gmra.mxu0 %v435
        %v570 = vpop.f32.mrf.mxu0
        %v571 = vadd.f32 0.0, %v570
        %v572 = vpop.f32.mrf.mxu0
        %v573 = vpop.f32.mrf.mxu0
        %v574 = vadd.f32 0.0, %v573
        %v575 = vpop.f32.mrf.mxu0
        %576 = vmatprep.mubr.bf16.mxu0 0
        %577 = vmatmul.mubr.bf16.gmra.mxu0 %v436
        %v578 = vpop.f32.mrf.mxu0
        %v579 = vadd.f32 0.0, %v578
        %v580 = vpop.f32.mrf.mxu0
        %v581 = vpop.f32.mrf.mxu0
        %v582 = vadd.f32 0.0, %v581
        %v583 = vpop.f32.mrf.mxu0
        %584 = vmatprep.mubr.bf16.mxu0 0
        %585 = vmatmul.mubr.bf16.gmra.mxu0 %v437
        %v586 = vpop.f32.mrf.mxu0
        %v587 = vadd.f32 0.0, %v586
        %v588 = vpop.f32.mrf.mxu0
        %v589 = vpop.f32.mrf.mxu0
        %v590 = vadd.f32 0.0, %v589
        %v591 = vpop.f32.mrf.mxu0
        %592 = vmatprep.mubr.bf16.mxu0 0
        %593 = vmatmul.mubr.bf16.gmra.mxu0 %v438
        %v594 = vpop.f32.mrf.mxu0
        %v595 = vadd.f32 0.0, %v594
        %v596 = vpop.f32.mrf.mxu0
        %v597 = vpop.f32.mrf.mxu0
        %v598 = vadd.f32 0.0, %v597
        %v599 = vpop.f32.mrf.mxu0
        %600 = vmatprep.mubr.bf16.mxu0 0
        %601 = vmatmul.mubr.bf16.gmra.mxu0 %v439
        %v602 = vpop.f32.mrf.mxu0
        %v603 = vadd.f32 0.0, %v602
        %v604 = vpop.f32.mrf.mxu0
        %v605 = vpop.f32.mrf.mxu0
        %v606 = vadd.f32 0.0, %v605
        %v607 = vpop.f32.mrf.mxu0
        %608 = vmatprep.mubr.bf16.mxu0 0
        %609 = vmatmul.mubr.bf16.gmra.mxu0 %v440
        %v610 = vpop.f32.mrf.mxu0
        %v611 = vadd.f32 0.0, %v610
        %v612 = vpop.f32.mrf.mxu0
        %v613 = vpop.f32.mrf.mxu0
        %v614 = vadd.f32 0.0, %v613
        %v615 = vpop.f32.mrf.mxu0
        %616 = vmatprep.mubr.bf16.mxu0 0
        %617 = vmatmul.mubr.bf16.gmra.mxu0 %v441
        %v618 = vpop.f32.mrf.mxu0
        %v619 = vadd.f32 0.0, %v618
        %v620 = vpop.f32.mrf.mxu0
        %v621 = vpop.f32.mrf.mxu0
        %v622 = vadd.f32 0.0, %v621
        %v623 = vpop.f32.mrf.mxu0
        %624 = vmatprep.mubr.bf16.mxu0 0
        %625 = vmatmul.mubr.bf16.gmra.mxu0 %v442
        %v626 = vpop.f32.mrf.mxu0
        %v627 = vadd.f32 0.0, %v626
        %v628 = vpop.f32.mrf.mxu0
        %v629 = vpop.f32.mrf.mxu0
        %v630 = vadd.f32 0.0, %v629
        %v631 = vpop.f32.mrf.mxu0
        %632 = vmatprep.mubr.bf16.mxu0 0
        %633 = vmatmul.mubr.bf16.gmra.mxu0 %v443
        %v634 = vpop.f32.mrf.mxu0
        %v635 = vadd.f32 0.0, %v634
        %v636 = vpop.f32.mrf.mxu0
        %v637 = vpop.f32.mrf.mxu0
        %v638 = vadd.f32 0.0, %v637
        %v639 = vpop.f32.mrf.mxu0
        %640 = vmatprep.mubr.bf16.mxu0 0
        %641 = vmatmul.mubr.bf16.gmra.mxu0 %v444
        %v642 = vpop.f32.mrf.mxu0
        %v643 = vadd.f32 0.0, %v642
        %v644 = vpop.f32.mrf.mxu0
        %v645 = vpop.f32.mrf.mxu0
        %v646 = vadd.f32 0.0, %v645
        %v647 = vpop.f32.mrf.mxu0
        %648 = vmatprep.mubr.bf16.mxu0 0
        %649 = vmatmul.mubr.bf16.gmra.mxu0 %v445
        %v650 = vpop.f32.mrf.mxu0
        %v651 = vadd.f32 0.0, %v650
        %v652 = vpop.f32.mrf.mxu0
        %v653 = vpop.f32.mrf.mxu0
        %v654 = vadd.f32 0.0, %v653
        %v655 = vpop.f32.mrf.mxu0
        %656 = vmatprep.mubr.bf16.mxu0 0
        %657 = vmatmul.mubr.bf16.gmra.mxu0 %v446
        %v658 = vpop.f32.mrf.mxu0
        %v659 = vadd.f32 0.0, %v658
        %v660 = vpop.f32.mrf.mxu0
        %v661 = vpop.f32.mrf.mxu0
        %v662 = vadd.f32 0.0, %v661
        %v663 = vpop.f32.mrf.mxu0
        %664 = vmatprep.mubr.bf16.mxu0 0
        %665 = vmatmul.mubr.bf16.gmra.mxu0 %v447
        %v666 = vpop.f32.mrf.mxu0
        %v667 = vadd.f32 0.0, %v666
        %v668 = vpop.f32.mrf.mxu0
        %v669 = vpop.f32.mrf.mxu0
        %v670 = vadd.f32 0.0, %v669
        %v671 = vpop.f32.mrf.mxu0
        %672 = vdwg.mxu0
        %v673 = vadd.f32 %v288, %v547
        %v674 = vadd.f32 %v289, %v550
        %v675 = vadd.f32 %v290, %v555
        %v676 = vadd.f32 %v291, %v558
        %v677 = vadd.f32 %v292, %v563
        %v678 = vadd.f32 %v293, %v566
        %v679 = vadd.f32 %v294, %v571
        %v680 = vadd.f32 %v295, %v574
        %v681 = vadd.f32 %v296, %v579
        %v682 = vadd.f32 %v297, %v582
        %v683 = vadd.f32 %v298, %v587
        %v684 = vadd.f32 %v299, %v590
        %v685 = vadd.f32 %v300, %v595
        %v686 = vadd.f32 %v301, %v598
        %v687 = vadd.f32 %v302, %v603
        %v688 = vadd.f32 %v303, %v606
        %v689 = vadd.f32 %v304, %v611
        %v690 = vadd.f32 %v305, %v614
        %v691 = vadd.f32 %v306, %v619
        %v692 = vadd.f32 %v307, %v622
        %v693 = vadd.f32 %v308, %v627
        %v694 = vadd.f32 %v309, %v630
        %v695 = vadd.f32 %v310, %v635
        %v696 = vadd.f32 %v311, %v638
        %v697 = vadd.f32 %v312, %v643
        %v698 = vadd.f32 %v313, %v646
        %v699 = vadd.f32 %v314, %v651
        %v700 = vadd.f32 %v315, %v654
        %v701 = vadd.f32 %v316, %v659
        %v702 = vadd.f32 %v317, %v662
        %v703 = vadd.f32 %v318, %v667
        %v704 = vadd.f32 %v319, %v670
        %705 = vst [vmem:[#allocation2] sm:$0xff] %v673
        %706 = vst [vmem:[#allocation2 + $0x8] sm:$0xff] %v674
        %707 = vst [vmem:[#allocation2 + $0x10] sm:$0xff] %v675
        %708 = vst [vmem:[#allocation2 + $0x18] sm:$0xff] %v676
        %709 = vst [vmem:[#allocation2 + $0x20] sm:$0xff] %v677
        %710 = vst [vmem:[#allocation2 + $0x28] sm:$0xff] %v678
        %711 = vst [vmem:[#allocation2 + $0x30] sm:$0xff] %v679
        %712 = vst [vmem:[#allocation2 + $0x38] sm:$0xff] %v680
        %713 = vst [vmem:[#allocation2 + $0x40] sm:$0xff] %v681
        %714 = vst [vmem:[#allocation2 + $0x48] sm:$0xff] %v682
        %715 = vst [vmem:[#allocation2 + $0x50] sm:$0xff] %v683
        %716 = vst [vmem:[#allocation2 + $0x58] sm:$0xff] %v684
        %717 = vst [vmem:[#allocation2 + $0x60] sm:$0xff] %v685
        %718 = vst [vmem:[#allocation2 + $0x68] sm:$0xff] %v686
        %719 = vst [vmem:[#allocation2 + $0x70] sm:$0xff] %v687
        %720 = vst [vmem:[#allocation2 + $0x78] sm:$0xff] %v688
        %721 = vst [vmem:[#allocation2 + $0x80] sm:$0xff] %v689
        %722 = vst [vmem:[#allocation2 + $0x88] sm:$0xff] %v690
        %723 = vst [vmem:[#allocation2 + $0x90] sm:$0xff] %v691
        %724 = vst [vmem:[#allocation2 + $0x98] sm:$0xff] %v692
        %725 = vst [vmem:[#allocation2 + $0xa0] sm:$0xff] %v693
        %726 = vst [vmem:[#allocation2 + $0xa8] sm:$0xff] %v694
        %727 = vst [vmem:[#allocation2 + $0xb0] sm:$0xff] %v695
        %728 = vst [vmem:[#allocation2 + $0xb8] sm:$0xff] %v696
        %729 = vst [vmem:[#allocation2 + $0xc0] sm:$0xff] %v697
        %730 = vst [vmem:[#allocation2 + $0xc8] sm:$0xff] %v698
        %731 = vst [vmem:[#allocation2 + $0xd0] sm:$0xff] %v699
        %732 = vst [vmem:[#allocation2 + $0xd8] sm:$0xff] %v700
        %733 = vst [vmem:[#allocation2 + $0xe0] sm:$0xff] %v701
        %734 = vst [vmem:[#allocation2 + $0xe8] sm:$0xff] %v702
        %735 = vst [vmem:[#allocation2 + $0xf0] sm:$0xff] %v703
        %736 = vst [vmem:[#allocation2 + $0xf8] sm:$0xff] %v704
        // Predicated region
        $region37: #{mlp_forward.5} parent=31 // pred_check
          %p737 = pneg %p252
        $region38: #{mlp_forward.5} parent=31 // pred_check_branch
          %739 = sbr.rel (%p737) target = $region40
        $region39: #{mlp_forward.5} parent=31 // pred_region
          %v740 = vld [vmem:[#allocation2] sm:$0xff]
          %v741 = vld [vmem:[#allocation2 + $0x8] sm:$0xff]
          %v742 = vld [vmem:[#allocation2 + $0x10] sm:$0xff]
          %v743 = vld [vmem:[#allocation2 + $0x18] sm:$0xff]
          %v744 = vld [vmem:[#allocation2 + $0x20] sm:$0xff]
          %v745 = vld [vmem:[#allocation2 + $0x28] sm:$0xff]
          %v746 = vld [vmem:[#allocation2 + $0x30] sm:$0xff]
          %v747 = vld [vmem:[#allocation2 + $0x38] sm:$0xff]
          %v748 = vld [vmem:[#allocation2 + $0x40] sm:$0xff]
          %v749 = vld [vmem:[#allocation2 + $0x48] sm:$0xff]
          %v750 = vld [vmem:[#allocation2 + $0x50] sm:$0xff]
          %v751 = vld [vmem:[#allocation2 + $0x58] sm:$0xff]
          %v752 = vld [vmem:[#allocation2 + $0x60] sm:$0xff]
          %v753 = vld [vmem:[#allocation2 + $0x68] sm:$0xff]
          %v754 = vld [vmem:[#allocation2 + $0x70] sm:$0xff]
          %v755 = vld [vmem:[#allocation2 + $0x78] sm:$0xff]
          %v756 = vld [vmem:[#allocation2 + $0x80] sm:$0xff]
          %v757 = vld [vmem:[#allocation2 + $0x88] sm:$0xff]
          %v758 = vld [vmem:[#allocation2 + $0x90] sm:$0xff]
          %v759 = vld [vmem:[#allocation2 + $0x98] sm:$0xff]
          %v760 = vld [vmem:[#allocation2 + $0xa0] sm:$0xff]
          %v761 = vld [vmem:[#allocation2 + $0xa8] sm:$0xff]
          %v762 = vld [vmem:[#allocation2 + $0xb0] sm:$0xff]
          %v763 = vld [vmem:[#allocation2 + $0xb8] sm:$0xff]
          %v764 = vld [vmem:[#allocation2 + $0xc0] sm:$0xff]
          %v765 = vld [vmem:[#allocation2 + $0xc8] sm:$0xff]
          %v766 = vld [vmem:[#allocation2 + $0xd0] sm:$0xff]
          %v767 = vld [vmem:[#allocation2 + $0xd8] sm:$0xff]
          %v768 = vld [vmem:[#allocation2 + $0xe0] sm:$0xff]
          %v769 = vld [vmem:[#allocation2 + $0xe8] sm:$0xff]
          %v770 = vld [vmem:[#allocation2 + $0xf0] sm:$0xff]
          %v771 = vld [vmem:[#allocation2 + $0xf8] sm:$0xff]
          %v772 = vld [vmem:[%s249] sm:$0x1]
          %v774 = vlaneseq
          %v775 = vshrl.u32 %v774, 7
          %v776 = vsub.s32 0, %v775
          %v777 = vrot.slane %v772, %v776
          %v779 = vadd.f32 %v740, %v777
          %v780 = vadd.f32 %v741, %v777
          %v781 = vadd.f32 %v742, %v777
          %v782 = vadd.f32 %v743, %v777
          %v783 = vadd.f32 %v744, %v777
          %v784 = vadd.f32 %v745, %v777
          %v785 = vadd.f32 %v746, %v777
          %v786 = vadd.f32 %v747, %v777
          %v787 = vadd.f32 %v748, %v777
          %v788 = vadd.f32 %v749, %v777
          %v789 = vadd.f32 %v750, %v777
          %v790 = vadd.f32 %v751, %v777
          %v791 = vadd.f32 %v752, %v777
          %v792 = vadd.f32 %v753, %v777
          %v793 = vadd.f32 %v754, %v777
          %v794 = vadd.f32 %v755, %v777
          %v795 = vadd.f32 %v756, %v777
          %v796 = vadd.f32 %v757, %v777
          %v797 = vadd.f32 %v758, %v777
          %v798 = vadd.f32 %v759, %v777
          %v799 = vadd.f32 %v760, %v777
          %v800 = vadd.f32 %v761, %v777
          %v801 = vadd.f32 %v762, %v777
          %v802 = vadd.f32 %v763, %v777
          %v803 = vadd.f32 %v764, %v777
          %v804 = vadd.f32 %v765, %v777
          %v805 = vadd.f32 %v766, %v777
          %v806 = vadd.f32 %v767, %v777
          %v807 = vadd.f32 %v768, %v777
          %v808 = vadd.f32 %v769, %v777
          %v809 = vadd.f32 %v770, %v777
          %v810 = vadd.f32 %v771, %v777
          %811 = vst [vmem:[%s228] sm:$0xff] %v779
          %812 = vst [vmem:[%s228 + $0x8] sm:$0xff] %v780
          %813 = vst [vmem:[%s228 + $0x10] sm:$0xff] %v781
          %814 = vst [vmem:[%s228 + $0x18] sm:$0xff] %v782
          %815 = vst [vmem:[%s228 + $0x20] sm:$0xff] %v783
          %816 = vst [vmem:[%s228 + $0x28] sm:$0xff] %v784
          %817 = vst [vmem:[%s228 + $0x30] sm:$0xff] %v785
          %818 = vst [vmem:[%s228 + $0x38] sm:$0xff] %v786
          %819 = vst [vmem:[%s228 + $0x40] sm:$0xff] %v787
          %820 = vst [vmem:[%s228 + $0x48] sm:$0xff] %v788
          %821 = vst [vmem:[%s228 + $0x50] sm:$0xff] %v789
          %822 = vst [vmem:[%s228 + $0x58] sm:$0xff] %v790
          %823 = vst [vmem:[%s228 + $0x60] sm:$0xff] %v791
          %824 = vst [vmem:[%s228 + $0x68] sm:$0xff] %v792
          %825 = vst [vmem:[%s228 + $0x70] sm:$0xff] %v793
          %826 = vst [vmem:[%s228 + $0x78] sm:$0xff] %v794
          %827 = vst [vmem:[%s228 + $0x80] sm:$0xff] %v795
          %828 = vst [vmem:[%s228 + $0x88] sm:$0xff] %v796
          %829 = vst [vmem:[%s228 + $0x90] sm:$0xff] %v797
          %830 = vst [vmem:[%s228 + $0x98] sm:$0xff] %v798
          %831 = vst [vmem:[%s228 + $0xa0] sm:$0xff] %v799
          %832 = vst [vmem:[%s228 + $0xa8] sm:$0xff] %v800
          %833 = vst [vmem:[%s228 + $0xb0] sm:$0xff] %v801
          %834 = vst [vmem:[%s228 + $0xb8] sm:$0xff] %v802
          %835 = vst [vmem:[%s228 + $0xc0] sm:$0xff] %v803
          %836 = vst [vmem:[%s228 + $0xc8] sm:$0xff] %v804
          %837 = vst [vmem:[%s228 + $0xd0] sm:$0xff] %v805
          %838 = vst [vmem:[%s228 + $0xd8] sm:$0xff] %v806
          %839 = vst [vmem:[%s228 + $0xe0] sm:$0xff] %v807
          %840 = vst [vmem:[%s228 + $0xe8] sm:$0xff] %v808
          %841 = vst [vmem:[%s228 + $0xf0] sm:$0xff] %v809
          %842 = vst [vmem:[%s228 + $0xf8] sm:$0xff] %v810
        $region40: #{mlp_forward.5} parent=31 // pred_fallthru
          _
        %s843 = sand.u32 %s128, 1
        %s844 = scalar_lea.sflag [#allocation4], %s843
        %s845 = sand.u32 %s128, 1
        %s846 = smul.addr %s845, 256
        %s847 = scalar_lea.vmem [#allocation3], %s846
        // Predicated region
        $region41: #{mlp_forward.5} parent=31 // pred_check
          %p848 = pneg %p138
        $region42: #{mlp_forward.5} parent=31 // pred_check_branch
          %850 = sbr.rel (%p848) target = $region44
        $region43: #{mlp_forward.5} parent=31 // pred_region
          %s851 = smul.u32 32, %s22
          %s853 = ssub.s32 4096, 4096
          %854 = vsyncadd %s844, %s853
          %s855 = sadd.s32 %s23, %s851
          %s856 = smul.addr %s855, 128
          %s857 = scalar_lea.hbm %s3, %s856
          %s858 = sshll.u32 %s847, 4
          %s859 = int_to_ptr.vmem [resolvable:$true] %s858
          %864 = dma.vmem_to_hbm [thread:$0]  %s859, 4096, %s857, %s844, 128, 128, 8
        $region44: #{mlp_forward.5} parent=31 // pred_fallthru
          _
      $region32: #{mlp_forward.5} parent=5 // pred_fallthru
        _
      %p865 = scmp.le.s32.totalorder 2, %s12
      // Predicated region
      $region45: #{mlp_forward.5} parent=5 // pred_check
        %p866 = pneg %p865
      $region46: #{mlp_forward.5} parent=5 // pred_check_branch
        %868 = sbr.rel (%p866) target = $region48
      $region47: #{mlp_forward.5} parent=5 // pred_region
        %s869 = ssub.s32 %s12, 2
        // Predicated region
        $region49: #{mlp_forward.5} parent=47 // pred_check
          %p870 = pneg %p144
        $region50: #{mlp_forward.5} parent=47 // pred_check_branch
          %872 = sbr.rel (%p870) target = $region52
        $region51: #{mlp_forward.5} parent=47 // pred_region
          %s873 = sand.u32 %s129, 1
          %s874 = scalar_lea.sflag [#allocation4], %s873
          %s875 = sand.u32 %s129, 1
          %s876 = smul.addr %s875, 256
          %s877 = scalar_lea.vmem [#allocation3], %s876
          %878 = dma.done %s874, 4096
        $region52: #{mlp_forward.5} parent=47 // pred_fallthru
          _
      $region48: #{mlp_forward.5} parent=5 // pred_fallthru
        _
    $region6: #{mlp_forward.5} parent=1 // loop_footer
      %s16 = sadd.s32 1, %s12
    $region7: #{mlp_forward.5} parent=1 // loop_footer_branch
      %11 = sbr.rel target = $region3
    $region8: #{mlp_forward.5} parent=1 // loop_exit
      _
    %879 = vsyncpa [#allocation4], 1
    %s880 = scalar_lea.sflag [#allocation4], 1
    %881 = vsyncpa %s880, 1

// kernel: mlp_forward.4
$region0: #{mlp_forward.4}
  #allocation0 [shape = 'u32[]', space=smem, size = 0x4, offset = 0x4, fixed_abs, tag = 'smem constant byte address 0x4 - core index']
  #allocation1 [shape = 'u32[144,128]{1,0:T(1,128)}', space=vmem, size = 0x12000, scoped, tag = 'internal scratch']
  %s0 = inlined_call_operand.vmem [shape: bf16[2,18,18,128], index: 0, kind: input, shape index: {}]
  %s1 = inlined_call_operand.vmem [shape: f32[3,3,128], index: 1, kind: input, shape index: {}]
  %s2 = inlined_call_operand.vmem [shape: f32[1,1,128], index: 2, kind: input, shape index: {}]
  %s3 = inlined_call_operand.vmem [shape: bf16[2,16,16,128], index: 3, kind: output, shape index: {}]
  %s4 = sld [smem:[#allocation0]]
  $region45: #{mlp_forward.4} parent=0
    _
  %s6 = ssub.s32 1, %s4
  %s7 = scalar_select 0, %s6, %s4
  loop: start=0, step=1, limit=4
  $region2: #{mlp_forward.4} parent=0 // loop_pre_header
    _
  $region3: #{mlp_forward.4} parent=0 // loop_header
    %s9 = sphi 0, %s13
    %p10 = scmp.ge.s32.totalorder %s9, 4
    %s16 = sphi 0, %s28
    %s17 = sphi 0, %s24
    %s18 = sphi 0, %s16
    %s19 = sphi 0, %s17
    %s20 = sphi 0, %s18
    %s21 = sphi 0, %s19
    %s33 = sphi 0, %s35
    %s36 = sphi 0, %s33
    %s37 = sphi 0, %s36
    %s53 = sphi 0, %s37
    %s59 = sphi 0, %s61
    %s62 = sphi 0, %s59
    %s63 = sphi 0, %s62
    %s79 = sphi 0, %s63
    %s85 = sphi 0, %s87
    %s88 = sphi 0, %s85
    %s89 = sphi 0, %s88
    %s105 = sphi 0, %s89
    %s113 = sphi 0, %s115
    %s116 = sphi 0, %s113
    %s117 = sphi 0, %s116
    %s133 = sphi 0, %s117
  $region4: #{mlp_forward.4} parent=0 // loop_header_branch
    %12 = sbr.rel (%p10) target = $region8
  $region5: #{mlp_forward.4} parent=0 // loop_body
    %s14 = ssub.s32 %s9, 1
    %s15 = ssub.s32 %s9, 2
    %s22 = sadd.s32 1, %s17
    %p23 = scmp.ge.s32.totalorder %s22, 1
    %s24 = scalar_select %p23, 0, %s22
    %s25 = sadd.s32 1, %s16
    %s26 = scalar_select %p23, %s25, %s16
    %p27 = scmp.ge.s32.totalorder %s26, 2
    %s28 = scalar_select %p27, 0, %s26
    %s29 = ssub.s32 %s16, %s28
    %s30 = ssub.s32 %s17, %s24
    %s31 = sor.u32 %s29, %s30
    %p32 = scmp.eq.s32.totalorder %s31, 0
    %s34 = sadd.s32 %s33, 1
    %s35 = scalar_select %p32, %s33, %s34
    %p38 = pneg %p32
    %p39 = scmp.eq.s32.totalorder %s9, 1
    %p40 = por %p38, %p39
    %p41 = scmp.ne.s32.totalorder %s33, %s36
    %p42 = scmp.eq.s32.totalorder %s9, 0
    %p43 = por %p41, %p42
    %p44 = scmp.ne.s32.totalorder %s33, %s36
    %p45 = scmp.eq.s32.totalorder %s14, 1
    %p46 = por %p44, %p45
    %p47 = scmp.ne.s32.totalorder %s36, %s37
    %p48 = scmp.eq.s32.totalorder %s14, 0
    %p49 = por %p47, %p48
    %p50 = scmp.ne.s32.totalorder %s36, %s37
    %p51 = scmp.eq.s32.totalorder %s15, 1
    %p52 = por %p50, %p51
    %p54 = scmp.ne.s32.totalorder %s37, %s53
    %p55 = scmp.eq.s32.totalorder %s15, 0
    %p56 = por %p54, %p55
    %s57 = ssub.s32 %s17, %s24
    %p58 = scmp.eq.s32.totalorder %s57, 0
    %s60 = sadd.s32 %s59, 1
    %s61 = scalar_select %p58, %s59, %s60
    %p64 = pneg %p58
    %p65 = scmp.eq.s32.totalorder %s9, 1
    %p66 = por %p64, %p65
    %p67 = scmp.ne.s32.totalorder %s59, %s62
    %p68 = scmp.eq.s32.totalorder %s9, 0
    %p69 = por %p67, %p68
    %p70 = scmp.ne.s32.totalorder %s59, %s62
    %p71 = scmp.eq.s32.totalorder %s14, 1
    %p72 = por %p70, %p71
    %p73 = scmp.ne.s32.totalorder %s62, %s63
    %p74 = scmp.eq.s32.totalorder %s14, 0
    %p75 = por %p73, %p74
    %p76 = scmp.ne.s32.totalorder %s62, %s63
    %p77 = scmp.eq.s32.totalorder %s15, 1
    %p78 = por %p76, %p77
    %p80 = scmp.ne.s32.totalorder %s63, %s79
    %p81 = scmp.eq.s32.totalorder %s15, 0
    %p82 = por %p80, %p81
    %s83 = ssub.s32 %s17, %s24
    %p84 = scmp.eq.s32.totalorder %s83, 0
    %s86 = sadd.s32 %s85, 1
    %s87 = scalar_select %p84, %s85, %s86
    %p90 = pneg %p84
    %p91 = scmp.eq.s32.totalorder %s9, 1
    %p92 = por %p90, %p91
    %p93 = scmp.ne.s32.totalorder %s85, %s88
    %p94 = scmp.eq.s32.totalorder %s9, 0
    %p95 = por %p93, %p94
    %p96 = scmp.ne.s32.totalorder %s85, %s88
    %p97 = scmp.eq.s32.totalorder %s14, 1
    %p98 = por %p96, %p97
    %p99 = scmp.ne.s32.totalorder %s88, %s89
    %p100 = scmp.eq.s32.totalorder %s14, 0
    %p101 = por %p99, %p100
    %p102 = scmp.ne.s32.totalorder %s88, %s89
    %p103 = scmp.eq.s32.totalorder %s15, 1
    %p104 = por %p102, %p103
    %p106 = scmp.ne.s32.totalorder %s89, %s105
    %p107 = scmp.eq.s32.totalorder %s15, 0
    %p108 = por %p106, %p107
    %s109 = ssub.s32 %s16, %s28
    %s110 = ssub.s32 %s17, %s24
    %s111 = sor.u32 %s109, %s110
    %p112 = scmp.eq.s32.totalorder %s111, 0
    %s114 = sadd.s32 %s113, 1
    %s115 = scalar_select %p112, %s113, %s114
    %p118 = pneg %p112
    %p119 = scmp.eq.s32.totalorder %s9, 1
    %p120 = por %p118, %p119
    %p121 = scmp.ne.s32.totalorder %s113, %s116
    %p122 = scmp.eq.s32.totalorder %s9, 0
    %p123 = por %p121, %p122
    %p124 = scmp.ne.s32.totalorder %s113, %s116
    %p125 = scmp.eq.s32.totalorder %s14, 1
    %p126 = por %p124, %p125
    %p127 = scmp.ne.s32.totalorder %s116, %s117
    %p128 = scmp.eq.s32.totalorder %s14, 0
    %p129 = por %p127, %p128
    %p130 = scmp.ne.s32.totalorder %s116, %s117
    %p131 = scmp.eq.s32.totalorder %s15, 1
    %p132 = por %p130, %p131
    %p134 = scmp.ne.s32.totalorder %s117, %s133
    %p135 = scmp.eq.s32.totalorder %s15, 0
    %p136 = por %p134, %p135
    %p137 = scmp.le.s32.totalorder 1, %s9
    %p138 = scmp.lt.s32.totalorder %s9, 3
    %p139 = pnand %p137, %p138
    %p140 = pneg %p139
    // Predicated region
    $region9: #{mlp_forward.4} parent=5 // pred_check
      _
    $region10: #{mlp_forward.4} parent=5 // pred_check_branch
      %142 = sbr.rel (%p139) target = $region12
    $region11: #{mlp_forward.4} parent=5 // pred_region
      %s143 = ssub.s32 %s9, 1
      // Predicated region
      $region13: #{mlp_forward.4} parent=11 // pred_check
        %p144 = pneg %p75
      $region14: #{mlp_forward.4} parent=11 // pred_check_branch
        %146 = sbr.rel (%p144) target = $region16
      $region15: #{mlp_forward.4} parent=11 // pred_region
        %p147 = scmp.lt.s32.totalorder %s19, 0
        %s148 = scalar_select %p147, %s19, 0
        %s149 = smul.addr %s148, 4
        %s150 = scalar_lea.vmem %s1, %s149
      $region16: #{mlp_forward.4} parent=11 // pred_fallthru
        _
      // Predicated region
      $region17: #{mlp_forward.4} parent=11 // pred_check
        %p151 = pneg %p101
      $region18: #{mlp_forward.4} parent=11 // pred_check_branch
        %153 = sbr.rel (%p151) target = $region20
      $region19: #{mlp_forward.4} parent=11 // pred_region
        %p154 = scmp.lt.s32.totalorder %s19, 0
        %s155 = scalar_select %p154, %s19, 0
        %s156 = scalar_lea.vmem %s2, %s155
      $region20: #{mlp_forward.4} parent=11 // pred_fallthru
        _
    $region12: #{mlp_forward.4} parent=5 // pred_fallthru
      _
    %p157 = scmp.lt.s32.totalorder %s9, 2
    // Predicated region
    $region21: #{mlp_forward.4} parent=5 // pred_check
      %p158 = pneg %p157
    $region22: #{mlp_forward.4} parent=5 // pred_check_branch
      %160 = sbr.rel (%p158) target = $region24
    $region23: #{mlp_forward.4} parent=5 // pred_region
      // Predicated region
      $region25: #{mlp_forward.4} parent=23 // pred_check
        %p161 = pneg %p43
      $region26: #{mlp_forward.4} parent=23 // pred_check_branch
        %163 = sbr.rel (%p161) target = $region28
      $region27: #{mlp_forward.4} parent=23 // pred_region
        %p164 = scmp.lt.s32.totalorder %s16, 1
        %s165 = scalar_select %p164, %s16, 1
        %p166 = scmp.lt.s32.totalorder %s17, 0
        %s167 = scalar_select %p166, %s17, 0
        %s168 = smul.addr %s165, 54
        %s169 = sadd.s32 %s167, %s168
        %s170 = smul.addr %s169, 4
        %s171 = scalar_lea.vmem %s0, %s170
      $region28: #{mlp_forward.4} parent=23 // pred_fallthru
        _
    $region24: #{mlp_forward.4} parent=5 // pred_fallthru
      _
    %p172 = scmp.le.s32.totalorder 1, %s9
    %p173 = scmp.lt.s32.totalorder %s9, 3
    %p174 = pnand %p172, %p173
    %p175 = pneg %p174
    // Predicated region
    $region29: #{mlp_forward.4} parent=5 // pred_check
      _
    $region30: #{mlp_forward.4} parent=5 // pred_check_branch
      %177 = sbr.rel (%p174) target = $region32
    $region31: #{mlp_forward.4} parent=5 // pred_region
      %s178 = ssub.s32 %s9, 1
      %p179 = scmp.lt.s32.totalorder %s18, 1
      %s180 = scalar_select %p179, %s18, 1
      %p181 = scmp.lt.s32.totalorder %s19, 0
      %s182 = scalar_select %p181, %s19, 0
      %s183 = smul.addr %s180, 54
      %s184 = sadd.s32 %s182, %s183
      %s185 = smul.addr %s184, 4
      %s186 = scalar_lea.vmem %s0, %s185
      %p187 = pneg %p49
      %p188 = pneg %p46
      %p189 = scmp.lt.s32.totalorder %s19, 0
      %s190 = scalar_select %p189, %s19, 0
      %s191 = smul.addr %s190, 4
      %s192 = scalar_lea.vmem %s1, %s191
      %p193 = pneg %p75
      %p194 = pneg %p72
      %p195 = scmp.lt.s32.totalorder %s19, 0
      %s196 = scalar_select %p195, %s19, 0
      %s197 = scalar_lea.vmem %s2, %s196
      %p198 = pneg %p101
      %p199 = pneg %p98
      %p200 = pneg %p129
      %p201 = pneg %p126
      %p202 = scmp.lt.s32.totalorder %s18, 1
      %s203 = scalar_select %p202, %s18, 1
      %p204 = scmp.lt.s32.totalorder %s19, 0
      %s205 = scalar_select %p204, %s19, 0
      %s206 = smul.addr %s203, 32
      %s207 = sadd.s32 %s205, %s206
      %s208 = smul.addr %s207, 4
      %s209 = scalar_lea.vmem %s3, %s208
      %p210 = scmp.lt.s32.totalorder %s18, 1
      %s211 = scalar_select %p210, %s18, 1
      %p212 = scmp.lt.s32.totalorder %s19, 0
      %s213 = scalar_select %p212, %s19, 0
      %s214 = smul.addr %s211, 54
      %s215 = sadd.s32 %s213, %s214
      %s216 = smul.addr %s215, 4
      %s217 = scalar_lea.vmem %s0, %s216
      %p218 = scmp.lt.s32.totalorder %s19, 0
      %s219 = scalar_select %p218, %s19, 0
      %s220 = smul.addr %s219, 4
      %s221 = scalar_lea.vmem %s1, %s220
      %p222 = scmp.lt.s32.totalorder %s19, 0
      %s223 = scalar_select %p222, %s19, 0
      %s224 = scalar_lea.vmem %s2, %s223
      %p225 = scmp.lt.s32.totalorder %s18, 1
      %s226 = scalar_select %p225, %s18, 1
      %p227 = scmp.lt.s32.totalorder %s19, 0
      %s228 = scalar_select %p227, %s19, 0
      %s229 = smul.addr %s226, 32
      %s230 = sadd.s32 %s228, %s229
      %s231 = smul.addr %s230, 4
      %s232 = scalar_lea.vmem %s3, %s231
      %v233 = vld [vmem:[%s224] sm:$0x1]
      %v235 = vlaneseq
      %v236 = vshrl.u32 %v235, 7
      %v237 = vsub.s32 0, %v236
      %v238 = vrot.slane %v233, %v237
      %v240 = vld [vmem:[%s217] sm:$0xf]
      %v241 = vld [vmem:[%s217 + $0x4] sm:$0xf]
      %v242 = vld [vmem:[%s217 + $0xc] sm:$0xf]
      %v243 = vld [vmem:[%s217 + $0x10] sm:$0xf]
      %v244 = vld [vmem:[%s217 + $0x18] sm:$0xf]
      %v245 = vld [vmem:[%s217 + $0x1c] sm:$0xf]
      %v246 = vld [vmem:[%s217 + $0x24] sm:$0xf]
      %v247 = vld [vmem:[%s217 + $0x28] sm:$0xf]
      %v248 = vld [vmem:[%s217 + $0x30] sm:$0xf]
      %v249 = vld [vmem:[%s217 + $0x34] sm:$0xf]
      %v250 = vld [vmem:[%s217 + $0x3c] sm:$0xf]
      %v251 = vld [vmem:[%s217 + $0x40] sm:$0xf]
      %v252 = vld [vmem:[%s217 + $0x48] sm:$0xf]
      %v253 = vld [vmem:[%s217 + $0x4c] sm:$0xf]
      %v254 = vld [vmem:[%s217 + $0x54] sm:$0xf]
      %v255 = vld [vmem:[%s217 + $0x58] sm:$0xf]
      %v256 = vld [vmem:[%s217 + $0x60] sm:$0xf]
      %v257 = vld [vmem:[%s217 + $0x64] sm:$0xf]
      %v258 = vld [vmem:[%s217 + $0x6c] sm:$0xf]
      %v259 = vld [vmem:[%s217 + $0x70] sm:$0xf]
      %v260 = vld [vmem:[%s217 + $0x78] sm:$0xf]
      %v261 = vld [vmem:[%s217 + $0x7c] sm:$0xf]
      %v262 = vld [vmem:[%s217 + $0x84] sm:$0xf]
      %v263 = vld [vmem:[%s217 + $0x88] sm:$0xf]
      %v264 = vld [vmem:[%s217 + $0x90] sm:$0xf]
      %v265 = vld [vmem:[%s217 + $0x94] sm:$0xf]
      %v266 = vld [vmem:[%s217 + $0x9c] sm:$0xf]
      %v267 = vld [vmem:[%s217 + $0xa0] sm:$0xf]
      %v268 = vld [vmem:[%s217 + $0xa8] sm:$0xf]
      %v269 = vld [vmem:[%s217 + $0xac] sm:$0xf]
      %v270 = vld [vmem:[%s217 + $0xb4] sm:$0xf]
      %v271 = vld [vmem:[%s217 + $0xb8] sm:$0xf]
      %v272 = vunpack.c.l.bf16 %v240
      %v273 = vunpack.c.l.bf16 %v241
      %v274 = vunpack.c.l.bf16 %v242
      %v275 = vunpack.c.l.bf16 %v243
      %v276 = vunpack.c.l.bf16 %v244
      %v277 = vunpack.c.l.bf16 %v245
      %v278 = vunpack.c.l.bf16 %v246
      %v279 = vunpack.c.l.bf16 %v247
      %v280 = vunpack.c.l.bf16 %v248
      %v281 = vunpack.c.l.bf16 %v249
      %v282 = vunpack.c.l.bf16 %v250
      %v283 = vunpack.c.l.bf16 %v251
      %v284 = vunpack.c.l.bf16 %v252
      %v285 = vunpack.c.l.bf16 %v253
      %v286 = vunpack.c.l.bf16 %v254
      %v287 = vunpack.c.l.bf16 %v255
      %v288 = vunpack.c.l.bf16 %v256
      %v289 = vunpack.c.l.bf16 %v257
      %v290 = vunpack.c.l.bf16 %v258
      %v291 = vunpack.c.l.bf16 %v259
      %v292 = vunpack.c.l.bf16 %v260
      %v293 = vunpack.c.l.bf16 %v261
      %v294 = vunpack.c.l.bf16 %v262
      %v295 = vunpack.c.l.bf16 %v263
      %v296 = vunpack.c.l.bf16 %v264
      %v297 = vunpack.c.l.bf16 %v265
      %v298 = vunpack.c.l.bf16 %v266
      %v299 = vunpack.c.l.bf16 %v267
      %v300 = vunpack.c.l.bf16 %v268
      %v301 = vunpack.c.l.bf16 %v269
      %v302 = vunpack.c.l.bf16 %v270
      %v303 = vunpack.c.l.bf16 %v271
      %v304 = vld [vmem:[%s221] sm:$0x1]
      %v305 = vlaneseq
      %v306 = vshrl.u32 %v305, 7
      %v307 = vsub.s32 0, %v306
      %v308 = vrot.slane %v304, %v307
      %v309 = vmul.f32 %v272, %v308
      %v310 = vmul.f32 %v273, %v308
      %v311 = vmul.f32 %v274, %v308
      %v312 = vmul.f32 %v275, %v308
      %v313 = vmul.f32 %v276, %v308
      %v314 = vmul.f32 %v277, %v308
      %v315 = vmul.f32 %v278, %v308
      %v316 = vmul.f32 %v279, %v308
      %v317 = vmul.f32 %v280, %v308
      %v318 = vmul.f32 %v281, %v308
      %v319 = vmul.f32 %v282, %v308
      %v320 = vmul.f32 %v283, %v308
      %v321 = vmul.f32 %v284, %v308
      %v322 = vmul.f32 %v285, %v308
      %v323 = vmul.f32 %v286, %v308
      %v324 = vmul.f32 %v287, %v308
      %v325 = vmul.f32 %v288, %v308
      %v326 = vmul.f32 %v289, %v308
      %v327 = vmul.f32 %v290, %v308
      %v328 = vmul.f32 %v291, %v308
      %v329 = vmul.f32 %v292, %v308
      %v330 = vmul.f32 %v293, %v308
      %v331 = vmul.f32 %v294, %v308
      %v332 = vmul.f32 %v295, %v308
      %v333 = vmul.f32 %v296, %v308
      %v334 = vmul.f32 %v297, %v308
      %v335 = vmul.f32 %v298, %v308
      %v336 = vmul.f32 %v299, %v308
      %v337 = vmul.f32 %v300, %v308
      %v338 = vmul.f32 %v301, %v308
      %v339 = vmul.f32 %v302, %v308
      %v340 = vmul.f32 %v303, %v308
      %v341 = vadd.f32 %v238, %v309
      %v342 = vadd.f32 %v238, %v310
      %v343 = vadd.f32 %v238, %v311
      %v344 = vadd.f32 %v238, %v312
      %v345 = vadd.f32 %v238, %v313
      %v346 = vadd.f32 %v238, %v314
      %v347 = vadd.f32 %v238, %v315
      %v348 = vadd.f32 %v238, %v316
      %v349 = vadd.f32 %v238, %v317
      %v350 = vadd.f32 %v238, %v318
      %v351 = vadd.f32 %v238, %v319
      %v352 = vadd.f32 %v238, %v320
      %v353 = vadd.f32 %v238, %v321
      %v354 = vadd.f32 %v238, %v322
      %v355 = vadd.f32 %v238, %v323
      %v356 = vadd.f32 %v238, %v324
      %v357 = vadd.f32 %v238, %v325
      %v358 = vadd.f32 %v238, %v326
      %v359 = vadd.f32 %v238, %v327
      %v360 = vadd.f32 %v238, %v328
      %v361 = vadd.f32 %v238, %v329
      %v362 = vadd.f32 %v238, %v330
      %v363 = vadd.f32 %v238, %v331
      %v364 = vadd.f32 %v238, %v332
      %v365 = vadd.f32 %v238, %v333
      %v366 = vadd.f32 %v238, %v334
      %v367 = vadd.f32 %v238, %v335
      %v368 = vadd.f32 %v238, %v336
      %v369 = vadd.f32 %v238, %v337
      %v370 = vadd.f32 %v238, %v338
      %v371 = vadd.f32 %v238, %v339
      %v372 = vadd.f32 %v238, %v340
      %v373 = vld [vmem:[%s217 + $0x8] sm:$0x1]
      %v374 = vld [vmem:[%s217 + $0x14] sm:$0x1]
      %v375 = vld [vmem:[%s217 + $0x20] sm:$0x1]
      %v376 = vld [vmem:[%s217 + $0x2c] sm:$0x1]
      %v377 = vld [vmem:[%s217 + $0x38] sm:$0x1]
      %v378 = vld [vmem:[%s217 + $0x44] sm:$0x1]
      %v379 = vld [vmem:[%s217 + $0x50] sm:$0x1]
      %v380 = vld [vmem:[%s217 + $0x5c] sm:$0x1]
      %v381 = vld [vmem:[%s217 + $0x68] sm:$0x1]
      %v382 = vld [vmem:[%s217 + $0x74] sm:$0x1]
      %v383 = vld [vmem:[%s217 + $0x80] sm:$0x1]
      %v384 = vld [vmem:[%s217 + $0x8c] sm:$0x1]
      %v385 = vld [vmem:[%s217 + $0x98] sm:$0x1]
      %v386 = vld [vmem:[%s217 + $0xa4] sm:$0x1]
      %v387 = vld [vmem:[%s217 + $0xb0] sm:$0x1]
      %v388 = vld [vmem:[%s217 + $0xbc] sm:$0x1]
      %v389 = vunpack.c.l.bf16 %v373
      %v390 = vunpack.c.l.bf16 %v374
      %v391 = vunpack.c.l.bf16 %v375
      %v392 = vunpack.c.l.bf16 %v376
      %v393 = vunpack.c.l.bf16 %v377
      %v394 = vunpack.c.l.bf16 %v378
      %v395 = vunpack.c.l.bf16 %v379
      %v396 = vunpack.c.l.bf16 %v380
      %v397 = vunpack.c.l.bf16 %v381
      %v398 = vunpack.c.l.bf16 %v382
      %v399 = vunpack.c.l.bf16 %v383
      %v400 = vunpack.c.l.bf16 %v384
      %v401 = vunpack.c.l.bf16 %v385
      %v402 = vunpack.c.l.bf16 %v386
      %v403 = vunpack.c.l.bf16 %v387
      %v404 = vunpack.c.l.bf16 %v388
      %v405 = vld [vmem:[%s221 + $0x1] sm:$0x1]
      %v406 = vlaneseq
      %v407 = vshrl.u32 %v406, 7
      %v408 = vsub.s32 0, %v407
      %v409 = vrot.slane %v405, %v408
      %v410 = vmul.f32 %v272, %v409
      %v411 = vmul.f32 %v273, %v409
      %v412 = vmul.f32 %v389, %v409
      %v413 = vmul.f32 %v274, %v409
      %v414 = vmul.f32 %v275, %v409
      %v415 = vmul.f32 %v390, %v409
      %v416 = vmul.f32 %v276, %v409
      %v417 = vmul.f32 %v277, %v409
      %v418 = vmul.f32 %v391, %v409
      %v419 = vmul.f32 %v278, %v409
      %v420 = vmul.f32 %v279, %v409
      %v421 = vmul.f32 %v392, %v409
      %v422 = vmul.f32 %v280, %v409
      %v423 = vmul.f32 %v281, %v409
      %v424 = vmul.f32 %v393, %v409
      %v425 = vmul.f32 %v282, %v409
      %v426 = vmul.f32 %v283, %v409
      %v427 = vmul.f32 %v394, %v409
      %v428 = vmul.f32 %v284, %v409
      %v429 = vmul.f32 %v285, %v409
      %v430 = vmul.f32 %v395, %v409
      %v431 = vmul.f32 %v286, %v409
      %v432 = vmul.f32 %v287, %v409
      %v433 = vmul.f32 %v396, %v409
      %v434 = vmul.f32 %v288, %v409
      %v435 = vmul.f32 %v289, %v409
      %v436 = vmul.f32 %v397, %v409
      %v437 = vmul.f32 %v290, %v409
      %v438 = vmul.f32 %v291, %v409
      %v439 = vmul.f32 %v398, %v409
      %v440 = vmul.f32 %v292, %v409
      %v441 = vmul.f32 %v293, %v409
      %v442 = vmul.f32 %v399, %v409
      %v443 = vmul.f32 %v294, %v409
      %v444 = vmul.f32 %v295, %v409
      %v445 = vmul.f32 %v400, %v409
      %v446 = vmul.f32 %v296, %v409
      %v447 = vmul.f32 %v297, %v409
      %v448 = vmul.f32 %v401, %v409
      %v449 = vmul.f32 %v298, %v409
      %v450 = vmul.f32 %v299, %v409
      %v451 = vmul.f32 %v402, %v409
      %v452 = vmul.f32 %v300, %v409
      %v453 = vmul.f32 %v301, %v409
      %v454 = vmul.f32 %v403, %v409
      %v455 = vmul.f32 %v302, %v409
      %v456 = vmul.f32 %v303, %v409
      %v457 = vmul.f32 %v404, %v409
      %vm506 = vcmask 1046528
      %v507 = vrot.slane %v410, 1
      %v508 = vrot.slane %v411, 1
      %v509 = vsel %vm506, %v507, %v508
      %v510 = vrot.slane %v412, 1
      %v511 = vsel %vm506, %v508, %v510
      %v512 = vrot.slane %v413, 1
      %v513 = vrot.slane %v414, 1
      %v514 = vsel %vm506, %v512, %v513
      %v515 = vrot.slane %v415, 1
      %v516 = vsel %vm506, %v513, %v515
      %v517 = vrot.slane %v416, 1
      %v518 = vrot.slane %v417, 1
      %v519 = vsel %vm506, %v517, %v518
      %v520 = vrot.slane %v418, 1
      %v521 = vsel %vm506, %v518, %v520
      %v522 = vrot.slane %v419, 1
      %v523 = vrot.slane %v420, 1
      %v524 = vsel %vm506, %v522, %v523
      %v525 = vrot.slane %v421, 1
      %v526 = vsel %vm506, %v523, %v525
      %v527 = vrot.slane %v422, 1
      %v528 = vrot.slane %v423, 1
      %v529 = vsel %vm506, %v527, %v528
      %v530 = vrot.slane %v424, 1
      %v531 = vsel %vm506, %v528, %v530
      %v532 = vrot.slane %v425, 1
      %v533 = vrot.slane %v426, 1
      %v534 = vsel %vm506, %v532, %v533
      %v535 = vrot.slane %v427, 1
      %v536 = vsel %vm506, %v533, %v535
      %v537 = vrot.slane %v428, 1
      %v538 = vrot.slane %v429, 1
      %v539 = vsel %vm506, %v537, %v538
      %v540 = vrot.slane %v430, 1
      %v541 = vsel %vm506, %v538, %v540
      %v542 = vrot.slane %v431, 1
      %v543 = vrot.slane %v432, 1
      %v544 = vsel %vm506, %v542, %v543
      %v545 = vrot.slane %v433, 1
      %v546 = vsel %vm506, %v543, %v545
      %v547 = vrot.slane %v434, 1
      %v548 = vrot.slane %v435, 1
      %v549 = vsel %vm506, %v547, %v548
      %v550 = vrot.slane %v436, 1
      %v551 = vsel %vm506, %v548, %v550
      %v552 = vrot.slane %v437, 1
      %v553 = vrot.slane %v438, 1
      %v554 = vsel %vm506, %v552, %v553
      %v555 = vrot.slane %v439, 1
      %v556 = vsel %vm506, %v553, %v555
      %v557 = vrot.slane %v440, 1
      %v558 = vrot.slane %v441, 1
      %v559 = vsel %vm506, %v557, %v558
      %v560 = vrot.slane %v442, 1
      %v561 = vsel %vm506, %v558, %v560
      %v562 = vrot.slane %v443, 1
      %v563 = vrot.slane %v444, 1
      %v564 = vsel %vm506, %v562, %v563
      %v565 = vrot.slane %v445, 1
      %v566 = vsel %vm506, %v563, %v565
      %v567 = vrot.slane %v446, 1
      %v568 = vrot.slane %v447, 1
      %v569 = vsel %vm506, %v567, %v568
      %v570 = vrot.slane %v448, 1
      %v571 = vsel %vm506, %v568, %v570
      %v572 = vrot.slane %v449, 1
      %v573 = vrot.slane %v450, 1
      %v574 = vsel %vm506, %v572, %v573
      %v575 = vrot.slane %v451, 1
      %v576 = vsel %vm506, %v573, %v575
      %v577 = vrot.slane %v452, 1
      %v578 = vrot.slane %v453, 1
      %v579 = vsel %vm506, %v577, %v578
      %v580 = vrot.slane %v454, 1
      %v581 = vsel %vm506, %v578, %v580
      %v582 = vrot.slane %v455, 1
      %v583 = vrot.slane %v456, 1
      %v584 = vsel %vm506, %v582, %v583
      %v585 = vrot.slane %v457, 1
      %v586 = vsel %vm506, %v583, %v585
      %v619 = vadd.f32 %v341, %v509
      %v620 = vadd.f32 %v342, %v511
      %v621 = vadd.f32 %v343, %v514
      %v622 = vadd.f32 %v344, %v516
      %v623 = vadd.f32 %v345, %v519
      %v624 = vadd.f32 %v346, %v521
      %v625 = vadd.f32 %v347, %v524
      %v626 = vadd.f32 %v348, %v526
      %v627 = vadd.f32 %v349, %v529
      %v628 = vadd.f32 %v350, %v531
      %v629 = vadd.f32 %v351, %v534
      %v630 = vadd.f32 %v352, %v536
      %v631 = vadd.f32 %v353, %v539
      %v632 = vadd.f32 %v354, %v541
      %v633 = vadd.f32 %v355, %v544
      %v634 = vadd.f32 %v356, %v546
      %v635 = vadd.f32 %v357, %v549
      %v636 = vadd.f32 %v358, %v551
      %v637 = vadd.f32 %v359, %v554
      %v638 = vadd.f32 %v360, %v556
      %v639 = vadd.f32 %v361, %v559
      %v640 = vadd.f32 %v362, %v561
      %v641 = vadd.f32 %v363, %v564
      %v642 = vadd.f32 %v364, %v566
      %v643 = vadd.f32 %v365, %v569
      %v644 = vadd.f32 %v366, %v571
      %v645 = vadd.f32 %v367, %v574
      %v646 = vadd.f32 %v368, %v576
      %v647 = vadd.f32 %v369, %v579
      %v648 = vadd.f32 %v370, %v581
      %v649 = vadd.f32 %v371, %v584
      %v650 = vadd.f32 %v372, %v586
      %v651 = vld [vmem:[%s217] sm:$0xe]
      %v652 = vld [vmem:[%s217 + $0xc] sm:$0xe]
      %v653 = vld [vmem:[%s217 + $0x18] sm:$0xe]
      %v654 = vld [vmem:[%s217 + $0x24] sm:$0xe]
      %v655 = vld [vmem:[%s217 + $0x30] sm:$0xe]
      %v656 = vld [vmem:[%s217 + $0x3c] sm:$0xe]
      %v657 = vld [vmem:[%s217 + $0x48] sm:$0xe]
      %v658 = vld [vmem:[%s217 + $0x54] sm:$0xe]
      %v659 = vld [vmem:[%s217 + $0x60] sm:$0xe]
      %v660 = vld [vmem:[%s217 + $0x6c] sm:$0xe]
      %v661 = vld [vmem:[%s217 + $0x78] sm:$0xe]
      %v662 = vld [vmem:[%s217 + $0x84] sm:$0xe]
      %v663 = vld [vmem:[%s217 + $0x90] sm:$0xe]
      %v664 = vld [vmem:[%s217 + $0x9c] sm:$0xe]
      %v665 = vld [vmem:[%s217 + $0xa8] sm:$0xe]
      %v666 = vld [vmem:[%s217 + $0xb4] sm:$0xe]
      %v667 = vunpack.c.l.bf16 %v651
      %v668 = vunpack.c.l.bf16 %v652
      %v669 = vunpack.c.l.bf16 %v653
      %v670 = vunpack.c.l.bf16 %v654
      %v671 = vunpack.c.l.bf16 %v655
      %v672 = vunpack.c.l.bf16 %v656
      %v673 = vunpack.c.l.bf16 %v657
      %v674 = vunpack.c.l.bf16 %v658
      %v675 = vunpack.c.l.bf16 %v659
      %v676 = vunpack.c.l.bf16 %v660
      %v677 = vunpack.c.l.bf16 %v661
      %v678 = vunpack.c.l.bf16 %v662
      %v679 = vunpack.c.l.bf16 %v663
      %v680 = vunpack.c.l.bf16 %v664
      %v681 = vunpack.c.l.bf16 %v665
      %v682 = vunpack.c.l.bf16 %v666
      %v683 = vld [vmem:[%s221 + $0x2] sm:$0x1]
      %v684 = vlaneseq
      %v685 = vshrl.u32 %v684, 7
      %v686 = vsub.s32 0, %v685
      %v687 = vrot.slane %v683, %v686
      %v688 = vmul.f32 %v667, %v687
      %v689 = vmul.f32 %v273, %v687
      %v690 = vmul.f32 %v389, %v687
      %v691 = vmul.f32 %v668, %v687
      %v692 = vmul.f32 %v275, %v687
      %v693 = vmul.f32 %v390, %v687
      %v694 = vmul.f32 %v669, %v687
      %v695 = vmul.f32 %v277, %v687
      %v696 = vmul.f32 %v391, %v687
      %v697 = vmul.f32 %v670, %v687
      %v698 = vmul.f32 %v279, %v687
      %v699 = vmul.f32 %v392, %v687
      %v700 = vmul.f32 %v671, %v687
      %v701 = vmul.f32 %v281, %v687
      %v702 = vmul.f32 %v393, %v687
      %v703 = vmul.f32 %v672, %v687
      %v704 = vmul.f32 %v283, %v687
      %v705 = vmul.f32 %v394, %v687
      %v706 = vmul.f32 %v673, %v687
      %v707 = vmul.f32 %v285, %v687
      %v708 = vmul.f32 %v395, %v687
      %v709 = vmul.f32 %v674, %v687
      %v710 = vmul.f32 %v287, %v687
      %v711 = vmul.f32 %v396, %v687
      %v712 = vmul.f32 %v675, %v687
      %v713 = vmul.f32 %v289, %v687
      %v714 = vmul.f32 %v397, %v687
      %v715 = vmul.f32 %v676, %v687
      %v716 = vmul.f32 %v291, %v687
      %v717 = vmul.f32 %v398, %v687
      %v718 = vmul.f32 %v677, %v687
      %v719 = vmul.f32 %v293, %v687
      %v720 = vmul.f32 %v399, %v687
      %v721 = vmul.f32 %v678, %v687
      %v722 = vmul.f32 %v295, %v687
      %v723 = vmul.f32 %v400, %v687
      %v724 = vmul.f32 %v679, %v687
      %v725 = vmul.f32 %v297, %v687
      %v726 = vmul.f32 %v401, %v687
      %v727 = vmul.f32 %v680, %v687
      %v728 = vmul.f32 %v299, %v687
      %v729 = vmul.f32 %v402, %v687
      %v730 = vmul.f32 %v681, %v687
      %v731 = vmul.f32 %v301, %v687
      %v732 = vmul.f32 %v403, %v687
      %v733 = vmul.f32 %v682, %v687
      %v734 = vmul.f32 %v303, %v687
      %v735 = vmul.f32 %v404, %v687
      %vm784 = vcmask 1045504
      %v785 = vrot.slane %v688, 2
      %v786 = vrot.slane %v689, 2
      %v787 = vsel %vm784, %v785, %v786
      %v788 = vrot.slane %v690, 2
      %v789 = vsel %vm784, %v786, %v788
      %v790 = vrot.slane %v691, 2
      %v791 = vrot.slane %v692, 2
      %v792 = vsel %vm784, %v790, %v791
      %v793 = vrot.slane %v693, 2
      %v794 = vsel %vm784, %v791, %v793
      %v795 = vrot.slane %v694, 2
      %v796 = vrot.slane %v695, 2
      %v797 = vsel %vm784, %v795, %v796
      %v798 = vrot.slane %v696, 2
      %v799 = vsel %vm784, %v796, %v798
      %v800 = vrot.slane %v697, 2
      %v801 = vrot.slane %v698, 2
      %v802 = vsel %vm784, %v800, %v801
      %v803 = vrot.slane %v699, 2
      %v804 = vsel %vm784, %v801, %v803
      %v805 = vrot.slane %v700, 2
      %v806 = vrot.slane %v701, 2
      %v807 = vsel %vm784, %v805, %v806
      %v808 = vrot.slane %v702, 2
      %v809 = vsel %vm784, %v806, %v808
      %v810 = vrot.slane %v703, 2
      %v811 = vrot.slane %v704, 2
      %v812 = vsel %vm784, %v810, %v811
      %v813 = vrot.slane %v705, 2
      %v814 = vsel %vm784, %v811, %v813
      %v815 = vrot.slane %v706, 2
      %v816 = vrot.slane %v707, 2
      %v817 = vsel %vm784, %v815, %v816
      %v818 = vrot.slane %v708, 2
      %v819 = vsel %vm784, %v816, %v818
      %v820 = vrot.slane %v709, 2
      %v821 = vrot.slane %v710, 2
      %v822 = vsel %vm784, %v820, %v821
      %v823 = vrot.slane %v711, 2
      %v824 = vsel %vm784, %v821, %v823
      %v825 = vrot.slane %v712, 2
      %v826 = vrot.slane %v713, 2
      %v827 = vsel %vm784, %v825, %v826
      %v828 = vrot.slane %v714, 2
      %v829 = vsel %vm784, %v826, %v828
      %v830 = vrot.slane %v715, 2
      %v831 = vrot.slane %v716, 2
      %v832 = vsel %vm784, %v830, %v831
      %v833 = vrot.slane %v717, 2
      %v834 = vsel %vm784, %v831, %v833
      %v835 = vrot.slane %v718, 2
      %v836 = vrot.slane %v719, 2
      %v837 = vsel %vm784, %v835, %v836
      %v838 = vrot.slane %v720, 2
      %v839 = vsel %vm784, %v836, %v838
      %v840 = vrot.slane %v721, 2
      %v841 = vrot.slane %v722, 2
      %v842 = vsel %vm784, %v840, %v841
      %v843 = vrot.slane %v723, 2
      %v844 = vsel %vm784, %v841, %v843
      %v845 = vrot.slane %v724, 2
      %v846 = vrot.slane %v725, 2
      %v847 = vsel %vm784, %v845, %v846
      %v848 = vrot.slane %v726, 2
      %v849 = vsel %vm784, %v846, %v848
      %v850 = vrot.slane %v727, 2
      %v851 = vrot.slane %v728, 2
      %v852 = vsel %vm784, %v850, %v851
      %v853 = vrot.slane %v729, 2
      %v854 = vsel %vm784, %v851, %v853
      %v855 = vrot.slane %v730, 2
      %v856 = vrot.slane %v731, 2
      %v857 = vsel %vm784, %v855, %v856
      %v858 = vrot.slane %v732, 2
      %v859 = vsel %vm784, %v856, %v858
      %v860 = vrot.slane %v733, 2
      %v861 = vrot.slane %v734, 2
      %v862 = vsel %vm784, %v860, %v861
      %v863 = vrot.slane %v735, 2
      %v864 = vsel %vm784, %v861, %v863
      %v897 = vadd.f32 %v619, %v787
      %v898 = vadd.f32 %v620, %v789
      %v899 = vadd.f32 %v621, %v792
      %v900 = vadd.f32 %v622, %v794
      %v901 = vadd.f32 %v623, %v797
      %v902 = vadd.f32 %v624, %v799
      %v903 = vadd.f32 %v625, %v802
      %v904 = vadd.f32 %v626, %v804
      %v905 = vadd.f32 %v627, %v807
      %v906 = vadd.f32 %v628, %v809
      %v907 = vadd.f32 %v629, %v812
      %v908 = vadd.f32 %v630, %v814
      %v909 = vadd.f32 %v631, %v817
      %v910 = vadd.f32 %v632, %v819
      %v911 = vadd.f32 %v633, %v822
      %v912 = vadd.f32 %v634, %v824
      %v913 = vadd.f32 %v635, %v827
      %v914 = vadd.f32 %v636, %v829
      %v915 = vadd.f32 %v637, %v832
      %v916 = vadd.f32 %v638, %v834
      %v917 = vadd.f32 %v639, %v837
      %v918 = vadd.f32 %v640, %v839
      %v919 = vadd.f32 %v641, %v842
      %v920 = vadd.f32 %v642, %v844
      %v921 = vadd.f32 %v643, %v847
      %v922 = vadd.f32 %v644, %v849
      %v923 = vadd.f32 %v645, %v852
      %v924 = vadd.f32 %v646, %v854
      %v925 = vadd.f32 %v647, %v857
      %v926 = vadd.f32 %v648, %v859
      %v927 = vadd.f32 %v649, %v862
      %v928 = vadd.f32 %v650, %v864
      %s929 = scalar_lea.vmem %s217, 12
      %v930 = vld [vmem:[%s929] sm:$0xf]
      %v931 = vld [vmem:[%s929 + $0x4] sm:$0xf]
      %v932 = vld [vmem:[%s929 + $0xc] sm:$0xf]
      %v933 = vld [vmem:[%s929 + $0x10] sm:$0xf]
      %v934 = vld [vmem:[%s929 + $0x18] sm:$0xf]
      %v935 = vld [vmem:[%s929 + $0x1c] sm:$0xf]
      %v936 = vld [vmem:[%s929 + $0x24] sm:$0xf]
      %v937 = vld [vmem:[%s929 + $0x28] sm:$0xf]
      %v938 = vld [vmem:[%s929 + $0x30] sm:$0xf]
      %v939 = vld [vmem:[%s929 + $0x34] sm:$0xf]
      %v940 = vld [vmem:[%s929 + $0x3c] sm:$0xf]
      %v941 = vld [vmem:[%s929 + $0x40] sm:$0xf]
      %v942 = vld [vmem:[%s929 + $0x48] sm:$0xf]
      %v943 = vld [vmem:[%s929 + $0x4c] sm:$0xf]
      %v944 = vld [vmem:[%s929 + $0x54] sm:$0xf]
      %v945 = vld [vmem:[%s929 + $0x58] sm:$0xf]
      %v946 = vld [vmem:[%s929 + $0x60] sm:$0xf]
      %v947 = vld [vmem:[%s929 + $0x64] sm:$0xf]
      %v948 = vld [vmem:[%s929 + $0x6c] sm:$0xf]
      %v949 = vld [vmem:[%s929 + $0x70] sm:$0xf]
      %v950 = vld [vmem:[%s929 + $0x78] sm:$0xf]
      %v951 = vld [vmem:[%s929 + $0x7c] sm:$0xf]
      %v952 = vld [vmem:[%s929 + $0x84] sm:$0xf]
      %v953 = vld [vmem:[%s929 + $0x88] sm:$0xf]
      %v954 = vld [vmem:[%s929 + $0x90] sm:$0xf]
      %v955 = vld [vmem:[%s929 + $0x94] sm:$0xf]
      %v956 = vld [vmem:[%s929 + $0x9c] sm:$0xf]
      %v957 = vld [vmem:[%s929 + $0xa0] sm:$0xf]
      %v958 = vld [vmem:[%s929 + $0xa8] sm:$0xf]
      %v959 = vld [vmem:[%s929 + $0xac] sm:$0xf]
      %v960 = vld [vmem:[%s929 + $0xb4] sm:$0xf]
      %v961 = vld [vmem:[%s929 + $0xb8] sm:$0xf]
      %v962 = vunpack.c.l.bf16 %v930
      %v963 = vunpack.c.l.bf16 %v931
      %v964 = vunpack.c.l.bf16 %v932
      %v965 = vunpack.c.l.bf16 %v933
      %v966 = vunpack.c.l.bf16 %v934
      %v967 = vunpack.c.l.bf16 %v935
      %v968 = vunpack.c.l.bf16 %v936
      %v969 = vunpack.c.l.bf16 %v937
      %v970 = vunpack.c.l.bf16 %v938
      %v971 = vunpack.c.l.bf16 %v939
      %v972 = vunpack.c.l.bf16 %v940
      %v973 = vunpack.c.l.bf16 %v941
      %v974 = vunpack.c.l.bf16 %v942
      %v975 = vunpack.c.l.bf16 %v943
      %v976 = vunpack.c.l.bf16 %v944
      %v977 = vunpack.c.l.bf16 %v945
      %v978 = vunpack.c.l.bf16 %v946
      %v979 = vunpack.c.l.bf16 %v947
      %v980 = vunpack.c.l.bf16 %v948
      %v981 = vunpack.c.l.bf16 %v949
      %v982 = vunpack.c.l.bf16 %v950
      %v983 = vunpack.c.l.bf16 %v951
      %v984 = vunpack.c.l.bf16 %v952
      %v985 = vunpack.c.l.bf16 %v953
      %v986 = vunpack.c.l.bf16 %v954
      %v987 = vunpack.c.l.bf16 %v955
      %v988 = vunpack.c.l.bf16 %v956
      %v989 = vunpack.c.l.bf16 %v957
      %v990 = vunpack.c.l.bf16 %v958
      %v991 = vunpack.c.l.bf16 %v959
      %v992 = vunpack.c.l.bf16 %v960
      %v993 = vunpack.c.l.bf16 %v961
      %s994 = scalar_lea.vmem %s221, 4
      %v995 = vld [vmem:[%s994] sm:$0x1]
      %v996 = vlaneseq
      %v997 = vshrl.u32 %v996, 7
      %v998 = vsub.s32 0, %v997
      %v999 = vrot.slane %v995, %v998
      %v1000 = vmul.f32 %v962, %v999
      %v1001 = vmul.f32 %v963, %v999
      %v1002 = vmul.f32 %v964, %v999
      %v1003 = vmul.f32 %v965, %v999
      %v1004 = vmul.f32 %v966, %v999
      %v1005 = vmul.f32 %v967, %v999
      %v1006 = vmul.f32 %v968, %v999
      %v1007 = vmul.f32 %v969, %v999
      %v1008 = vmul.f32 %v970, %v999
      %v1009 = vmul.f32 %v971, %v999
      %v1010 = vmul.f32 %v972, %v999
      %v1011 = vmul.f32 %v973, %v999
      %v1012 = vmul.f32 %v974, %v999
      %v1013 = vmul.f32 %v975, %v999
      %v1014 = vmul.f32 %v976, %v999
      %v1015 = vmul.f32 %v977, %v999
      %v1016 = vmul.f32 %v978, %v999
      %v1017 = vmul.f32 %v979, %v999
      %v1018 = vmul.f32 %v980, %v999
      %v1019 = vmul.f32 %v981, %v999
      %v1020 = vmul.f32 %v982, %v999
      %v1021 = vmul.f32 %v983, %v999
      %v1022 = vmul.f32 %v984, %v999
      %v1023 = vmul.f32 %v985, %v999
      %v1024 = vmul.f32 %v986, %v999
      %v1025 = vmul.f32 %v987, %v999
      %v1026 = vmul.f32 %v988, %v999
      %v1027 = vmul.f32 %v989, %v999
      %v1028 = vmul.f32 %v990, %v999
      %v1029 = vmul.f32 %v991, %v999
      %v1030 = vmul.f32 %v992, %v999
      %v1031 = vmul.f32 %v993, %v999
      %v1032 = vadd.f32 %v897, %v1000
      %v1033 = vadd.f32 %v898, %v1001
      %v1034 = vadd.f32 %v899, %v1002
      %v1035 = vadd.f32 %v900, %v1003
      %v1036 = vadd.f32 %v901, %v1004
      %v1037 = vadd.f32 %v902, %v1005
      %v1038 = vadd.f32 %v903, %v1006
      %v1039 = vadd.f32 %v904, %v1007
      %v1040 = vadd.f32 %v905, %v1008
      %v1041 = vadd.f32 %v906, %v1009
      %v1042 = vadd.f32 %v907, %v1010
      %v1043 = vadd.f32 %v908, %v1011
      %v1044 = vadd.f32 %v909, %v1012
      %v1045 = vadd.f32 %v910, %v1013
      %v1046 = vadd.f32 %v911, %v1014
      %v1047 = vadd.f32 %v912, %v1015
      %v1048 = vadd.f32 %v913, %v1016
      %v1049 = vadd.f32 %v914, %v1017
      %v1050 = vadd.f32 %v915, %v1018
      %v1051 = vadd.f32 %v916, %v1019
      %v1052 = vadd.f32 %v917, %v1020
      %v1053 = vadd.f32 %v918, %v1021
      %v1054 = vadd.f32 %v919, %v1022
      %v1055 = vadd.f32 %v920, %v1023
      %v1056 = vadd.f32 %v921, %v1024
      %v1057 = vadd.f32 %v922, %v1025
      %v1058 = vadd.f32 %v923, %v1026
      %v1059 = vadd.f32 %v924, %v1027
      %v1060 = vadd.f32 %v925, %v1028
      %v1061 = vadd.f32 %v926, %v1029
      %v1062 = vadd.f32 %v927, %v1030
      %v1063 = vadd.f32 %v928, %v1031
      %v1064 = vld [vmem:[%s929 + $0x8] sm:$0x1]
      %v1065 = vld [vmem:[%s929 + $0x14] sm:$0x1]
      %v1066 = vld [vmem:[%s929 + $0x20] sm:$0x1]
      %v1067 = vld [vmem:[%s929 + $0x2c] sm:$0x1]
      %v1068 = vld [vmem:[%s929 + $0x38] sm:$0x1]
      %v1069 = vld [vmem:[%s929 + $0x44] sm:$0x1]
      %v1070 = vld [vmem:[%s929 + $0x50] sm:$0x1]
      %v1071 = vld [vmem:[%s929 + $0x5c] sm:$0x1]
      %v1072 = vld [vmem:[%s929 + $0x68] sm:$0x1]
      %v1073 = vld [vmem:[%s929 + $0x74] sm:$0x1]
      %v1074 = vld [vmem:[%s929 + $0x80] sm:$0x1]
      %v1075 = vld [vmem:[%s929 + $0x8c] sm:$0x1]
      %v1076 = vld [vmem:[%s929 + $0x98] sm:$0x1]
      %v1077 = vld [vmem:[%s929 + $0xa4] sm:$0x1]
      %v1078 = vld [vmem:[%s929 + $0xb0] sm:$0x1]
      %v1079 = vld [vmem:[%s929 + $0xbc] sm:$0x1]
      %v1080 = vunpack.c.l.bf16 %v1064
      %v1081 = vunpack.c.l.bf16 %v1065
      %v1082 = vunpack.c.l.bf16 %v1066
      %v1083 = vunpack.c.l.bf16 %v1067
      %v1084 = vunpack.c.l.bf16 %v1068
      %v1085 = vunpack.c.l.bf16 %v1069
      %v1086 = vunpack.c.l.bf16 %v1070
      %v1087 = vunpack.c.l.bf16 %v1071
      %v1088 = vunpack.c.l.bf16 %v1072
      %v1089 = vunpack.c.l.bf16 %v1073
      %v1090 = vunpack.c.l.bf16 %v1074
      %v1091 = vunpack.c.l.bf16 %v1075
      %v1092 = vunpack.c.l.bf16 %v1076
      %v1093 = vunpack.c.l.bf16 %v1077
      %v1094 = vunpack.c.l.bf16 %v1078
      %v1095 = vunpack.c.l.bf16 %v1079
      %v1096 = vld [vmem:[%s994 + $0x1] sm:$0x1]
      %v1097 = vlaneseq
      %v1098 = vshrl.u32 %v1097, 7
      %v1099 = vsub.s32 0, %v1098
      %v1100 = vrot.slane %v1096, %v1099
      %v1101 = vmul.f32 %v962, %v1100
      %v1102 = vmul.f32 %v963, %v1100
      %v1103 = vmul.f32 %v1080, %v1100
      %v1104 = vmul.f32 %v964, %v1100
      %v1105 = vmul.f32 %v965, %v1100
      %v1106 = vmul.f32 %v1081, %v1100
      %v1107 = vmul.f32 %v966, %v1100
      %v1108 = vmul.f32 %v967, %v1100
      %v1109 = vmul.f32 %v1082, %v1100
      %v1110 = vmul.f32 %v968, %v1100
      %v1111 = vmul.f32 %v969, %v1100
      %v1112 = vmul.f32 %v1083, %v1100
      %v1113 = vmul.f32 %v970, %v1100
      %v1114 = vmul.f32 %v971, %v1100
      %v1115 = vmul.f32 %v1084, %v1100
      %v1116 = vmul.f32 %v972, %v1100
      %v1117 = vmul.f32 %v973, %v1100
      %v1118 = vmul.f32 %v1085, %v1100
      %v1119 = vmul.f32 %v974, %v1100
      %v1120 = vmul.f32 %v975, %v1100
      %v1121 = vmul.f32 %v1086, %v1100
      %v1122 = vmul.f32 %v976, %v1100
      %v1123 = vmul.f32 %v977, %v1100
      %v1124 = vmul.f32 %v1087, %v1100
      %v1125 = vmul.f32 %v978, %v1100
      %v1126 = vmul.f32 %v979, %v1100
      %v1127 = vmul.f32 %v1088, %v1100
      %v1128 = vmul.f32 %v980, %v1100
      %v1129 = vmul.f32 %v981, %v1100
      %v1130 = vmul.f32 %v1089, %v1100
      %v1131 = vmul.f32 %v982, %v1100
      %v1132 = vmul.f32 %v983, %v1100
      %v1133 = vmul.f32 %v1090, %v1100
      %v1134 = vmul.f32 %v984, %v1100
      %v1135 = vmul.f32 %v985, %v1100
      %v1136 = vmul.f32 %v1091, %v1100
      %v1137 = vmul.f32 %v986, %v1100
      %v1138 = vmul.f32 %v987, %v1100
      %v1139 = vmul.f32 %v1092, %v1100
      %v1140 = vmul.f32 %v988, %v1100
      %v1141 = vmul.f32 %v989, %v1100
      %v1142 = vmul.f32 %v1093, %v1100
      %v1143 = vmul.f32 %v990, %v1100
      %v1144 = vmul.f32 %v991, %v1100
      %v1145 = vmul.f32 %v1094, %v1100
      %v1146 = vmul.f32 %v992, %v1100
      %v1147 = vmul.f32 %v993, %v1100
      %v1148 = vmul.f32 %v1095, %v1100
      %v1197 = vrot.slane %v1101, 1
      %v1198 = vrot.slane %v1102, 1
      %v1199 = vsel %vm506, %v1197, %v1198
      %v1200 = vrot.slane %v1103, 1
      %v1201 = vsel %vm506, %v1198, %v1200
      %v1202 = vrot.slane %v1104, 1
      %v1203 = vrot.slane %v1105, 1
      %v1204 = vsel %vm506, %v1202, %v1203
      %v1205 = vrot.slane %v1106, 1
      %v1206 = vsel %vm506, %v1203, %v1205
      %v1207 = vrot.slane %v1107, 1
      %v1208 = vrot.slane %v1108, 1
      %v1209 = vsel %vm506, %v1207, %v1208
      %v1210 = vrot.slane %v1109, 1
      %v1211 = vsel %vm506, %v1208, %v1210
      %v1212 = vrot.slane %v1110, 1
      %v1213 = vrot.slane %v1111, 1
      %v1214 = vsel %vm506, %v1212, %v1213
      %v1215 = vrot.slane %v1112, 1
      %v1216 = vsel %vm506, %v1213, %v1215
      %v1217 = vrot.slane %v1113, 1
      %v1218 = vrot.slane %v1114, 1
      %v1219 = vsel %vm506, %v1217, %v1218
      %v1220 = vrot.slane %v1115, 1
      %v1221 = vsel %vm506, %v1218, %v1220
      %v1222 = vrot.slane %v1116, 1
      %v1223 = vrot.slane %v1117, 1
      %v1224 = vsel %vm506, %v1222, %v1223
      %v1225 = vrot.slane %v1118, 1
      %v1226 = vsel %vm506, %v1223, %v1225
      %v1227 = vrot.slane %v1119, 1
      %v1228 = vrot.slane %v1120, 1
      %v1229 = vsel %vm506, %v1227, %v1228
      %v1230 = vrot.slane %v1121, 1
      %v1231 = vsel %vm506, %v1228, %v1230
      %v1232 = vrot.slane %v1122, 1
      %v1233 = vrot.slane %v1123, 1
      %v1234 = vsel %vm506, %v1232, %v1233
      %v1235 = vrot.slane %v1124, 1
      %v1236 = vsel %vm506, %v1233, %v1235
      %v1237 = vrot.slane %v1125, 1
      %v1238 = vrot.slane %v1126, 1
      %v1239 = vsel %vm506, %v1237, %v1238
      %v1240 = vrot.slane %v1127, 1
      %v1241 = vsel %vm506, %v1238, %v1240
      %v1242 = vrot.slane %v1128, 1
      %v1243 = vrot.slane %v1129, 1
      %v1244 = vsel %vm506, %v1242, %v1243
      %v1245 = vrot.slane %v1130, 1
      %v1246 = vsel %vm506, %v1243, %v1245
      %v1247 = vrot.slane %v1131, 1
      %v1248 = vrot.slane %v1132, 1
      %v1249 = vsel %vm506, %v1247, %v1248
      %v1250 = vrot.slane %v1133, 1
      %v1251 = vsel %vm506, %v1248, %v1250
      %v1252 = vrot.slane %v1134, 1
      %v1253 = vrot.slane %v1135, 1
      %v1254 = vsel %vm506, %v1252, %v1253
      %v1255 = vrot.slane %v1136, 1
      %v1256 = vsel %vm506, %v1253, %v1255
      %v1257 = vrot.slane %v1137, 1
      %v1258 = vrot.slane %v1138, 1
      %v1259 = vsel %vm506, %v1257, %v1258
      %v1260 = vrot.slane %v1139, 1
      %v1261 = vsel %vm506, %v1258, %v1260
      %v1262 = vrot.slane %v1140, 1
      %v1263 = vrot.slane %v1141, 1
      %v1264 = vsel %vm506, %v1262, %v1263
      %v1265 = vrot.slane %v1142, 1
      %v1266 = vsel %vm506, %v1263, %v1265
      %v1267 = vrot.slane %v1143, 1
      %v1268 = vrot.slane %v1144, 1
      %v1269 = vsel %vm506, %v1267, %v1268
      %v1270 = vrot.slane %v1145, 1
      %v1271 = vsel %vm506, %v1268, %v1270
      %v1272 = vrot.slane %v1146, 1
      %v1273 = vrot.slane %v1147, 1
      %v1274 = vsel %vm506, %v1272, %v1273
      %v1275 = vrot.slane %v1148, 1
      %v1276 = vsel %vm506, %v1273, %v1275
      %v1309 = vadd.f32 %v1032, %v1199
      %v1310 = vadd.f32 %v1033, %v1201
      %v1311 = vadd.f32 %v1034, %v1204
      %v1312 = vadd.f32 %v1035, %v1206
      %v1313 = vadd.f32 %v1036, %v1209
      %v1314 = vadd.f32 %v1037, %v1211
      %v1315 = vadd.f32 %v1038, %v1214
      %v1316 = vadd.f32 %v1039, %v1216
      %v1317 = vadd.f32 %v1040, %v1219
      %v1318 = vadd.f32 %v1041, %v1221
      %v1319 = vadd.f32 %v1042, %v1224
      %v1320 = vadd.f32 %v1043, %v1226
      %v1321 = vadd.f32 %v1044, %v1229
      %v1322 = vadd.f32 %v1045, %v1231
      %v1323 = vadd.f32 %v1046, %v1234
      %v1324 = vadd.f32 %v1047, %v1236
      %v1325 = vadd.f32 %v1048, %v1239
      %v1326 = vadd.f32 %v1049, %v1241
      %v1327 = vadd.f32 %v1050, %v1244
      %v1328 = vadd.f32 %v1051, %v1246
      %v1329 = vadd.f32 %v1052, %v1249
      %v1330 = vadd.f32 %v1053, %v1251
      %v1331 = vadd.f32 %v1054, %v1254
      %v1332 = vadd.f32 %v1055, %v1256
      %v1333 = vadd.f32 %v1056, %v1259
      %v1334 = vadd.f32 %v1057, %v1261
      %v1335 = vadd.f32 %v1058, %v1264
      %v1336 = vadd.f32 %v1059, %v1266
      %v1337 = vadd.f32 %v1060, %v1269
      %v1338 = vadd.f32 %v1061, %v1271
      %v1339 = vadd.f32 %v1062, %v1274
      %v1340 = vadd.f32 %v1063, %v1276
      %v1341 = vld [vmem:[%s929] sm:$0xe]
      %v1342 = vld [vmem:[%s929 + $0xc] sm:$0xe]
      %v1343 = vld [vmem:[%s929 + $0x18] sm:$0xe]
      %v1344 = vld [vmem:[%s929 + $0x24] sm:$0xe]
      %v1345 = vld [vmem:[%s929 + $0x30] sm:$0xe]
      %v1346 = vld [vmem:[%s929 + $0x3c] sm:$0xe]
      %v1347 = vld [vmem:[%s929 + $0x48] sm:$0xe]
      %v1348 = vld [vmem:[%s929 + $0x54] sm:$0xe]
      %v1349 = vld [vmem:[%s929 + $0x60] sm:$0xe]
      %v1350 = vld [vmem:[%s929 + $0x6c] sm:$0xe]
      %v1351 = vld [vmem:[%s929 + $0x78] sm:$0xe]
      %v1352 = vld [vmem:[%s929 + $0x84] sm:$0xe]
      %v1353 = vld [vmem:[%s929 + $0x90] sm:$0xe]
      %v1354 = vld [vmem:[%s929 + $0x9c] sm:$0xe]
      %v1355 = vld [vmem:[%s929 + $0xa8] sm:$0xe]
      %v1356 = vld [vmem:[%s929 + $0xb4] sm:$0xe]
      %v1357 = vunpack.c.l.bf16 %v1341
      %v1358 = vunpack.c.l.bf16 %v1342
      %v1359 = vunpack.c.l.bf16 %v1343
      %v1360 = vunpack.c.l.bf16 %v1344
      %v1361 = vunpack.c.l.bf16 %v1345
      %v1362 = vunpack.c.l.bf16 %v1346
      %v1363 = vunpack.c.l.bf16 %v1347
      %v1364 = vunpack.c.l.bf16 %v1348
      %v1365 = vunpack.c.l.bf16 %v1349
      %v1366 = vunpack.c.l.bf16 %v1350
      %v1367 = vunpack.c.l.bf16 %v1351
      %v1368 = vunpack.c.l.bf16 %v1352
      %v1369 = vunpack.c.l.bf16 %v1353
      %v1370 = vunpack.c.l.bf16 %v1354
      %v1371 = vunpack.c.l.bf16 %v1355
      %v1372 = vunpack.c.l.bf16 %v1356
      %v1373 = vld [vmem:[%s994 + $0x2] sm:$0x1]
      %v1374 = vlaneseq
      %v1375 = vshrl.u32 %v1374, 7
      %v1376 = vsub.s32 0, %v1375
      %v1377 = vrot.slane %v1373, %v1376
      %v1378 = vmul.f32 %v1357, %v1377
      %v1379 = vmul.f32 %v963, %v1377
      %v1380 = vmul.f32 %v1080, %v1377
      %v1381 = vmul.f32 %v1358, %v1377
      %v1382 = vmul.f32 %v965, %v1377
      %v1383 = vmul.f32 %v1081, %v1377
      %v1384 = vmul.f32 %v1359, %v1377
      %v1385 = vmul.f32 %v967, %v1377
      %v1386 = vmul.f32 %v1082, %v1377
      %v1387 = vmul.f32 %v1360, %v1377
      %v1388 = vmul.f32 %v969, %v1377
      %v1389 = vmul.f32 %v1083, %v1377
      %v1390 = vmul.f32 %v1361, %v1377
      %v1391 = vmul.f32 %v971, %v1377
      %v1392 = vmul.f32 %v1084, %v1377
      %v1393 = vmul.f32 %v1362, %v1377
      %v1394 = vmul.f32 %v973, %v1377
      %v1395 = vmul.f32 %v1085, %v1377
      %v1396 = vmul.f32 %v1363, %v1377
      %v1397 = vmul.f32 %v975, %v1377
      %v1398 = vmul.f32 %v1086, %v1377
      %v1399 = vmul.f32 %v1364, %v1377
      %v1400 = vmul.f32 %v977, %v1377
      %v1401 = vmul.f32 %v1087, %v1377
      %v1402 = vmul.f32 %v1365, %v1377
      %v1403 = vmul.f32 %v979, %v1377
      %v1404 = vmul.f32 %v1088, %v1377
      %v1405 = vmul.f32 %v1366, %v1377
      %v1406 = vmul.f32 %v981, %v1377
      %v1407 = vmul.f32 %v1089, %v1377
      %v1408 = vmul.f32 %v1367, %v1377
      %v1409 = vmul.f32 %v983, %v1377
      %v1410 = vmul.f32 %v1090, %v1377
      %v1411 = vmul.f32 %v1368, %v1377
      %v1412 = vmul.f32 %v985, %v1377
      %v1413 = vmul.f32 %v1091, %v1377
      %v1414 = vmul.f32 %v1369, %v1377
      %v1415 = vmul.f32 %v987, %v1377
      %v1416 = vmul.f32 %v1092, %v1377
      %v1417 = vmul.f32 %v1370, %v1377
      %v1418 = vmul.f32 %v989, %v1377
      %v1419 = vmul.f32 %v1093, %v1377
      %v1420 = vmul.f32 %v1371, %v1377
      %v1421 = vmul.f32 %v991, %v1377
      %v1422 = vmul.f32 %v1094, %v1377
      %v1423 = vmul.f32 %v1372, %v1377
      %v1424 = vmul.f32 %v993, %v1377
      %v1425 = vmul.f32 %v1095, %v1377
      %v1474 = vrot.slane %v1378, 2
      %v1475 = vrot.slane %v1379, 2
      %v1476 = vsel %vm784, %v1474, %v1475
      %v1477 = vrot.slane %v1380, 2
      %v1478 = vsel %vm784, %v1475, %v1477
      %v1479 = vrot.slane %v1381, 2
      %v1480 = vrot.slane %v1382, 2
      %v1481 = vsel %vm784, %v1479, %v1480
      %v1482 = vrot.slane %v1383, 2
      %v1483 = vsel %vm784, %v1480, %v1482
      %v1484 = vrot.slane %v1384, 2
      %v1485 = vrot.slane %v1385, 2
      %v1486 = vsel %vm784, %v1484, %v1485
      %v1487 = vrot.slane %v1386, 2
      %v1488 = vsel %vm784, %v1485, %v1487
      %v1489 = vrot.slane %v1387, 2
      %v1490 = vrot.slane %v1388, 2
      %v1491 = vsel %vm784, %v1489, %v1490
      %v1492 = vrot.slane %v1389, 2
      %v1493 = vsel %vm784, %v1490, %v1492
      %v1494 = vrot.slane %v1390, 2
      %v1495 = vrot.slane %v1391, 2
      %v1496 = vsel %vm784, %v1494, %v1495
      %v1497 = vrot.slane %v1392, 2
      %v1498 = vsel %vm784, %v1495, %v1497
      %v1499 = vrot.slane %v1393, 2
      %v1500 = vrot.slane %v1394, 2
      %v1501 = vsel %vm784, %v1499, %v1500
      %v1502 = vrot.slane %v1395, 2
      %v1503 = vsel %vm784, %v1500, %v1502
      %v1504 = vrot.slane %v1396, 2
      %v1505 = vrot.slane %v1397, 2
      %v1506 = vsel %vm784, %v1504, %v1505
      %v1507 = vrot.slane %v1398, 2
      %v1508 = vsel %vm784, %v1505, %v1507
      %v1509 = vrot.slane %v1399, 2
      %v1510 = vrot.slane %v1400, 2
      %v1511 = vsel %vm784, %v1509, %v1510
      %v1512 = vrot.slane %v1401, 2
      %v1513 = vsel %vm784, %v1510, %v1512
      %v1514 = vrot.slane %v1402, 2
      %v1515 = vrot.slane %v1403, 2
      %v1516 = vsel %vm784, %v1514, %v1515
      %v1517 = vrot.slane %v1404, 2
      %v1518 = vsel %vm784, %v1515, %v1517
      %v1519 = vrot.slane %v1405, 2
      %v1520 = vrot.slane %v1406, 2
      %v1521 = vsel %vm784, %v1519, %v1520
      %v1522 = vrot.slane %v1407, 2
      %v1523 = vsel %vm784, %v1520, %v1522
      %v1524 = vrot.slane %v1408, 2
      %v1525 = vrot.slane %v1409, 2
      %v1526 = vsel %vm784, %v1524, %v1525
      %v1527 = vrot.slane %v1410, 2
      %v1528 = vsel %vm784, %v1525, %v1527
      %v1529 = vrot.slane %v1411, 2
      %v1530 = vrot.slane %v1412, 2
      %v1531 = vsel %vm784, %v1529, %v1530
      %v1532 = vrot.slane %v1413, 2
      %v1533 = vsel %vm784, %v1530, %v1532
      %v1534 = vrot.slane %v1414, 2
      %v1535 = vrot.slane %v1415, 2
      %v1536 = vsel %vm784, %v1534, %v1535
      %v1537 = vrot.slane %v1416, 2
      %v1538 = vsel %vm784, %v1535, %v1537
      %v1539 = vrot.slane %v1417, 2
      %v1540 = vrot.slane %v1418, 2
      %v1541 = vsel %vm784, %v1539, %v1540
      %v1542 = vrot.slane %v1419, 2
      %v1543 = vsel %vm784, %v1540, %v1542
      %v1544 = vrot.slane %v1420, 2
      %v1545 = vrot.slane %v1421, 2
      %v1546 = vsel %vm784, %v1544, %v1545
      %v1547 = vrot.slane %v1422, 2
      %v1548 = vsel %vm784, %v1545, %v1547
      %v1549 = vrot.slane %v1423, 2
      %v1550 = vrot.slane %v1424, 2
      %v1551 = vsel %vm784, %v1549, %v1550
      %v1552 = vrot.slane %v1425, 2
      %v1553 = vsel %vm784, %v1550, %v1552
      %v1586 = vadd.f32 %v1309, %v1476
      %v1587 = vadd.f32 %v1310, %v1478
      %v1588 = vadd.f32 %v1311, %v1481
      %v1589 = vadd.f32 %v1312, %v1483
      %v1590 = vadd.f32 %v1313, %v1486
      %v1591 = vadd.f32 %v1314, %v1488
      %v1592 = vadd.f32 %v1315, %v1491
      %v1593 = vadd.f32 %v1316, %v1493
      %v1594 = vadd.f32 %v1317, %v1496
      %v1595 = vadd.f32 %v1318, %v1498
      %v1596 = vadd.f32 %v1319, %v1501
      %v1597 = vadd.f32 %v1320, %v1503
      %v1598 = vadd.f32 %v1321, %v1506
      %v1599 = vadd.f32 %v1322, %v1508
      %v1600 = vadd.f32 %v1323, %v1511
      %v1601 = vadd.f32 %v1324, %v1513
      %v1602 = vadd.f32 %v1325, %v1516
      %v1603 = vadd.f32 %v1326, %v1518
      %v1604 = vadd.f32 %v1327, %v1521
      %v1605 = vadd.f32 %v1328, %v1523
      %v1606 = vadd.f32 %v1329, %v1526
      %v1607 = vadd.f32 %v1330, %v1528
      %v1608 = vadd.f32 %v1331, %v1531
      %v1609 = vadd.f32 %v1332, %v1533
      %v1610 = vadd.f32 %v1333, %v1536
      %v1611 = vadd.f32 %v1334, %v1538
      %v1612 = vadd.f32 %v1335, %v1541
      %v1613 = vadd.f32 %v1336, %v1543
      %v1614 = vadd.f32 %v1337, %v1546
      %v1615 = vadd.f32 %v1338, %v1548
      %v1616 = vadd.f32 %v1339, %v1551
      %v1617 = vadd.f32 %v1340, %v1553
      %s1618 = scalar_lea.vmem %s217, 24
      %v1619 = vld [vmem:[%s1618] sm:$0xf]
      %v1620 = vld [vmem:[%s1618 + $0x4] sm:$0xf]
      %v1621 = vld [vmem:[%s1618 + $0xc] sm:$0xf]
      %v1622 = vld [vmem:[%s1618 + $0x10] sm:$0xf]
      %v1623 = vld [vmem:[%s1618 + $0x18] sm:$0xf]
      %v1624 = vld [vmem:[%s1618 + $0x1c] sm:$0xf]
      %v1625 = vld [vmem:[%s1618 + $0x24] sm:$0xf]
      %v1626 = vld [vmem:[%s1618 + $0x28] sm:$0xf]
      %v1627 = vld [vmem:[%s1618 + $0x30] sm:$0xf]
      %v1628 = vld [vmem:[%s1618 + $0x34] sm:$0xf]
      %v1629 = vld [vmem:[%s1618 + $0x3c] sm:$0xf]
      %v1630 = vld [vmem:[%s1618 + $0x40] sm:$0xf]
      %v1631 = vld [vmem:[%s1618 + $0x48] sm:$0xf]
      %v1632 = vld [vmem:[%s1618 + $0x4c] sm:$0xf]
      %v1633 = vld [vmem:[%s1618 + $0x54] sm:$0xf]
      %v1634 = vld [vmem:[%s1618 + $0x58] sm:$0xf]
      %v1635 = vld [vmem:[%s1618 + $0x60] sm:$0xf]
      %v1636 = vld [vmem:[%s1618 + $0x64] sm:$0xf]
      %v1637 = vld [vmem:[%s1618 + $0x6c] sm:$0xf]
      %v1638 = vld [vmem:[%s1618 + $0x70] sm:$0xf]
      %v1639 = vld [vmem:[%s1618 + $0x78] sm:$0xf]
      %v1640 = vld [vmem:[%s1618 + $0x7c] sm:$0xf]
      %v1641 = vld [vmem:[%s1618 + $0x84] sm:$0xf]
      %v1642 = vld [vmem:[%s1618 + $0x88] sm:$0xf]
      %v1643 = vld [vmem:[%s1618 + $0x90] sm:$0xf]
      %v1644 = vld [vmem:[%s1618 + $0x94] sm:$0xf]
      %v1645 = vld [vmem:[%s1618 + $0x9c] sm:$0xf]
      %v1646 = vld [vmem:[%s1618 + $0xa0] sm:$0xf]
      %v1647 = vld [vmem:[%s1618 + $0xa8] sm:$0xf]
      %v1648 = vld [vmem:[%s1618 + $0xac] sm:$0xf]
      %v1649 = vld [vmem:[%s1618 + $0xb4] sm:$0xf]
      %v1650 = vld [vmem:[%s1618 + $0xb8] sm:$0xf]
      %v1651 = vunpack.c.l.bf16 %v1619
      %v1652 = vunpack.c.l.bf16 %v1620
      %v1653 = vunpack.c.l.bf16 %v1621
      %v1654 = vunpack.c.l.bf16 %v1622
      %v1655 = vunpack.c.l.bf16 %v1623
      %v1656 = vunpack.c.l.bf16 %v1624
      %v1657 = vunpack.c.l.bf16 %v1625
      %v1658 = vunpack.c.l.bf16 %v1626
      %v1659 = vunpack.c.l.bf16 %v1627
      %v1660 = vunpack.c.l.bf16 %v1628
      %v1661 = vunpack.c.l.bf16 %v1629
      %v1662 = vunpack.c.l.bf16 %v1630
      %v1663 = vunpack.c.l.bf16 %v1631
      %v1664 = vunpack.c.l.bf16 %v1632
      %v1665 = vunpack.c.l.bf16 %v1633
      %v1666 = vunpack.c.l.bf16 %v1634
      %v1667 = vunpack.c.l.bf16 %v1635
      %v1668 = vunpack.c.l.bf16 %v1636
      %v1669 = vunpack.c.l.bf16 %v1637
      %v1670 = vunpack.c.l.bf16 %v1638
      %v1671 = vunpack.c.l.bf16 %v1639
      %v1672 = vunpack.c.l.bf16 %v1640
      %v1673 = vunpack.c.l.bf16 %v1641
      %v1674 = vunpack.c.l.bf16 %v1642
      %v1675 = vunpack.c.l.bf16 %v1643
      %v1676 = vunpack.c.l.bf16 %v1644
      %v1677 = vunpack.c.l.bf16 %v1645
      %v1678 = vunpack.c.l.bf16 %v1646
      %v1679 = vunpack.c.l.bf16 %v1647
      %v1680 = vunpack.c.l.bf16 %v1648
      %v1681 = vunpack.c.l.bf16 %v1649
      %v1682 = vunpack.c.l.bf16 %v1650
      %s1683 = scalar_lea.vmem %s221, 8
      %v1684 = vld [vmem:[%s1683] sm:$0x1]
      %v1685 = vlaneseq
      %v1686 = vshrl.u32 %v1685, 7
      %v1687 = vsub.s32 0, %v1686
      %v1688 = vrot.slane %v1684, %v1687
      %v1689 = vmul.f32 %v1651, %v1688
      %v1690 = vmul.f32 %v1652, %v1688
      %v1691 = vmul.f32 %v1653, %v1688
      %v1692 = vmul.f32 %v1654, %v1688
      %v1693 = vmul.f32 %v1655, %v1688
      %v1694 = vmul.f32 %v1656, %v1688
      %v1695 = vmul.f32 %v1657, %v1688
      %v1696 = vmul.f32 %v1658, %v1688
      %v1697 = vmul.f32 %v1659, %v1688
      %v1698 = vmul.f32 %v1660, %v1688
      %v1699 = vmul.f32 %v1661, %v1688
      %v1700 = vmul.f32 %v1662, %v1688
      %v1701 = vmul.f32 %v1663, %v1688
      %v1702 = vmul.f32 %v1664, %v1688
      %v1703 = vmul.f32 %v1665, %v1688
      %v1704 = vmul.f32 %v1666, %v1688
      %v1705 = vmul.f32 %v1667, %v1688
      %v1706 = vmul.f32 %v1668, %v1688
      %v1707 = vmul.f32 %v1669, %v1688
      %v1708 = vmul.f32 %v1670, %v1688
      %v1709 = vmul.f32 %v1671, %v1688
      %v1710 = vmul.f32 %v1672, %v1688
      %v1711 = vmul.f32 %v1673, %v1688
      %v1712 = vmul.f32 %v1674, %v1688
      %v1713 = vmul.f32 %v1675, %v1688
      %v1714 = vmul.f32 %v1676, %v1688
      %v1715 = vmul.f32 %v1677, %v1688
      %v1716 = vmul.f32 %v1678, %v1688
      %v1717 = vmul.f32 %v1679, %v1688
      %v1718 = vmul.f32 %v1680, %v1688
      %v1719 = vmul.f32 %v1681, %v1688
      %v1720 = vmul.f32 %v1682, %v1688
      %v1721 = vadd.f32 %v1586, %v1689
      %v1722 = vadd.f32 %v1587, %v1690
      %v1723 = vadd.f32 %v1588, %v1691
      %v1724 = vadd.f32 %v1589, %v1692
      %v1725 = vadd.f32 %v1590, %v1693
      %v1726 = vadd.f32 %v1591, %v1694
      %v1727 = vadd.f32 %v1592, %v1695
      %v1728 = vadd.f32 %v1593, %v1696
      %v1729 = vadd.f32 %v1594, %v1697
      %v1730 = vadd.f32 %v1595, %v1698
      %v1731 = vadd.f32 %v1596, %v1699
      %v1732 = vadd.f32 %v1597, %v1700
      %v1733 = vadd.f32 %v1598, %v1701
      %v1734 = vadd.f32 %v1599, %v1702
      %v1735 = vadd.f32 %v1600, %v1703
      %v1736 = vadd.f32 %v1601, %v1704
      %v1737 = vadd.f32 %v1602, %v1705
      %v1738 = vadd.f32 %v1603, %v1706
      %v1739 = vadd.f32 %v1604, %v1707
      %v1740 = vadd.f32 %v1605, %v1708
      %v1741 = vadd.f32 %v1606, %v1709
      %v1742 = vadd.f32 %v1607, %v1710
      %v1743 = vadd.f32 %v1608, %v1711
      %v1744 = vadd.f32 %v1609, %v1712
      %v1745 = vadd.f32 %v1610, %v1713
      %v1746 = vadd.f32 %v1611, %v1714
      %v1747 = vadd.f32 %v1612, %v1715
      %v1748 = vadd.f32 %v1613, %v1716
      %v1749 = vadd.f32 %v1614, %v1717
      %v1750 = vadd.f32 %v1615, %v1718
      %v1751 = vadd.f32 %v1616, %v1719
      %v1752 = vadd.f32 %v1617, %v1720
      %v1753 = vld [vmem:[%s1618 + $0x8] sm:$0x1]
      %v1754 = vld [vmem:[%s1618 + $0x14] sm:$0x1]
      %v1755 = vld [vmem:[%s1618 + $0x20] sm:$0x1]
      %v1756 = vld [vmem:[%s1618 + $0x2c] sm:$0x1]
      %v1757 = vld [vmem:[%s1618 + $0x38] sm:$0x1]
      %v1758 = vld [vmem:[%s1618 + $0x44] sm:$0x1]
      %v1759 = vld [vmem:[%s1618 + $0x50] sm:$0x1]
      %v1760 = vld [vmem:[%s1618 + $0x5c] sm:$0x1]
      %v1761 = vld [vmem:[%s1618 + $0x68] sm:$0x1]
      %v1762 = vld [vmem:[%s1618 + $0x74] sm:$0x1]
      %v1763 = vld [vmem:[%s1618 + $0x80] sm:$0x1]
      %v1764 = vld [vmem:[%s1618 + $0x8c] sm:$0x1]
      %v1765 = vld [vmem:[%s1618 + $0x98] sm:$0x1]
      %v1766 = vld [vmem:[%s1618 + $0xa4] sm:$0x1]
      %v1767 = vld [vmem:[%s1618 + $0xb0] sm:$0x1]
      %v1768 = vld [vmem:[%s1618 + $0xbc] sm:$0x1]
      %v1769 = vunpack.c.l.bf16 %v1753
      %v1770 = vunpack.c.l.bf16 %v1754
      %v1771 = vunpack.c.l.bf16 %v1755
      %v1772 = vunpack.c.l.bf16 %v1756
      %v1773 = vunpack.c.l.bf16 %v1757
      %v1774 = vunpack.c.l.bf16 %v1758
      %v1775 = vunpack.c.l.bf16 %v1759
      %v1776 = vunpack.c.l.bf16 %v1760
      %v1777 = vunpack.c.l.bf16 %v1761
      %v1778 = vunpack.c.l.bf16 %v1762
      %v1779 = vunpack.c.l.bf16 %v1763
      %v1780 = vunpack.c.l.bf16 %v1764
      %v1781 = vunpack.c.l.bf16 %v1765
      %v1782 = vunpack.c.l.bf16 %v1766
      %v1783 = vunpack.c.l.bf16 %v1767
      %v1784 = vunpack.c.l.bf16 %v1768
      %v1785 = vld [vmem:[%s1683 + $0x1] sm:$0x1]
      %v1786 = vlaneseq
      %v1787 = vshrl.u32 %v1786, 7
      %v1788 = vsub.s32 0, %v1787
      %v1789 = vrot.slane %v1785, %v1788
      %v1790 = vmul.f32 %v1651, %v1789
      %v1791 = vmul.f32 %v1652, %v1789
      %v1792 = vmul.f32 %v1769, %v1789
      %v1793 = vmul.f32 %v1653, %v1789
      %v1794 = vmul.f32 %v1654, %v1789
      %v1795 = vmul.f32 %v1770, %v1789
      %v1796 = vmul.f32 %v1655, %v1789
      %v1797 = vmul.f32 %v1656, %v1789
      %v1798 = vmul.f32 %v1771, %v1789
      %v1799 = vmul.f32 %v1657, %v1789
      %v1800 = vmul.f32 %v1658, %v1789
      %v1801 = vmul.f32 %v1772, %v1789
      %v1802 = vmul.f32 %v1659, %v1789
      %v1803 = vmul.f32 %v1660, %v1789
      %v1804 = vmul.f32 %v1773, %v1789
      %v1805 = vmul.f32 %v1661, %v1789
      %v1806 = vmul.f32 %v1662, %v1789
      %v1807 = vmul.f32 %v1774, %v1789
      %v1808 = vmul.f32 %v1663, %v1789
      %v1809 = vmul.f32 %v1664, %v1789
      %v1810 = vmul.f32 %v1775, %v1789
      %v1811 = vmul.f32 %v1665, %v1789
      %v1812 = vmul.f32 %v1666, %v1789
      %v1813 = vmul.f32 %v1776, %v1789
      %v1814 = vmul.f32 %v1667, %v1789
      %v1815 = vmul.f32 %v1668, %v1789
      %v1816 = vmul.f32 %v1777, %v1789
      %v1817 = vmul.f32 %v1669, %v1789
      %v1818 = vmul.f32 %v1670, %v1789
      %v1819 = vmul.f32 %v1778, %v1789
      %v1820 = vmul.f32 %v1671, %v1789
      %v1821 = vmul.f32 %v1672, %v1789
      %v1822 = vmul.f32 %v1779, %v1789
      %v1823 = vmul.f32 %v1673, %v1789
      %v1824 = vmul.f32 %v1674, %v1789
      %v1825 = vmul.f32 %v1780, %v1789
      %v1826 = vmul.f32 %v1675, %v1789
      %v1827 = vmul.f32 %v1676, %v1789
      %v1828 = vmul.f32 %v1781, %v1789
      %v1829 = vmul.f32 %v1677, %v1789
      %v1830 = vmul.f32 %v1678, %v1789
      %v1831 = vmul.f32 %v1782, %v1789
      %v1832 = vmul.f32 %v1679, %v1789
      %v1833 = vmul.f32 %v1680, %v1789
      %v1834 = vmul.f32 %v1783, %v1789
      %v1835 = vmul.f32 %v1681, %v1789
      %v1836 = vmul.f32 %v1682, %v1789
      %v1837 = vmul.f32 %v1784, %v1789
      %v1886 = vrot.slane %v1790, 1
      %v1887 = vrot.slane %v1791, 1
      %v1888 = vsel %vm506, %v1886, %v1887
      %v1889 = vrot.slane %v1792, 1
      %v1890 = vsel %vm506, %v1887, %v1889
      %v1891 = vrot.slane %v1793, 1
      %v1892 = vrot.slane %v1794, 1
      %v1893 = vsel %vm506, %v1891, %v1892
      %v1894 = vrot.slane %v1795, 1
      %v1895 = vsel %vm506, %v1892, %v1894
      %v1896 = vrot.slane %v1796, 1
      %v1897 = vrot.slane %v1797, 1
      %v1898 = vsel %vm506, %v1896, %v1897
      %v1899 = vrot.slane %v1798, 1
      %v1900 = vsel %vm506, %v1897, %v1899
      %v1901 = vrot.slane %v1799, 1
      %v1902 = vrot.slane %v1800, 1
      %v1903 = vsel %vm506, %v1901, %v1902
      %v1904 = vrot.slane %v1801, 1
      %v1905 = vsel %vm506, %v1902, %v1904
      %v1906 = vrot.slane %v1802, 1
      %v1907 = vrot.slane %v1803, 1
      %v1908 = vsel %vm506, %v1906, %v1907
      %v1909 = vrot.slane %v1804, 1
      %v1910 = vsel %vm506, %v1907, %v1909
      %v1911 = vrot.slane %v1805, 1
      %v1912 = vrot.slane %v1806, 1
      %v1913 = vsel %vm506, %v1911, %v1912
      %v1914 = vrot.slane %v1807, 1
      %v1915 = vsel %vm506, %v1912, %v1914
      %v1916 = vrot.slane %v1808, 1
      %v1917 = vrot.slane %v1809, 1
      %v1918 = vsel %vm506, %v1916, %v1917
      %v1919 = vrot.slane %v1810, 1
      %v1920 = vsel %vm506, %v1917, %v1919
      %v1921 = vrot.slane %v1811, 1
      %v1922 = vrot.slane %v1812, 1
      %v1923 = vsel %vm506, %v1921, %v1922
      %v1924 = vrot.slane %v1813, 1
      %v1925 = vsel %vm506, %v1922, %v1924
      %v1926 = vrot.slane %v1814, 1
      %v1927 = vrot.slane %v1815, 1
      %v1928 = vsel %vm506, %v1926, %v1927
      %v1929 = vrot.slane %v1816, 1
      %v1930 = vsel %vm506, %v1927, %v1929
      %v1931 = vrot.slane %v1817, 1
      %v1932 = vrot.slane %v1818, 1
      %v1933 = vsel %vm506, %v1931, %v1932
      %v1934 = vrot.slane %v1819, 1
      %v1935 = vsel %vm506, %v1932, %v1934
      %v1936 = vrot.slane %v1820, 1
      %v1937 = vrot.slane %v1821, 1
      %v1938 = vsel %vm506, %v1936, %v1937
      %v1939 = vrot.slane %v1822, 1
      %v1940 = vsel %vm506, %v1937, %v1939
      %v1941 = vrot.slane %v1823, 1
      %v1942 = vrot.slane %v1824, 1
      %v1943 = vsel %vm506, %v1941, %v1942
      %v1944 = vrot.slane %v1825, 1
      %v1945 = vsel %vm506, %v1942, %v1944
      %v1946 = vrot.slane %v1826, 1
      %v1947 = vrot.slane %v1827, 1
      %v1948 = vsel %vm506, %v1946, %v1947
      %v1949 = vrot.slane %v1828, 1
      %v1950 = vsel %vm506, %v1947, %v1949
      %v1951 = vrot.slane %v1829, 1
      %v1952 = vrot.slane %v1830, 1
      %v1953 = vsel %vm506, %v1951, %v1952
      %v1954 = vrot.slane %v1831, 1
      %v1955 = vsel %vm506, %v1952, %v1954
      %v1956 = vrot.slane %v1832, 1
      %v1957 = vrot.slane %v1833, 1
      %v1958 = vsel %vm506, %v1956, %v1957
      %v1959 = vrot.slane %v1834, 1
      %v1960 = vsel %vm506, %v1957, %v1959
      %v1961 = vrot.slane %v1835, 1
      %v1962 = vrot.slane %v1836, 1
      %v1963 = vsel %vm506, %v1961, %v1962
      %v1964 = vrot.slane %v1837, 1
      %v1965 = vsel %vm506, %v1962, %v1964
      %v1998 = vadd.f32 %v1721, %v1888
      %v1999 = vadd.f32 %v1722, %v1890
      %v2000 = vadd.f32 %v1723, %v1893
      %v2001 = vadd.f32 %v1724, %v1895
      %v2002 = vadd.f32 %v1725, %v1898
      %v2003 = vadd.f32 %v1726, %v1900
      %v2004 = vadd.f32 %v1727, %v1903
      %v2005 = vadd.f32 %v1728, %v1905
      %v2006 = vadd.f32 %v1729, %v1908
      %v2007 = vadd.f32 %v1730, %v1910
      %v2008 = vadd.f32 %v1731, %v1913
      %v2009 = vadd.f32 %v1732, %v1915
      %v2010 = vadd.f32 %v1733, %v1918
      %v2011 = vadd.f32 %v1734, %v1920
      %v2012 = vadd.f32 %v1735, %v1923
      %v2013 = vadd.f32 %v1736, %v1925
      %v2014 = vadd.f32 %v1737, %v1928
      %v2015 = vadd.f32 %v1738, %v1930
      %v2016 = vadd.f32 %v1739, %v1933
      %v2017 = vadd.f32 %v1740, %v1935
      %v2018 = vadd.f32 %v1741, %v1938
      %v2019 = vadd.f32 %v1742, %v1940
      %v2020 = vadd.f32 %v1743, %v1943
      %v2021 = vadd.f32 %v1744, %v1945
      %v2022 = vadd.f32 %v1745, %v1948
      %v2023 = vadd.f32 %v1746, %v1950
      %v2024 = vadd.f32 %v1747, %v1953
      %v2025 = vadd.f32 %v1748, %v1955
      %v2026 = vadd.f32 %v1749, %v1958
      %v2027 = vadd.f32 %v1750, %v1960
      %v2028 = vadd.f32 %v1751, %v1963
      %v2029 = vadd.f32 %v1752, %v1965
      %v2030 = vld [vmem:[%s1618] sm:$0xe]
      %v2031 = vld [vmem:[%s1618 + $0xc] sm:$0xe]
      %v2032 = vld [vmem:[%s1618 + $0x18] sm:$0xe]
      %v2033 = vld [vmem:[%s1618 + $0x24] sm:$0xe]
      %v2034 = vld [vmem:[%s1618 + $0x30] sm:$0xe]
      %v2035 = vld [vmem:[%s1618 + $0x3c] sm:$0xe]
      %v2036 = vld [vmem:[%s1618 + $0x48] sm:$0xe]
      %v2037 = vld [vmem:[%s1618 + $0x54] sm:$0xe]
      %v2038 = vld [vmem:[%s1618 + $0x60] sm:$0xe]
      %v2039 = vld [vmem:[%s1618 + $0x6c] sm:$0xe]
      %v2040 = vld [vmem:[%s1618 + $0x78] sm:$0xe]
      %v2041 = vld [vmem:[%s1618 + $0x84] sm:$0xe]
      %v2042 = vld [vmem:[%s1618 + $0x90] sm:$0xe]
      %v2043 = vld [vmem:[%s1618 + $0x9c] sm:$0xe]
      %v2044 = vld [vmem:[%s1618 + $0xa8] sm:$0xe]
      %v2045 = vld [vmem:[%s1618 + $0xb4] sm:$0xe]
      %v2046 = vunpack.c.l.bf16 %v2030
      %v2047 = vunpack.c.l.bf16 %v2031
      %v2048 = vunpack.c.l.bf16 %v2032
      %v2049 = vunpack.c.l.bf16 %v2033
      %v2050 = vunpack.c.l.bf16 %v2034
      %v2051 = vunpack.c.l.bf16 %v2035
      %v2052 = vunpack.c.l.bf16 %v2036
      %v2053 = vunpack.c.l.bf16 %v2037
      %v2054 = vunpack.c.l.bf16 %v2038
      %v2055 = vunpack.c.l.bf16 %v2039
      %v2056 = vunpack.c.l.bf16 %v2040
      %v2057 = vunpack.c.l.bf16 %v2041
      %v2058 = vunpack.c.l.bf16 %v2042
      %v2059 = vunpack.c.l.bf16 %v2043
      %v2060 = vunpack.c.l.bf16 %v2044
      %v2061 = vunpack.c.l.bf16 %v2045
      %v2062 = vld [vmem:[%s1683 + $0x2] sm:$0x1]
      %v2063 = vlaneseq
      %v2064 = vshrl.u32 %v2063, 7
      %v2065 = vsub.s32 0, %v2064
      %v2066 = vrot.slane %v2062, %v2065
      %v2067 = vmul.f32 %v2046, %v2066
      %v2068 = vmul.f32 %v1652, %v2066
      %v2069 = vmul.f32 %v1769, %v2066
      %v2070 = vmul.f32 %v2047, %v2066
      %v2071 = vmul.f32 %v1654, %v2066
      %v2072 = vmul.f32 %v1770, %v2066
      %v2073 = vmul.f32 %v2048, %v2066
      %v2074 = vmul.f32 %v1656, %v2066
      %v2075 = vmul.f32 %v1771, %v2066
      %v2076 = vmul.f32 %v2049, %v2066
      %v2077 = vmul.f32 %v1658, %v2066
      %v2078 = vmul.f32 %v1772, %v2066
      %v2079 = vmul.f32 %v2050, %v2066
      %v2080 = vmul.f32 %v1660, %v2066
      %v2081 = vmul.f32 %v1773, %v2066
      %v2082 = vmul.f32 %v2051, %v2066
      %v2083 = vmul.f32 %v1662, %v2066
      %v2084 = vmul.f32 %v1774, %v2066
      %v2085 = vmul.f32 %v2052, %v2066
      %v2086 = vmul.f32 %v1664, %v2066
      %v2087 = vmul.f32 %v1775, %v2066
      %v2088 = vmul.f32 %v2053, %v2066
      %v2089 = vmul.f32 %v1666, %v2066
      %v2090 = vmul.f32 %v1776, %v2066
      %v2091 = vmul.f32 %v2054, %v2066
      %v2092 = vmul.f32 %v1668, %v2066
      %v2093 = vmul.f32 %v1777, %v2066
      %v2094 = vmul.f32 %v2055, %v2066
      %v2095 = vmul.f32 %v1670, %v2066
      %v2096 = vmul.f32 %v1778, %v2066
      %v2097 = vmul.f32 %v2056, %v2066
      %v2098 = vmul.f32 %v1672, %v2066
      %v2099 = vmul.f32 %v1779, %v2066
      %v2100 = vmul.f32 %v2057, %v2066
      %v2101 = vmul.f32 %v1674, %v2066
      %v2102 = vmul.f32 %v1780, %v2066
      %v2103 = vmul.f32 %v2058, %v2066
      %v2104 = vmul.f32 %v1676, %v2066
      %v2105 = vmul.f32 %v1781, %v2066
      %v2106 = vmul.f32 %v2059, %v2066
      %v2107 = vmul.f32 %v1678, %v2066
      %v2108 = vmul.f32 %v1782, %v2066
      %v2109 = vmul.f32 %v2060, %v2066
      %v2110 = vmul.f32 %v1680, %v2066
      %v2111 = vmul.f32 %v1783, %v2066
      %v2112 = vmul.f32 %v2061, %v2066
      %v2113 = vmul.f32 %v1682, %v2066
      %v2114 = vmul.f32 %v1784, %v2066
      %v2163 = vrot.slane %v2067, 2
      %v2164 = vrot.slane %v2068, 2
      %v2165 = vsel %vm784, %v2163, %v2164
      %v2166 = vrot.slane %v2069, 2
      %v2167 = vsel %vm784, %v2164, %v2166
      %v2168 = vrot.slane %v2070, 2
      %v2169 = vrot.slane %v2071, 2
      %v2170 = vsel %vm784, %v2168, %v2169
      %v2171 = vrot.slane %v2072, 2
      %v2172 = vsel %vm784, %v2169, %v2171
      %v2173 = vrot.slane %v2073, 2
      %v2174 = vrot.slane %v2074, 2
      %v2175 = vsel %vm784, %v2173, %v2174
      %v2176 = vrot.slane %v2075, 2
      %v2177 = vsel %vm784, %v2174, %v2176
      %v2178 = vrot.slane %v2076, 2
      %v2179 = vrot.slane %v2077, 2
      %v2180 = vsel %vm784, %v2178, %v2179
      %v2181 = vrot.slane %v2078, 2
      %v2182 = vsel %vm784, %v2179, %v2181
      %v2183 = vrot.slane %v2079, 2
      %v2184 = vrot.slane %v2080, 2
      %v2185 = vsel %vm784, %v2183, %v2184
      %v2186 = vrot.slane %v2081, 2
      %v2187 = vsel %vm784, %v2184, %v2186
      %v2188 = vrot.slane %v2082, 2
      %v2189 = vrot.slane %v2083, 2
      %v2190 = vsel %vm784, %v2188, %v2189
      %v2191 = vrot.slane %v2084, 2
      %v2192 = vsel %vm784, %v2189, %v2191
      %v2193 = vrot.slane %v2085, 2
      %v2194 = vrot.slane %v2086, 2
      %v2195 = vsel %vm784, %v2193, %v2194
      %v2196 = vrot.slane %v2087, 2
      %v2197 = vsel %vm784, %v2194, %v2196
      %v2198 = vrot.slane %v2088, 2
      %v2199 = vrot.slane %v2089, 2
      %v2200 = vsel %vm784, %v2198, %v2199
      %v2201 = vrot.slane %v2090, 2
      %v2202 = vsel %vm784, %v2199, %v2201
      %v2203 = vrot.slane %v2091, 2
      %v2204 = vrot.slane %v2092, 2
      %v2205 = vsel %vm784, %v2203, %v2204
      %v2206 = vrot.slane %v2093, 2
      %v2207 = vsel %vm784, %v2204, %v2206
      %v2208 = vrot.slane %v2094, 2
      %v2209 = vrot.slane %v2095, 2
      %v2210 = vsel %vm784, %v2208, %v2209
      %v2211 = vrot.slane %v2096, 2
      %v2212 = vsel %vm784, %v2209, %v2211
      %v2213 = vrot.slane %v2097, 2
      %v2214 = vrot.slane %v2098, 2
      %v2215 = vsel %vm784, %v2213, %v2214
      %v2216 = vrot.slane %v2099, 2
      %v2217 = vsel %vm784, %v2214, %v2216
      %v2218 = vrot.slane %v2100, 2
      %v2219 = vrot.slane %v2101, 2
      %v2220 = vsel %vm784, %v2218, %v2219
      %v2221 = vrot.slane %v2102, 2
      %v2222 = vsel %vm784, %v2219, %v2221
      %v2223 = vrot.slane %v2103, 2
      %v2224 = vrot.slane %v2104, 2
      %v2225 = vsel %vm784, %v2223, %v2224
      %v2226 = vrot.slane %v2105, 2
      %v2227 = vsel %vm784, %v2224, %v2226
      %v2228 = vrot.slane %v2106, 2
      %v2229 = vrot.slane %v2107, 2
      %v2230 = vsel %vm784, %v2228, %v2229
      %v2231 = vrot.slane %v2108, 2
      %v2232 = vsel %vm784, %v2229, %v2231
      %v2233 = vrot.slane %v2109, 2
      %v2234 = vrot.slane %v2110, 2
      %v2235 = vsel %vm784, %v2233, %v2234
      %v2236 = vrot.slane %v2111, 2
      %v2237 = vsel %vm784, %v2234, %v2236
      %v2238 = vrot.slane %v2112, 2
      %v2239 = vrot.slane %v2113, 2
      %v2240 = vsel %vm784, %v2238, %v2239
      %v2241 = vrot.slane %v2114, 2
      %v2242 = vsel %vm784, %v2239, %v2241
      %v2275 = vadd.f32 %v1998, %v2165
      %v2276 = vadd.f32 %v1999, %v2167
      %v2277 = vadd.f32 %v2000, %v2170
      %v2278 = vadd.f32 %v2001, %v2172
      %v2279 = vadd.f32 %v2002, %v2175
      %v2280 = vadd.f32 %v2003, %v2177
      %v2281 = vadd.f32 %v2004, %v2180
      %v2282 = vadd.f32 %v2005, %v2182
      %v2283 = vadd.f32 %v2006, %v2185
      %v2284 = vadd.f32 %v2007, %v2187
      %v2285 = vadd.f32 %v2008, %v2190
      %v2286 = vadd.f32 %v2009, %v2192
      %v2287 = vadd.f32 %v2010, %v2195
      %v2288 = vadd.f32 %v2011, %v2197
      %v2289 = vadd.f32 %v2012, %v2200
      %v2290 = vadd.f32 %v2013, %v2202
      %v2291 = vadd.f32 %v2014, %v2205
      %v2292 = vadd.f32 %v2015, %v2207
      %v2293 = vadd.f32 %v2016, %v2210
      %v2294 = vadd.f32 %v2017, %v2212
      %v2295 = vadd.f32 %v2018, %v2215
      %v2296 = vadd.f32 %v2019, %v2217
      %v2297 = vadd.f32 %v2020, %v2220
      %v2298 = vadd.f32 %v2021, %v2222
      %v2299 = vadd.f32 %v2022, %v2225
      %v2300 = vadd.f32 %v2023, %v2227
      %v2301 = vadd.f32 %v2024, %v2230
      %v2302 = vadd.f32 %v2025, %v2232
      %v2303 = vadd.f32 %v2026, %v2235
      %v2304 = vadd.f32 %v2027, %v2237
      %v2305 = vadd.f32 %v2028, %v2240
      %v2306 = vadd.f32 %v2029, %v2242
      %v2307 = vmul.f32 %v2275, 0.5
      %v2308 = vmul.f32 %v2276, 0.5
      %v2309 = vmul.f32 %v2277, 0.5
      %v2310 = vmul.f32 %v2278, 0.5
      %v2311 = vmul.f32 %v2279, 0.5
      %v2312 = vmul.f32 %v2280, 0.5
      %v2313 = vmul.f32 %v2281, 0.5
      %v2314 = vmul.f32 %v2282, 0.5
      %v2315 = vmul.f32 %v2283, 0.5
      %v2316 = vmul.f32 %v2284, 0.5
      %v2317 = vmul.f32 %v2285, 0.5
      %v2318 = vmul.f32 %v2286, 0.5
      %v2319 = vmul.f32 %v2287, 0.5
      %v2320 = vmul.f32 %v2288, 0.5
      %v2321 = vmul.f32 %v2289, 0.5
      %v2322 = vmul.f32 %v2290, 0.5
      %v2323 = vmul.f32 %v2291, 0.5
      %v2324 = vmul.f32 %v2292, 0.5
      %v2325 = vmul.f32 %v2293, 0.5
      %v2326 = vmul.f32 %v2294, 0.5
      %v2327 = vmul.f32 %v2295, 0.5
      %v2328 = vmul.f32 %v2296, 0.5
      %v2329 = vmul.f32 %v2297, 0.5
      %v2330 = vmul.f32 %v2298, 0.5
      %v2331 = vmul.f32 %v2299, 0.5
      %v2332 = vmul.f32 %v2300, 0.5
      %v2333 = vmul.f32 %v2301, 0.5
      %v2334 = vmul.f32 %v2302, 0.5
      %v2335 = vmul.f32 %v2303, 0.5
      %v2336 = vmul.f32 %v2304, 0.5
      %v2337 = vmul.f32 %v2305, 0.5
      %v2338 = vmul.f32 %v2306, 0.5
      %v2339 = vmul.f32 %v2275, 0.70710677
      %v2340 = vmul.f32 %v2276, 0.70710677
      %v2341 = vmul.f32 %v2277, 0.70710677
      %v2342 = vmul.f32 %v2278, 0.70710677
      %v2343 = vmul.f32 %v2279, 0.70710677
      %v2344 = vmul.f32 %v2280, 0.70710677
      %v2345 = vmul.f32 %v2281, 0.70710677
      %v2346 = vmul.f32 %v2282, 0.70710677
      %v2347 = vmul.f32 %v2283, 0.70710677
      %v2348 = vmul.f32 %v2284, 0.70710677
      %v2349 = vmul.f32 %v2285, 0.70710677
      %v2350 = vmul.f32 %v2286, 0.70710677
      %v2351 = vmul.f32 %v2287, 0.70710677
      %v2352 = vmul.f32 %v2288, 0.70710677
      %v2353 = vmul.f32 %v2289, 0.70710677
      %v2354 = vmul.f32 %v2290, 0.70710677
      %v2355 = vmul.f32 %v2291, 0.70710677
      %v2356 = vmul.f32 %v2292, 0.70710677
      %v2357 = vmul.f32 %v2293, 0.70710677
      %v2358 = vmul.f32 %v2294, 0.70710677
      %v2359 = vmul.f32 %v2295, 0.70710677
      %v2360 = vmul.f32 %v2296, 0.70710677
      %v2361 = vmul.f32 %v2297, 0.70710677
      %v2362 = vmul.f32 %v2298, 0.70710677
      %v2363 = vmul.f32 %v2299, 0.70710677
      %v2364 = vmul.f32 %v2300, 0.70710677
      %v2365 = vmul.f32 %v2301, 0.70710677
      %v2366 = vmul.f32 %v2302, 0.70710677
      %v2367 = vmul.f32 %v2303, 0.70710677
      %v2368 = vmul.f32 %v2304, 0.70710677
      %v2369 = vmul.f32 %v2305, 0.70710677
      %v2370 = vmul.f32 %v2306, 0.70710677
      %v2371 = vand.u32 2147483647, %v2339
      %v2372 = vand.u32 2147483647, %v2340
      %v2373 = vand.u32 2147483647, %v2341
      %v2374 = vand.u32 2147483647, %v2342
      %v2375 = vand.u32 2147483647, %v2343
      %v2376 = vand.u32 2147483647, %v2344
      %v2377 = vand.u32 2147483647, %v2345
      %v2378 = vand.u32 2147483647, %v2346
      %v2379 = vand.u32 2147483647, %v2347
      %v2380 = vand.u32 2147483647, %v2348
      %v2381 = vand.u32 2147483647, %v2349
      %v2382 = vand.u32 2147483647, %v2350
      %v2383 = vand.u32 2147483647, %v2351
      %v2384 = vand.u32 2147483647, %v2352
      %v2385 = vand.u32 2147483647, %v2353
      %v2386 = vand.u32 2147483647, %v2354
      %v2387 = vand.u32 2147483647, %v2355
      %v2388 = vand.u32 2147483647, %v2356
      %v2389 = vand.u32 2147483647, %v2357
      %v2390 = vand.u32 2147483647, %v2358
      %v2391 = vand.u32 2147483647, %v2359
      %v2392 = vand.u32 2147483647, %v2360
      %v2393 = vand.u32 2147483647, %v2361
      %v2394 = vand.u32 2147483647, %v2362
      %v2395 = vand.u32 2147483647, %v2363
      %v2396 = vand.u32 2147483647, %v2364
      %v2397 = vand.u32 2147483647, %v2365
      %v2398 = vand.u32 2147483647, %v2366
      %v2399 = vand.u32 2147483647, %v2367
      %v2400 = vand.u32 2147483647, %v2368
      %v2401 = vand.u32 2147483647, %v2369
      %v2402 = vand.u32 2147483647, %v2370
      %v2403 = vmul.f32 %v2371, 0.3275911
      %v2404 = vmul.f32 %v2372, 0.3275911
      %v2405 = vmul.f32 %v2373, 0.3275911
      %v2406 = vmul.f32 %v2374, 0.3275911
      %v2407 = vmul.f32 %v2375, 0.3275911
      %v2408 = vmul.f32 %v2376, 0.3275911
      %v2409 = vmul.f32 %v2377, 0.3275911
      %v2410 = vmul.f32 %v2378, 0.3275911
      %v2411 = vmul.f32 %v2379, 0.3275911
      %v2412 = vmul.f32 %v2380, 0.3275911
      %v2413 = vmul.f32 %v2381, 0.3275911
      %v2414 = vmul.f32 %v2382, 0.3275911
      %v2415 = vmul.f32 %v2383, 0.3275911
      %v2416 = vmul.f32 %v2384, 0.3275911
      %v2417 = vmul.f32 %v2385, 0.3275911
      %v2418 = vmul.f32 %v2386, 0.3275911
      %v2419 = vmul.f32 %v2387, 0.3275911
      %v2420 = vmul.f32 %v2388, 0.3275911
      %v2421 = vmul.f32 %v2389, 0.3275911
      %v2422 = vmul.f32 %v2390, 0.3275911
      %v2423 = vmul.f32 %v2391, 0.3275911
      %v2424 = vmul.f32 %v2392, 0.3275911
      %v2425 = vmul.f32 %v2393, 0.3275911
      %v2426 = vmul.f32 %v2394, 0.3275911
      %v2427 = vmul.f32 %v2395, 0.3275911
      %v2428 = vmul.f32 %v2396, 0.3275911
      %v2429 = vmul.f32 %v2397, 0.3275911
      %v2430 = vmul.f32 %v2398, 0.3275911
      %v2431 = vmul.f32 %v2399, 0.3275911
      %v2432 = vmul.f32 %v2400, 0.3275911
      %v2433 = vmul.f32 %v2401, 0.3275911
      %v2434 = vmul.f32 %v2402, 0.3275911
      %v2435 = vadd.f32 %v2403, 1.0
      %v2436 = vadd.f32 %v2404, 1.0
      %v2437 = vadd.f32 %v2405, 1.0
      %v2438 = vadd.f32 %v2406, 1.0
      %v2439 = vadd.f32 %v2407, 1.0
      %v2440 = vadd.f32 %v2408, 1.0
      %v2441 = vadd.f32 %v2409, 1.0
      %v2442 = vadd.f32 %v2410, 1.0
      %v2443 = vadd.f32 %v2411, 1.0
      %v2444 = vadd.f32 %v2412, 1.0
      %v2445 = vadd.f32 %v2413, 1.0
      %v2446 = vadd.f32 %v2414, 1.0
      %v2447 = vadd.f32 %v2415, 1.0
      %v2448 = vadd.f32 %v2416, 1.0
      %v2449 = vadd.f32 %v2417, 1.0
      %v2450 = vadd.f32 %v2418, 1.0
      %v2451 = vadd.f32 %v2419, 1.0
      %v2452 = vadd.f32 %v2420, 1.0
      %v2453 = vadd.f32 %v2421, 1.0
      %v2454 = vadd.f32 %v2422, 1.0
      %v2455 = vadd.f32 %v2423, 1.0
      %v2456 = vadd.f32 %v2424, 1.0
      %v2457 = vadd.f32 %v2425, 1.0
      %v2458 = vadd.f32 %v2426, 1.0
      %v2459 = vadd.f32 %v2427, 1.0
      %v2460 = vadd.f32 %v2428, 1.0
      %v2461 = vadd.f32 %v2429, 1.0
      %v2462 = vadd.f32 %v2430, 1.0
      %v2463 = vadd.f32 %v2431, 1.0
      %v2464 = vadd.f32 %v2432, 1.0
      %v2465 = vadd.f32 %v2433, 1.0
      %v2466 = vadd.f32 %v2434, 1.0
      %v2467 = vrcp.pop %v2435
      %v2468 = vmul.f32 1.0, %v2467
      %v2469 = vrcp.pop %v2436
      %v2470 = vmul.f32 1.0, %v2469
      %v2471 = vrcp.pop %v2437
      %v2472 = vmul.f32 1.0, %v2471
      %v2473 = vrcp.pop %v2438
      %v2474 = vmul.f32 1.0, %v2473
      %v2475 = vrcp.pop %v2439
      %v2476 = vmul.f32 1.0, %v2475
      %v2477 = vrcp.pop %v2440
      %v2478 = vmul.f32 1.0, %v2477
      %v2479 = vrcp.pop %v2441
      %v2480 = vmul.f32 1.0, %v2479
      %v2481 = vrcp.pop %v2442
      %v2482 = vmul.f32 1.0, %v2481
      %v2483 = vrcp.pop %v2443
      %v2484 = vmul.f32 1.0, %v2483
      %v2485 = vrcp.pop %v2444
      %v2486 = vmul.f32 1.0, %v2485
      %v2487 = vrcp.pop %v2445
      %v2488 = vmul.f32 1.0, %v2487
      %v2489 = vrcp.pop %v2446
      %v2490 = vmul.f32 1.0, %v2489
      %v2491 = vrcp.pop %v2447
      %v2492 = vmul.f32 1.0, %v2491
      %v2493 = vrcp.pop %v2448
      %v2494 = vmul.f32 1.0, %v2493
      %v2495 = vrcp.pop %v2449
      %v2496 = vmul.f32 1.0, %v2495
      %v2497 = vrcp.pop %v2450
      %v2498 = vmul.f32 1.0, %v2497
      %v2499 = vrcp.pop %v2451
      %v2500 = vmul.f32 1.0, %v2499
      %v2501 = vrcp.pop %v2452
      %v2502 = vmul.f32 1.0, %v2501
      %v2503 = vrcp.pop %v2453
      %v2504 = vmul.f32 1.0, %v2503
      %v2505 = vrcp.pop %v2454
      %v2506 = vmul.f32 1.0, %v2505
      %v2507 = vrcp.pop %v2455
      %v2508 = vmul.f32 1.0, %v2507
      %v2509 = vrcp.pop %v2456
      %v2510 = vmul.f32 1.0, %v2509
      %v2511 = vrcp.pop %v2457
      %v2512 = vmul.f32 1.0, %v2511
      %v2513 = vrcp.pop %v2458
      %v2514 = vmul.f32 1.0, %v2513
      %v2515 = vrcp.pop %v2459
      %v2516 = vmul.f32 1.0, %v2515
      %v2517 = vrcp.pop %v2460
      %v2518 = vmul.f32 1.0, %v2517
      %v2519 = vrcp.pop %v2461
      %v2520 = vmul.f32 1.0, %v2519
      %v2521 = vrcp.pop %v2462
      %v2522 = vmul.f32 1.0, %v2521
      %v2523 = vrcp.pop %v2463
      %v2524 = vmul.f32 1.0, %v2523
      %v2525 = vrcp.pop %v2464
      %v2526 = vmul.f32 1.0, %v2525
      %v2527 = vrcp.pop %v2465
      %v2528 = vmul.f32 1.0, %v2527
      %v2529 = vrcp.pop %v2466
      %v2530 = vmul.f32 1.0, %v2529
      %v2531 = vmul.f32 %v2468, 1.0614054
      %v2532 = vmul.f32 %v2470, 1.0614054
      %v2533 = vmul.f32 %v2472, 1.0614054
      %v2534 = vmul.f32 %v2474, 1.0614054
      %v2535 = vmul.f32 %v2476, 1.0614054
      %v2536 = vmul.f32 %v2478, 1.0614054
      %v2537 = vmul.f32 %v2480, 1.0614054
      %v2538 = vmul.f32 %v2482, 1.0614054
      %v2539 = vmul.f32 %v2484, 1.0614054
      %v2540 = vmul.f32 %v2486, 1.0614054
      %v2541 = vmul.f32 %v2488, 1.0614054
      %v2542 = vmul.f32 %v2490, 1.0614054
      %v2543 = vmul.f32 %v2492, 1.0614054
      %v2544 = vmul.f32 %v2494, 1.0614054
      %v2545 = vmul.f32 %v2496, 1.0614054
      %v2546 = vmul.f32 %v2498, 1.0614054
      %v2547 = vmul.f32 %v2500, 1.0614054
      %v2548 = vmul.f32 %v2502, 1.0614054
      %v2549 = vmul.f32 %v2504, 1.0614054
      %v2550 = vmul.f32 %v2506, 1.0614054
      %v2551 = vmul.f32 %v2508, 1.0614054
      %v2552 = vmul.f32 %v2510, 1.0614054
      %v2553 = vmul.f32 %v2512, 1.0614054
      %v2554 = vmul.f32 %v2514, 1.0614054
      %v2555 = vmul.f32 %v2516, 1.0614054
      %v2556 = vmul.f32 %v2518, 1.0614054
      %v2557 = vmul.f32 %v2520, 1.0614054
      %v2558 = vmul.f32 %v2522, 1.0614054
      %v2559 = vmul.f32 %v2524, 1.0614054
      %v2560 = vmul.f32 %v2526, 1.0614054
      %v2561 = vmul.f32 %v2528, 1.0614054
      %v2562 = vmul.f32 %v2530, 1.0614054
      %v2563 = vadd.f32 %v2531, -1.4531521
      %v2564 = vadd.f32 %v2532, -1.4531521
      %v2565 = vadd.f32 %v2533, -1.4531521
      %v2566 = vadd.f32 %v2534, -1.4531521
      %v2567 = vadd.f32 %v2535, -1.4531521
      %v2568 = vadd.f32 %v2536, -1.4531521
      %v2569 = vadd.f32 %v2537, -1.4531521
      %v2570 = vadd.f32 %v2538, -1.4531521
      %v2571 = vadd.f32 %v2539, -1.4531521
      %v2572 = vadd.f32 %v2540, -1.4531521
      %v2573 = vadd.f32 %v2541, -1.4531521
      %v2574 = vadd.f32 %v2542, -1.4531521
      %v2575 = vadd.f32 %v2543, -1.4531521
      %v2576 = vadd.f32 %v2544, -1.4531521
      %v2577 = vadd.f32 %v2545, -1.4531521
      %v2578 = vadd.f32 %v2546, -1.4531521
      %v2579 = vadd.f32 %v2547, -1.4531521
      %v2580 = vadd.f32 %v2548, -1.4531521
      %v2581 = vadd.f32 %v2549, -1.4531521
      %v2582 = vadd.f32 %v2550, -1.4531521
      %v2583 = vadd.f32 %v2551, -1.4531521
      %v2584 = vadd.f32 %v2552, -1.4531521
      %v2585 = vadd.f32 %v2553, -1.4531521
      %v2586 = vadd.f32 %v2554, -1.4531521
      %v2587 = vadd.f32 %v2555, -1.4531521
      %v2588 = vadd.f32 %v2556, -1.4531521
      %v2589 = vadd.f32 %v2557, -1.4531521
      %v2590 = vadd.f32 %v2558, -1.4531521
      %v2591 = vadd.f32 %v2559, -1.4531521
      %v2592 = vadd.f32 %v2560, -1.4531521
      %v2593 = vadd.f32 %v2561, -1.4531521
      %v2594 = vadd.f32 %v2562, -1.4531521
      %v2595 = vmul.f32 %v2563, %v2468
      %v2596 = vmul.f32 %v2564, %v2470
      %v2597 = vmul.f32 %v2565, %v2472
      %v2598 = vmul.f32 %v2566, %v2474
      %v2599 = vmul.f32 %v2567, %v2476
      %v2600 = vmul.f32 %v2568, %v2478
      %v2601 = vmul.f32 %v2569, %v2480
      %v2602 = vmul.f32 %v2570, %v2482
      %v2603 = vmul.f32 %v2571, %v2484
      %v2604 = vmul.f32 %v2572, %v2486
      %v2605 = vmul.f32 %v2573, %v2488
      %v2606 = vmul.f32 %v2574, %v2490
      %v2607 = vmul.f32 %v2575, %v2492
      %v2608 = vmul.f32 %v2576, %v2494
      %v2609 = vmul.f32 %v2577, %v2496
      %v2610 = vmul.f32 %v2578, %v2498
      %v2611 = vmul.f32 %v2579, %v2500
      %v2612 = vmul.f32 %v2580, %v2502
      %v2613 = vmul.f32 %v2581, %v2504
      %v2614 = vmul.f32 %v2582, %v2506
      %v2615 = vmul.f32 %v2583, %v2508
      %v2616 = vmul.f32 %v2584, %v2510
      %v2617 = vmul.f32 %v2585, %v2512
      %v2618 = vmul.f32 %v2586, %v2514
      %v2619 = vmul.f32 %v2587, %v2516
      %v2620 = vmul.f32 %v2588, %v2518
      %v2621 = vmul.f32 %v2589, %v2520
      %v2622 = vmul.f32 %v2590, %v2522
      %v2623 = vmul.f32 %v2591, %v2524
      %v2624 = vmul.f32 %v2592, %v2526
      %v2625 = vmul.f32 %v2593, %v2528
      %v2626 = vmul.f32 %v2594, %v2530
      %v2627 = vadd.f32 %v2595, 1.4214138
      %v2628 = vadd.f32 %v2596, 1.4214138
      %v2629 = vadd.f32 %v2597, 1.4214138
      %v2630 = vadd.f32 %v2598, 1.4214138
      %v2631 = vadd.f32 %v2599, 1.4214138
      %v2632 = vadd.f32 %v2600, 1.4214138
      %v2633 = vadd.f32 %v2601, 1.4214138
      %v2634 = vadd.f32 %v2602, 1.4214138
      %v2635 = vadd.f32 %v2603, 1.4214138
      %v2636 = vadd.f32 %v2604, 1.4214138
      %v2637 = vadd.f32 %v2605, 1.4214138
      %v2638 = vadd.f32 %v2606, 1.4214138
      %v2639 = vadd.f32 %v2607, 1.4214138
      %v2640 = vadd.f32 %v2608, 1.4214138
      %v2641 = vadd.f32 %v2609, 1.4214138
      %v2642 = vadd.f32 %v2610, 1.4214138
      %v2643 = vadd.f32 %v2611, 1.4214138
      %v2644 = vadd.f32 %v2612, 1.4214138
      %v2645 = vadd.f32 %v2613, 1.4214138
      %v2646 = vadd.f32 %v2614, 1.4214138
      %v2647 = vadd.f32 %v2615, 1.4214138
      %v2648 = vadd.f32 %v2616, 1.4214138
      %v2649 = vadd.f32 %v2617, 1.4214138
      %v2650 = vadd.f32 %v2618, 1.4214138
      %v2651 = vadd.f32 %v2619, 1.4214138
      %v2652 = vadd.f32 %v2620, 1.4214138
      %v2653 = vadd.f32 %v2621, 1.4214138
      %v2654 = vadd.f32 %v2622, 1.4214138
      %v2655 = vadd.f32 %v2623, 1.4214138
      %v2656 = vadd.f32 %v2624, 1.4214138
      %v2657 = vadd.f32 %v2625, 1.4214138
      %v2658 = vadd.f32 %v2626, 1.4214138
      %v2659 = vmul.f32 %v2627, %v2468
      %v2660 = vmul.f32 %v2628, %v2470
      %v2661 = vmul.f32 %v2629, %v2472
      %v2662 = vmul.f32 %v2630, %v2474
      %v2663 = vmul.f32 %v2631, %v2476
      %v2664 = vmul.f32 %v2632, %v2478
      %v2665 = vmul.f32 %v2633, %v2480
      %v2666 = vmul.f32 %v2634, %v2482
      %v2667 = vmul.f32 %v2635, %v2484
      %v2668 = vmul.f32 %v2636, %v2486
      %v2669 = vmul.f32 %v2637, %v2488
      %v2670 = vmul.f32 %v2638, %v2490
      %v2671 = vmul.f32 %v2639, %v2492
      %v2672 = vmul.f32 %v2640, %v2494
      %v2673 = vmul.f32 %v2641, %v2496
      %v2674 = vmul.f32 %v2642, %v2498
      %v2675 = vmul.f32 %v2643, %v2500
      %v2676 = vmul.f32 %v2644, %v2502
      %v2677 = vmul.f32 %v2645, %v2504
      %v2678 = vmul.f32 %v2646, %v2506
      %v2679 = vmul.f32 %v2647, %v2508
      %v2680 = vmul.f32 %v2648, %v2510
      %v2681 = vmul.f32 %v2649, %v2512
      %v2682 = vmul.f32 %v2650, %v2514
      %v2683 = vmul.f32 %v2651, %v2516
      %v2684 = vmul.f32 %v2652, %v2518
      %v2685 = vmul.f32 %v2653, %v2520
      %v2686 = vmul.f32 %v2654, %v2522
      %v2687 = vmul.f32 %v2655, %v2524
      %v2688 = vmul.f32 %v2656, %v2526
      %v2689 = vmul.f32 %v2657, %v2528
      %v2690 = vmul.f32 %v2658, %v2530
      %v2691 = vadd.f32 %v2659, -0.28449672
      %v2692 = vadd.f32 %v2660, -0.28449672
      %v2693 = vadd.f32 %v2661, -0.28449672
      %v2694 = vadd.f32 %v2662, -0.28449672
      %v2695 = vadd.f32 %v2663, -0.28449672
      %v2696 = vadd.f32 %v2664, -0.28449672
      %v2697 = vadd.f32 %v2665, -0.28449672
      %v2698 = vadd.f32 %v2666, -0.28449672
      %v2699 = vadd.f32 %v2667, -0.28449672
      %v2700 = vadd.f32 %v2668, -0.28449672
      %v2701 = vadd.f32 %v2669, -0.28449672
      %v2702 = vadd.f32 %v2670, -0.28449672
      %v2703 = vadd.f32 %v2671, -0.28449672
      %v2704 = vadd.f32 %v2672, -0.28449672
      %v2705 = vadd.f32 %v2673, -0.28449672
      %v2706 = vadd.f32 %v2674, -0.28449672
      %v2707 = vadd.f32 %v2675, -0.28449672
      %v2708 = vadd.f32 %v2676, -0.28449672
      %v2709 = vadd.f32 %v2677, -0.28449672
      %v2710 = vadd.f32 %v2678, -0.28449672
      %v2711 = vadd.f32 %v2679, -0.28449672
      %v2712 = vadd.f32 %v2680, -0.28449672
      %v2713 = vadd.f32 %v2681, -0.28449672
      %v2714 = vadd.f32 %v2682, -0.28449672
      %v2715 = vadd.f32 %v2683, -0.28449672
      %v2716 = vadd.f32 %v2684, -0.28449672
      %v2717 = vadd.f32 %v2685, -0.28449672
      %v2718 = vadd.f32 %v2686, -0.28449672
      %v2719 = vadd.f32 %v2687, -0.28449672
      %v2720 = vadd.f32 %v2688, -0.28449672
      %v2721 = vadd.f32 %v2689, -0.28449672
      %v2722 = vadd.f32 %v2690, -0.28449672
      %v2723 = vmul.f32 %v2691, %v2468
      %v2724 = vmul.f32 %v2692, %v2470
      %v2725 = vmul.f32 %v2693, %v2472
      %v2726 = vmul.f32 %v2694, %v2474
      %v2727 = vmul.f32 %v2695, %v2476
      %v2728 = vmul.f32 %v2696, %v2478
      %v2729 = vmul.f32 %v2697, %v2480
      %v2730 = vmul.f32 %v2698, %v2482
      %v2731 = vmul.f32 %v2699, %v2484
      %v2732 = vmul.f32 %v2700, %v2486
      %v2733 = vmul.f32 %v2701, %v2488
      %v2734 = vmul.f32 %v2702, %v2490
      %v2735 = vmul.f32 %v2703, %v2492
      %v2736 = vmul.f32 %v2704, %v2494
      %v2737 = vmul.f32 %v2705, %v2496
      %v2738 = vmul.f32 %v2706, %v2498
      %v2739 = vmul.f32 %v2707, %v2500
      %v2740 = vmul.f32 %v2708, %v2502
      %v2741 = vmul.f32 %v2709, %v2504
      %v2742 = vmul.f32 %v2710, %v2506
      %v2743 = vmul.f32 %v2711, %v2508
      %v2744 = vmul.f32 %v2712, %v2510
      %v2745 = vmul.f32 %v2713, %v2512
      %v2746 = vmul.f32 %v2714, %v2514
      %v2747 = vmul.f32 %v2715, %v2516
      %v2748 = vmul.f32 %v2716, %v2518
      %v2749 = vmul.f32 %v2717, %v2520
      %v2750 = vmul.f32 %v2718, %v2522
      %v2751 = vmul.f32 %v2719, %v2524
      %v2752 = vmul.f32 %v2720, %v2526
      %v2753 = vmul.f32 %v2721, %v2528
      %v2754 = vmul.f32 %v2722, %v2530
      %v2755 = vadd.f32 %v2723, 0.2548296
      %v2756 = vadd.f32 %v2724, 0.2548296
      %v2757 = vadd.f32 %v2725, 0.2548296
      %v2758 = vadd.f32 %v2726, 0.2548296
      %v2759 = vadd.f32 %v2727, 0.2548296
      %v2760 = vadd.f32 %v2728, 0.2548296
      %v2761 = vadd.f32 %v2729, 0.2548296
      %v2762 = vadd.f32 %v2730, 0.2548296
      %v2763 = vadd.f32 %v2731, 0.2548296
      %v2764 = vadd.f32 %v2732, 0.2548296
      %v2765 = vadd.f32 %v2733, 0.2548296
      %v2766 = vadd.f32 %v2734, 0.2548296
      %v2767 = vadd.f32 %v2735, 0.2548296
      %v2768 = vadd.f32 %v2736, 0.2548296
      %v2769 = vadd.f32 %v2737, 0.2548296
      %v2770 = vadd.f32 %v2738, 0.2548296
      %v2771 = vadd.f32 %v2739, 0.2548296
      %v2772 = vadd.f32 %v2740, 0.2548296
      %v2773 = vadd.f32 %v2741, 0.2548296
      %v2774 = vadd.f32 %v2742, 0.2548296
      %v2775 = vadd.f32 %v2743, 0.2548296
      %v2776 = vadd.f32 %v2744, 0.2548296
      %v2777 = vadd.f32 %v2745, 0.2548296
      %v2778 = vadd.f32 %v2746, 0.2548296
      %v2779 = vadd.f32 %v2747, 0.2548296
      %v2780 = vadd.f32 %v2748, 0.2548296
      %v2781 = vadd.f32 %v2749, 0.2548296
      %v2782 = vadd.f32 %v2750, 0.2548296
      %v2783 = vadd.f32 %v2751, 0.2548296
      %v2784 = vadd.f32 %v2752, 0.2548296
      %v2785 = vadd.f32 %v2753, 0.2548296
      %v2786 = vadd.f32 %v2754, 0.2548296
      %v2787 = vmul.f32 %v2755, %v2468
      %v2788 = vmul.f32 %v2756, %v2470
      %v2789 = vmul.f32 %v2757, %v2472
      %v2790 = vmul.f32 %v2758, %v2474
      %v2791 = vmul.f32 %v2759, %v2476
      %v2792 = vmul.f32 %v2760, %v2478
      %v2793 = vmul.f32 %v2761, %v2480
      %v2794 = vmul.f32 %v2762, %v2482
      %v2795 = vmul.f32 %v2763, %v2484
      %v2796 = vmul.f32 %v2764, %v2486
      %v2797 = vmul.f32 %v2765, %v2488
      %v2798 = vmul.f32 %v2766, %v2490
      %v2799 = vmul.f32 %v2767, %v2492
      %v2800 = vmul.f32 %v2768, %v2494
      %v2801 = vmul.f32 %v2769, %v2496
      %v2802 = vmul.f32 %v2770, %v2498
      %v2803 = vmul.f32 %v2771, %v2500
      %v2804 = vmul.f32 %v2772, %v2502
      %v2805 = vmul.f32 %v2773, %v2504
      %v2806 = vmul.f32 %v2774, %v2506
      %v2807 = vmul.f32 %v2775, %v2508
      %v2808 = vmul.f32 %v2776, %v2510
      %v2809 = vmul.f32 %v2777, %v2512
      %v2810 = vmul.f32 %v2778, %v2514
      %v2811 = vmul.f32 %v2779, %v2516
      %v2812 = vmul.f32 %v2780, %v2518
      %v2813 = vmul.f32 %v2781, %v2520
      %v2814 = vmul.f32 %v2782, %v2522
      %v2815 = vmul.f32 %v2783, %v2524
      %v2816 = vmul.f32 %v2784, %v2526
      %v2817 = vmul.f32 %v2785, %v2528
      %v2818 = vmul.f32 %v2786, %v2530
      %v2819 = vsub.f32 0.0, %v2371
      %v2820 = vsub.f32 0.0, %v2372
      %v2821 = vsub.f32 0.0, %v2373
      %v2822 = vsub.f32 0.0, %v2374
      %v2823 = vsub.f32 0.0, %v2375
      %v2824 = vsub.f32 0.0, %v2376
      %v2825 = vsub.f32 0.0, %v2377
      %v2826 = vsub.f32 0.0, %v2378
      %v2827 = vsub.f32 0.0, %v2379
      %v2828 = vsub.f32 0.0, %v2380
      %v2829 = vsub.f32 0.0, %v2381
      %v2830 = vsub.f32 0.0, %v2382
      %v2831 = vsub.f32 0.0, %v2383
      %v2832 = vsub.f32 0.0, %v2384
      %v2833 = vsub.f32 0.0, %v2385
      %v2834 = vsub.f32 0.0, %v2386
      %v2835 = vsub.f32 0.0, %v2387
      %v2836 = vsub.f32 0.0, %v2388
      %v2837 = vsub.f32 0.0, %v2389
      %v2838 = vsub.f32 0.0, %v2390
      %v2839 = vsub.f32 0.0, %v2391
      %v2840 = vsub.f32 0.0, %v2392
      %v2841 = vsub.f32 0.0, %v2393
      %v2842 = vsub.f32 0.0, %v2394
      %v2843 = vsub.f32 0.0, %v2395
      %v2844 = vsub.f32 0.0, %v2396
      %v2845 = vsub.f32 0.0, %v2397
      %v2846 = vsub.f32 0.0, %v2398
      %v2847 = vsub.f32 0.0, %v2399
      %v2848 = vsub.f32 0.0, %v2400
      %v2849 = vsub.f32 0.0, %v2401
      %v2850 = vsub.f32 0.0, %v2402
      %v2851 = vmul.f32 %v2819, %v2371
      %v2852 = vmul.f32 %v2820, %v2372
      %v2853 = vmul.f32 %v2821, %v2373
      %v2854 = vmul.f32 %v2822, %v2374
      %v2855 = vmul.f32 %v2823, %v2375
      %v2856 = vmul.f32 %v2824, %v2376
      %v2857 = vmul.f32 %v2825, %v2377
      %v2858 = vmul.f32 %v2826, %v2378
      %v2859 = vmul.f32 %v2827, %v2379
      %v2860 = vmul.f32 %v2828, %v2380
      %v2861 = vmul.f32 %v2829, %v2381
      %v2862 = vmul.f32 %v2830, %v2382
      %v2863 = vmul.f32 %v2831, %v2383
      %v2864 = vmul.f32 %v2832, %v2384
      %v2865 = vmul.f32 %v2833, %v2385
      %v2866 = vmul.f32 %v2834, %v2386
      %v2867 = vmul.f32 %v2835, %v2387
      %v2868 = vmul.f32 %v2836, %v2388
      %v2869 = vmul.f32 %v2837, %v2389
      %v2870 = vmul.f32 %v2838, %v2390
      %v2871 = vmul.f32 %v2839, %v2391
      %v2872 = vmul.f32 %v2840, %v2392
      %v2873 = vmul.f32 %v2841, %v2393
      %v2874 = vmul.f32 %v2842, %v2394
      %v2875 = vmul.f32 %v2843, %v2395
      %v2876 = vmul.f32 %v2844, %v2396
      %v2877 = vmul.f32 %v2845, %v2397
      %v2878 = vmul.f32 %v2846, %v2398
      %v2879 = vmul.f32 %v2847, %v2399
      %v2880 = vmul.f32 %v2848, %v2400
      %v2881 = vmul.f32 %v2849, %v2401
      %v2882 = vmul.f32 %v2850, %v2402
      %v2883 = vmul.f32 %v2851, 1.442695
      %v2884 = vpow.pop %v2883
      %v2885 = vmul.f32 %v2852, 1.442695
      %v2886 = vpow.pop %v2885
      %v2887 = vmul.f32 %v2853, 1.442695
      %v2888 = vpow.pop %v2887
      %v2889 = vmul.f32 %v2854, 1.442695
      %v2890 = vpow.pop %v2889
      %v2891 = vmul.f32 %v2855, 1.442695
      %v2892 = vpow.pop %v2891
      %v2893 = vmul.f32 %v2856, 1.442695
      %v2894 = vpow.pop %v2893
      %v2895 = vmul.f32 %v2857, 1.442695
      %v2896 = vpow.pop %v2895
      %v2897 = vmul.f32 %v2858, 1.442695
      %v2898 = vpow.pop %v2897
      %v2899 = vmul.f32 %v2859, 1.442695
      %v2900 = vpow.pop %v2899
      %v2901 = vmul.f32 %v2860, 1.442695
      %v2902 = vpow.pop %v2901
      %v2903 = vmul.f32 %v2861, 1.442695
      %v2904 = vpow.pop %v2903
      %v2905 = vmul.f32 %v2862, 1.442695
      %v2906 = vpow.pop %v2905
      %v2907 = vmul.f32 %v2863, 1.442695
      %v2908 = vpow.pop %v2907
      %v2909 = vmul.f32 %v2864, 1.442695
      %v2910 = vpow.pop %v2909
      %v2911 = vmul.f32 %v2865, 1.442695
      %v2912 = vpow.pop %v2911
      %v2913 = vmul.f32 %v2866, 1.442695
      %v2914 = vpow.pop %v2913
      %v2915 = vmul.f32 %v2867, 1.442695
      %v2916 = vpow.pop %v2915
      %v2917 = vmul.f32 %v2868, 1.442695
      %v2918 = vpow.pop %v2917
      %v2919 = vmul.f32 %v2869, 1.442695
      %v2920 = vpow.pop %v2919
      %v2921 = vmul.f32 %v2870, 1.442695
      %v2922 = vpow.pop %v2921
      %v2923 = vmul.f32 %v2871, 1.442695
      %v2924 = vpow.pop %v2923
      %v2925 = vmul.f32 %v2872, 1.442695
      %v2926 = vpow.pop %v2925
      %v2927 = vmul.f32 %v2873, 1.442695
      %v2928 = vpow.pop %v2927
      %v2929 = vmul.f32 %v2874, 1.442695
      %v2930 = vpow.pop %v2929
      %v2931 = vmul.f32 %v2875, 1.442695
      %v2932 = vpow.pop %v2931
      %v2933 = vmul.f32 %v2876, 1.442695
      %v2934 = vpow.pop %v2933
      %v2935 = vmul.f32 %v2877, 1.442695
      %v2936 = vpow.pop %v2935
      %v2937 = vmul.f32 %v2878, 1.442695
      %v2938 = vpow.pop %v2937
      %v2939 = vmul.f32 %v2879, 1.442695
      %v2940 = vpow.pop %v2939
      %v2941 = vmul.f32 %v2880, 1.442695
      %v2942 = vpow.pop %v2941
      %v2943 = vmul.f32 %v2881, 1.442695
      %v2944 = vpow.pop %v2943
      %v2945 = vmul.f32 %v2882, 1.442695
      %v2946 = vpow.pop %v2945
      %v2947 = vmul.f32 %v2787, %v2884
      %v2948 = vmul.f32 %v2788, %v2886
      %v2949 = vmul.f32 %v2789, %v2888
      %v2950 = vmul.f32 %v2790, %v2890
      %v2951 = vmul.f32 %v2791, %v2892
      %v2952 = vmul.f32 %v2792, %v2894
      %v2953 = vmul.f32 %v2793, %v2896
      %v2954 = vmul.f32 %v2794, %v2898
      %v2955 = vmul.f32 %v2795, %v2900
      %v2956 = vmul.f32 %v2796, %v2902
      %v2957 = vmul.f32 %v2797, %v2904
      %v2958 = vmul.f32 %v2798, %v2906
      %v2959 = vmul.f32 %v2799, %v2908
      %v2960 = vmul.f32 %v2800, %v2910
      %v2961 = vmul.f32 %v2801, %v2912
      %v2962 = vmul.f32 %v2802, %v2914
      %v2963 = vmul.f32 %v2803, %v2916
      %v2964 = vmul.f32 %v2804, %v2918
      %v2965 = vmul.f32 %v2805, %v2920
      %v2966 = vmul.f32 %v2806, %v2922
      %v2967 = vmul.f32 %v2807, %v2924
      %v2968 = vmul.f32 %v2808, %v2926
      %v2969 = vmul.f32 %v2809, %v2928
      %v2970 = vmul.f32 %v2810, %v2930
      %v2971 = vmul.f32 %v2811, %v2932
      %v2972 = vmul.f32 %v2812, %v2934
      %v2973 = vmul.f32 %v2813, %v2936
      %v2974 = vmul.f32 %v2814, %v2938
      %v2975 = vmul.f32 %v2815, %v2940
      %v2976 = vmul.f32 %v2816, %v2942
      %v2977 = vmul.f32 %v2817, %v2944
      %v2978 = vmul.f32 %v2818, %v2946
      %v2979 = vsub.f32 1.0, %v2947
      %v2980 = vsub.f32 1.0, %v2948
      %v2981 = vsub.f32 1.0, %v2949
      %v2982 = vsub.f32 1.0, %v2950
      %v2983 = vsub.f32 1.0, %v2951
      %v2984 = vsub.f32 1.0, %v2952
      %v2985 = vsub.f32 1.0, %v2953
      %v2986 = vsub.f32 1.0, %v2954
      %v2987 = vsub.f32 1.0, %v2955
      %v2988 = vsub.f32 1.0, %v2956
      %v2989 = vsub.f32 1.0, %v2957
      %v2990 = vsub.f32 1.0, %v2958
      %v2991 = vsub.f32 1.0, %v2959
      %v2992 = vsub.f32 1.0, %v2960
      %v2993 = vsub.f32 1.0, %v2961
      %v2994 = vsub.f32 1.0, %v2962
      %v2995 = vsub.f32 1.0, %v2963
      %v2996 = vsub.f32 1.0, %v2964
      %v2997 = vsub.f32 1.0, %v2965
      %v2998 = vsub.f32 1.0, %v2966
      %v2999 = vsub.f32 1.0, %v2967
      %v3000 = vsub.f32 1.0, %v2968
      %v3001 = vsub.f32 1.0, %v2969
      %v3002 = vsub.f32 1.0, %v2970
      %v3003 = vsub.f32 1.0, %v2971
      %v3004 = vsub.f32 1.0, %v2972
      %v3005 = vsub.f32 1.0, %v2973
      %v3006 = vsub.f32 1.0, %v2974
      %v3007 = vsub.f32 1.0, %v2975
      %v3008 = vsub.f32 1.0, %v2976
      %v3009 = vsub.f32 1.0, %v2977
      %v3010 = vsub.f32 1.0, %v2978
      %vm3011 = vcmp.ge.f32.partialorder %v2339, 0.0
      %vm3012 = vcmp.ge.f32.partialorder %v2340, 0.0
      %vm3013 = vcmp.ge.f32.partialorder %v2341, 0.0
      %vm3014 = vcmp.ge.f32.partialorder %v2342, 0.0
      %vm3015 = vcmp.ge.f32.partialorder %v2343, 0.0
      %vm3016 = vcmp.ge.f32.partialorder %v2344, 0.0
      %vm3017 = vcmp.ge.f32.partialorder %v2345, 0.0
      %vm3018 = vcmp.ge.f32.partialorder %v2346, 0.0
      %vm3019 = vcmp.ge.f32.partialorder %v2347, 0.0
      %vm3020 = vcmp.ge.f32.partialorder %v2348, 0.0
      %vm3021 = vcmp.ge.f32.partialorder %v2349, 0.0
      %vm3022 = vcmp.ge.f32.partialorder %v2350, 0.0
      %vm3023 = vcmp.ge.f32.partialorder %v2351, 0.0
      %vm3024 = vcmp.ge.f32.partialorder %v2352, 0.0
      %vm3025 = vcmp.ge.f32.partialorder %v2353, 0.0
      %vm3026 = vcmp.ge.f32.partialorder %v2354, 0.0
      %vm3027 = vcmp.ge.f32.partialorder %v2355, 0.0
      %vm3028 = vcmp.ge.f32.partialorder %v2356, 0.0
      %vm3029 = vcmp.ge.f32.partialorder %v2357, 0.0
      %vm3030 = vcmp.ge.f32.partialorder %v2358, 0.0
      %vm3031 = vcmp.ge.f32.partialorder %v2359, 0.0
      %vm3032 = vcmp.ge.f32.partialorder %v2360, 0.0
      %vm3033 = vcmp.ge.f32.partialorder %v2361, 0.0
      %vm3034 = vcmp.ge.f32.partialorder %v2362, 0.0
      %vm3035 = vcmp.ge.f32.partialorder %v2363, 0.0
      %vm3036 = vcmp.ge.f32.partialorder %v2364, 0.0
      %vm3037 = vcmp.ge.f32.partialorder %v2365, 0.0
      %vm3038 = vcmp.ge.f32.partialorder %v2366, 0.0
      %vm3039 = vcmp.ge.f32.partialorder %v2367, 0.0
      %vm3040 = vcmp.ge.f32.partialorder %v2368, 0.0
      %vm3041 = vcmp.ge.f32.partialorder %v2369, 0.0
      %vm3042 = vcmp.ge.f32.partialorder %v2370, 0.0
      %v3043 = vsub.f32 0.0, %v2979
      %v3044 = vsub.f32 0.0, %v2980
      %v3045 = vsub.f32 0.0, %v2981
      %v3046 = vsub.f32 0.0, %v2982
      %v3047 = vsub.f32 0.0, %v2983
      %v3048 = vsub.f32 0.0, %v2984
      %v3049 = vsub.f32 0.0, %v2985
      %v3050 = vsub.f32 0.0, %v2986
      %v3051 = vsub.f32 0.0, %v2987
      %v3052 = vsub.f32 0.0, %v2988
      %v3053 = vsub.f32 0.0, %v2989
      %v3054 = vsub.f32 0.0, %v2990
      %v3055 = vsub.f32 0.0, %v2991
      %v3056 = vsub.f32 0.0, %v2992
      %v3057 = vsub.f32 0.0, %v2993
      %v3058 = vsub.f32 0.0, %v2994
      %v3059 = vsub.f32 0.0, %v2995
      %v3060 = vsub.f32 0.0, %v2996
      %v3061 = vsub.f32 0.0, %v2997
      %v3062 = vsub.f32 0.0, %v2998
      %v3063 = vsub.f32 0.0, %v2999
      %v3064 = vsub.f32 0.0, %v3000
      %v3065 = vsub.f32 0.0, %v3001
      %v3066 = vsub.f32 0.0, %v3002
      %v3067 = vsub.f32 0.0, %v3003
      %v3068 = vsub.f32 0.0, %v3004
      %v3069 = vsub.f32 0.0, %v3005
      %v3070 = vsub.f32 0.0, %v3006
      %v3071 = vsub.f32 0.0, %v3007
      %v3072 = vsub.f32 0.0, %v3008
      %v3073 = vsub.f32 0.0, %v3009
      %v3074 = vsub.f32 0.0, %v3010
      %v3075 = vsel %vm3011, %v2979, %v3043
      %v3076 = vsel %vm3012, %v2980, %v3044
      %v3077 = vsel %vm3013, %v2981, %v3045
      %v3078 = vsel %vm3014, %v2982, %v3046
      %v3079 = vsel %vm3015, %v2983, %v3047
      %v3080 = vsel %vm3016, %v2984, %v3048
      %v3081 = vsel %vm3017, %v2985, %v3049
      %v3082 = vsel %vm3018, %v2986, %v3050
      %v3083 = vsel %vm3019, %v2987, %v3051
      %v3084 = vsel %vm3020, %v2988, %v3052
      %v3085 = vsel %vm3021, %v2989, %v3053
      %v3086 = vsel %vm3022, %v2990, %v3054
      %v3087 = vsel %vm3023, %v2991, %v3055
      %v3088 = vsel %vm3024, %v2992, %v3056
      %v3089 = vsel %vm3025, %v2993, %v3057
      %v3090 = vsel %vm3026, %v2994, %v3058
      %v3091 = vsel %vm3027, %v2995, %v3059
      %v3092 = vsel %vm3028, %v2996, %v3060
      %v3093 = vsel %vm3029, %v2997, %v3061
      %v3094 = vsel %vm3030, %v2998, %v3062
      %v3095 = vsel %vm3031, %v2999, %v3063
      %v3096 = vsel %vm3032, %v3000, %v3064
      %v3097 = vsel %vm3033, %v3001, %v3065
      %v3098 = vsel %vm3034, %v3002, %v3066
      %v3099 = vsel %vm3035, %v3003, %v3067
      %v3100 = vsel %vm3036, %v3004, %v3068
      %v3101 = vsel %vm3037, %v3005, %v3069
      %v3102 = vsel %vm3038, %v3006, %v3070
      %v3103 = vsel %vm3039, %v3007, %v3071
      %v3104 = vsel %vm3040, %v3008, %v3072
      %v3105 = vsel %vm3041, %v3009, %v3073
      %v3106 = vsel %vm3042, %v3010, %v3074
      %v3107 = vadd.f32 %v3075, 1.0
      %v3108 = vadd.f32 %v3076, 1.0
      %v3109 = vadd.f32 %v3077, 1.0
      %v3110 = vadd.f32 %v3078, 1.0
      %v3111 = vadd.f32 %v3079, 1.0
      %v3112 = vadd.f32 %v3080, 1.0
      %v3113 = vadd.f32 %v3081, 1.0
      %v3114 = vadd.f32 %v3082, 1.0
      %v3115 = vadd.f32 %v3083, 1.0
      %v3116 = vadd.f32 %v3084, 1.0
      %v3117 = vadd.f32 %v3085, 1.0
      %v3118 = vadd.f32 %v3086, 1.0
      %v3119 = vadd.f32 %v3087, 1.0
      %v3120 = vadd.f32 %v3088, 1.0
      %v3121 = vadd.f32 %v3089, 1.0
      %v3122 = vadd.f32 %v3090, 1.0
      %v3123 = vadd.f32 %v3091, 1.0
      %v3124 = vadd.f32 %v3092, 1.0
      %v3125 = vadd.f32 %v3093, 1.0
      %v3126 = vadd.f32 %v3094, 1.0
      %v3127 = vadd.f32 %v3095, 1.0
      %v3128 = vadd.f32 %v3096, 1.0
      %v3129 = vadd.f32 %v3097, 1.0
      %v3130 = vadd.f32 %v3098, 1.0
      %v3131 = vadd.f32 %v3099, 1.0
      %v3132 = vadd.f32 %v3100, 1.0
      %v3133 = vadd.f32 %v3101, 1.0
      %v3134 = vadd.f32 %v3102, 1.0
      %v3135 = vadd.f32 %v3103, 1.0
      %v3136 = vadd.f32 %v3104, 1.0
      %v3137 = vadd.f32 %v3105, 1.0
      %v3138 = vadd.f32 %v3106, 1.0
      %v3139 = vmul.f32 %v2307, %v3107
      %v3140 = vmul.f32 %v2308, %v3108
      %v3141 = vmul.f32 %v2309, %v3109
      %v3142 = vmul.f32 %v2310, %v3110
      %v3143 = vmul.f32 %v2311, %v3111
      %v3144 = vmul.f32 %v2312, %v3112
      %v3145 = vmul.f32 %v2313, %v3113
      %v3146 = vmul.f32 %v2314, %v3114
      %v3147 = vmul.f32 %v2315, %v3115
      %v3148 = vmul.f32 %v2316, %v3116
      %v3149 = vmul.f32 %v2317, %v3117
      %v3150 = vmul.f32 %v2318, %v3118
      %v3151 = vmul.f32 %v2319, %v3119
      %v3152 = vmul.f32 %v2320, %v3120
      %v3153 = vmul.f32 %v2321, %v3121
      %v3154 = vmul.f32 %v2322, %v3122
      %v3155 = vmul.f32 %v2323, %v3123
      %v3156 = vmul.f32 %v2324, %v3124
      %v3157 = vmul.f32 %v2325, %v3125
      %v3158 = vmul.f32 %v2326, %v3126
      %v3159 = vmul.f32 %v2327, %v3127
      %v3160 = vmul.f32 %v2328, %v3128
      %v3161 = vmul.f32 %v2329, %v3129
      %v3162 = vmul.f32 %v2330, %v3130
      %v3163 = vmul.f32 %v2331, %v3131
      %v3164 = vmul.f32 %v2332, %v3132
      %v3165 = vmul.f32 %v2333, %v3133
      %v3166 = vmul.f32 %v2334, %v3134
      %v3167 = vmul.f32 %v2335, %v3135
      %v3168 = vmul.f32 %v2336, %v3136
      %v3169 = vmul.f32 %v2337, %v3137
      %v3170 = vmul.f32 %v2338, %v3138
      %v3171 = vpack.c.bf16 %v3140, %v3139
      %v3172 = vpack.c.bf16 %v3142, %v3141
      %v3173 = vpack.c.bf16 %v3144, %v3143
      %v3174 = vpack.c.bf16 %v3146, %v3145
      %v3175 = vpack.c.bf16 %v3148, %v3147
      %v3176 = vpack.c.bf16 %v3150, %v3149
      %v3177 = vpack.c.bf16 %v3152, %v3151
      %v3178 = vpack.c.bf16 %v3154, %v3153
      %v3179 = vpack.c.bf16 %v3156, %v3155
      %v3180 = vpack.c.bf16 %v3158, %v3157
      %v3181 = vpack.c.bf16 %v3160, %v3159
      %v3182 = vpack.c.bf16 %v3162, %v3161
      %v3183 = vpack.c.bf16 %v3164, %v3163
      %v3184 = vpack.c.bf16 %v3166, %v3165
      %v3185 = vpack.c.bf16 %v3168, %v3167
      %v3186 = vpack.c.bf16 %v3170, %v3169
      %v3203 = vunpack.c.l.b16 %v3171
      %v3204 = vunpack.c.h.b16 %v3171
      %v3205 = vunpack.c.l.b16 %v3172
      %v3206 = vunpack.c.h.b16 %v3172
      %v3207 = vunpack.c.l.b16 %v3173
      %v3208 = vunpack.c.h.b16 %v3173
      %v3209 = vunpack.c.l.b16 %v3174
      %v3210 = vunpack.c.h.b16 %v3174
      %v3211 = vunpack.c.l.b16 %v3175
      %v3212 = vunpack.c.h.b16 %v3175
      %v3213 = vunpack.c.l.b16 %v3176
      %v3214 = vunpack.c.h.b16 %v3176
      %v3215 = vunpack.c.l.b16 %v3177
      %v3216 = vunpack.c.h.b16 %v3177
      %v3217 = vunpack.c.l.b16 %v3178
      %v3218 = vunpack.c.h.b16 %v3178
      %v3219 = vunpack.c.l.b16 %v3179
      %v3220 = vunpack.c.h.b16 %v3179
      %v3221 = vunpack.c.l.b16 %v3180
      %v3222 = vunpack.c.h.b16 %v3180
      %v3223 = vunpack.c.l.b16 %v3181
      %v3224 = vunpack.c.h.b16 %v3181
      %v3225 = vunpack.c.l.b16 %v3182
      %v3226 = vunpack.c.h.b16 %v3182
      %v3227 = vunpack.c.l.b16 %v3183
      %v3228 = vunpack.c.h.b16 %v3183
      %v3229 = vunpack.c.l.b16 %v3184
      %v3230 = vunpack.c.h.b16 %v3184
      %v3231 = vunpack.c.l.b16 %v3185
      %v3232 = vunpack.c.h.b16 %v3185
      %v3233 = vunpack.c.l.b16 %v3186
      %v3234 = vunpack.c.h.b16 %v3186
      %v3235 = vpack.c.b16 %v3203, %v3203
      %v3236 = vpack.c.b16 %v3204, %v3204
      %v3237 = vpack.c.b16 %v3205, %v3205
      %v3238 = vpack.c.b16 %v3206, %v3206
      %v3239 = vpack.c.b16 %v3207, %v3207
      %v3240 = vpack.c.b16 %v3208, %v3208
      %v3241 = vpack.c.b16 %v3209, %v3209
      %v3242 = vpack.c.b16 %v3210, %v3210
      %v3243 = vpack.c.b16 %v3211, %v3211
      %v3244 = vpack.c.b16 %v3212, %v3212
      %v3245 = vpack.c.b16 %v3213, %v3213
      %v3246 = vpack.c.b16 %v3214, %v3214
      %v3247 = vpack.c.b16 %v3215, %v3215
      %v3248 = vpack.c.b16 %v3216, %v3216
      %v3249 = vpack.c.b16 %v3217, %v3217
      %v3250 = vpack.c.b16 %v3218, %v3218
      %v3251 = vpack.c.b16 %v3219, %v3219
      %v3252 = vpack.c.b16 %v3220, %v3220
      %v3253 = vpack.c.b16 %v3221, %v3221
      %v3254 = vpack.c.b16 %v3222, %v3222
      %v3255 = vpack.c.b16 %v3223, %v3223
      %v3256 = vpack.c.b16 %v3224, %v3224
      %v3257 = vpack.c.b16 %v3225, %v3225
      %v3258 = vpack.c.b16 %v3226, %v3226
      %v3259 = vpack.c.b16 %v3227, %v3227
      %v3260 = vpack.c.b16 %v3228, %v3228
      %v3261 = vpack.c.b16 %v3229, %v3229
      %v3262 = vpack.c.b16 %v3230, %v3230
      %v3263 = vpack.c.b16 %v3231, %v3231
      %v3264 = vpack.c.b16 %v3232, %v3232
      %v3265 = vpack.c.b16 %v3233, %v3233
      %v3266 = vpack.c.b16 %v3234, %v3234
      %3299 = vst [vmem:[%s232] sm:$0xf] %v3235
      %3300 = vst [vmem:[%s232 + $0x4] sm:$0xf] %v3236
      %3301 = vst [vmem:[%s232 + $0x8] sm:$0xf] %v3237
      %3302 = vst [vmem:[%s232 + $0xc] sm:$0xf] %v3238
      %3303 = vst [vmem:[%s232 + $0x10] sm:$0xf] %v3239
      %3304 = vst [vmem:[%s232 + $0x14] sm:$0xf] %v3240
      %3305 = vst [vmem:[%s232 + $0x18] sm:$0xf] %v3241
      %3306 = vst [vmem:[%s232 + $0x1c] sm:$0xf] %v3242
      %3307 = vst [vmem:[%s232 + $0x20] sm:$0xf] %v3243
      %3308 = vst [vmem:[%s232 + $0x24] sm:$0xf] %v3244
      %3309 = vst [vmem:[%s232 + $0x28] sm:$0xf] %v3245
      %3310 = vst [vmem:[%s232 + $0x2c] sm:$0xf] %v3246
      %3311 = vst [vmem:[%s232 + $0x30] sm:$0xf] %v3247
      %3312 = vst [vmem:[%s232 + $0x34] sm:$0xf] %v3248
      %3313 = vst [vmem:[%s232 + $0x38] sm:$0xf] %v3249
      %3314 = vst [vmem:[%s232 + $0x3c] sm:$0xf] %v3250
      %3315 = vst [vmem:[%s232 + $0x40] sm:$0xf] %v3251
      %3316 = vst [vmem:[%s232 + $0x44] sm:$0xf] %v3252
      %3317 = vst [vmem:[%s232 + $0x48] sm:$0xf] %v3253
      %3318 = vst [vmem:[%s232 + $0x4c] sm:$0xf] %v3254
      %3319 = vst [vmem:[%s232 + $0x50] sm:$0xf] %v3255
      %3320 = vst [vmem:[%s232 + $0x54] sm:$0xf] %v3256
      %3321 = vst [vmem:[%s232 + $0x58] sm:$0xf] %v3257
      %3322 = vst [vmem:[%s232 + $0x5c] sm:$0xf] %v3258
      %3323 = vst [vmem:[%s232 + $0x60] sm:$0xf] %v3259
      %3324 = vst [vmem:[%s232 + $0x64] sm:$0xf] %v3260
      %3325 = vst [vmem:[%s232 + $0x68] sm:$0xf] %v3261
      %3326 = vst [vmem:[%s232 + $0x6c] sm:$0xf] %v3262
      %3327 = vst [vmem:[%s232 + $0x70] sm:$0xf] %v3263
      %3328 = vst [vmem:[%s232 + $0x74] sm:$0xf] %v3264
      %3329 = vst [vmem:[%s232 + $0x78] sm:$0xf] %v3265
      %3330 = vst [vmem:[%s232 + $0x7c] sm:$0xf] %v3266
      %p3331 = scmp.lt.s32.totalorder %s18, 1
      %s3332 = scalar_select %p3331, %s18, 1
      %p3333 = scmp.lt.s32.totalorder %s19, 0
      %s3334 = scalar_select %p3333, %s19, 0
      %s3335 = smul.addr %s3332, 32
      %s3336 = sadd.s32 %s3334, %s3335
      %s3337 = smul.addr %s3336, 4
      %s3338 = scalar_lea.vmem %s3, %s3337
      // Predicated region
      $region33: #{mlp_forward.4} parent=31 // pred_check
        %p3339 = pneg %p126
      $region34: #{mlp_forward.4} parent=31 // pred_check_branch
        %3341 = sbr.rel (%p3339) target = $region36
      $region35: #{mlp_forward.4} parent=31 // pred_region
        _
      $region36: #{mlp_forward.4} parent=31 // pred_fallthru
        _
    $region32: #{mlp_forward.4} parent=5 // pred_fallthru
      _
    %p3342 = scmp.le.s32.totalorder 2, %s9
    // Predicated region
    $region37: #{mlp_forward.4} parent=5 // pred_check
      %p3343 = pneg %p3342
    $region38: #{mlp_forward.4} parent=5 // pred_check_branch
      %3345 = sbr.rel (%p3343) target = $region40
    $region39: #{mlp_forward.4} parent=5 // pred_region
      %s3346 = ssub.s32 %s9, 2
      // Predicated region
      $region41: #{mlp_forward.4} parent=39 // pred_check
        %p3347 = pneg %p132
      $region42: #{mlp_forward.4} parent=39 // pred_check_branch
        %3349 = sbr.rel (%p3347) target = $region44
      $region43: #{mlp_forward.4} parent=39 // pred_region
        %p3350 = scmp.lt.s32.totalorder %s20, 1
        %s3351 = scalar_select %p3350, %s20, 1
        %p3352 = scmp.lt.s32.totalorder %s21, 0
        %s3353 = scalar_select %p3352, %s21, 0
        %s3354 = smul.addr %s3351, 32
        %s3355 = sadd.s32 %s3353, %s3354
        %s3356 = smul.addr %s3355, 4
        %s3357 = scalar_lea.vmem %s3, %s3356
      $region44: #{mlp_forward.4} parent=39 // pred_fallthru
        _
    $region40: #{mlp_forward.4} parent=5 // pred_fallthru
      _
  $region6: #{mlp_forward.4} parent=0 // loop_footer
    %s13 = sadd.s32 1, %s9
  $region7: #{mlp_forward.4} parent=0 // loop_footer_branch
    %8 = sbr.rel target = $region3
  $region8: #{mlp_forward.4} parent=0 // loop_exit
    _

</llo_original>
